<compile_context>
chip_gen: v5e
topology: v5e:2x2
jax: 0.10.0
libtpu: 0.0.40
codegen_flags: <defaults>
</compile_context>

<pallas_src>
import functools

import jax
import jax.numpy as jnp
import numpy as np
from jax.experimental import pallas as pl
from jax.experimental.pallas import tpu as pltpu


def _span_conv_kernel(w_ref, x_ref, o_ref, *, k, Hb, W, Cina, Cout):
    # w_ref: SMEM (k*k*Cina*Cout,) fused per-tap weights, flat [(t*Cina+c)*Cout+co]
    # x_ref: VMEM (Cina, Hp, Wp)   one pre-padded image (+ ones channel), resident
    # o_ref: VMEM (Cout, Hb, W)    one output row-band
    b = pl.program_id(1)
    row0 = b * Hb

    # Per-band accumulators: Cout slabs of (Hb, W) -- fits comfortably in vregs.
    accs = [jnp.zeros((Hb, W), jnp.float32) for _ in range(Cout)]

    for c in range(Cina):
        for t in range(k * k):
            dh, dw = divmod(t, k)
            # Shifted sub-slab loaded directly from VMEM (no full-block copy,
            # no relayout): rows [row0+dh, row0+dh+Hb), cols [dw, dw+W).
            slab = x_ref[c, pl.ds(row0 + dh, Hb), pl.ds(dw, W)]
            base = (t * Cina + c) * Cout
            for co in range(Cout):
                accs[co] = accs[co] + w_ref[base + co] * slab

    for co in range(Cout):
        o_ref[co] = accs[co].astype(o_ref.dtype)


def span_conv(x_nchw, params, k):
    """x_nchw: (N, Cin, H, W) float32.  Returns (N, Cout, H, W) float32."""
    N, Cin, H, W = x_nchw.shape
    Cout = params["pw1_w"].shape[1]
    assert k % 2 == 1, "SpanConv fusion assumes odd kernel_size ('same' padding)."
    p = (k - 1) // 2
    Cina = Cin + 1
    Hp, Wp = H + 2 * p, W + 2 * p

    # ---- fold both branches (pointwise + depthwise + all biases) into one
    # ---- flat per-tap scalar weight table (lives in SMEM inside the kernel).
    wt = (params["pw1_w"][None] * params["dw1_w"][:, None, :]
          + params["pw2_w"][None] * params["dw2_w"][:, None, :])        # (k*k, Cin, Cout)
    bt = (params["pw1_b"] * params["dw1_w"]
          + params["pw2_b"] * params["dw2_w"])                           # (k*k, Cout)
    center = p * k + p                        # centre tap is always in-bounds
    bt = bt.at[center].add(params["dw1_b"][0] + params["dw2_b"][0])
    w_taps = jnp.concatenate([wt, bt[:, None, :]], axis=1)               # (k*k, Cin+1, Cout)
    w_flat = w_taps.reshape(-1).astype(jnp.float32)                      # (k*k*Cina*Cout,)

    # ---- ones channel carries the pointwise biases; zero spatial pre-pad.
    ones = jnp.ones((N, 1, H, W), jnp.float32)
    x_aug = jnp.concatenate([x_nchw.astype(jnp.float32), ones], axis=1)  # (N, Cina, H, W)
    x_pad = jnp.pad(x_aug, ((0, 0), (0, 0), (p, p), (p, p)))             # (N, Cina, Hp, Wp)

    # ---- choose the output row-band height Hb ------------------------------
    # VMEM footprint WITH Mosaic tile padding (lane dim -> mult. of 128,
    # sublane dim -> mult. of 8).  One padded image stays resident across the
    # band axis; the output band is double-buffered.
    ru = lambda v, m: -(-v // m) * m
    img_bytes = Cina * ru(Hp, 8) * ru(Wp, 128) * 4
    band_bytes = lambda hb: Cout * ru(hb, 8) * ru(W, 128) * 4
    BUDGET = 24 * 1024 * 1024                 # headroom within the 48 MiB limit below
    fits = lambda hb: 2 * img_bytes + 2 * band_bytes(hb) <= BUDGET

    # Hb must be a multiple of 8 (or the full H) to satisfy the (8,128) rule
    # on the output block.  Prefer the largest Hb that fits AND yields >= 4
    # grid steps (keeps the pipeline busy and both v7x TensorCores fed), then
    # >= 2, then anything that fits.
    cands = [h for h in range(H, 0, -1) if H % h == 0 and (h % 8 == 0 or h == H)]
    hb = cands[-1]
    for min_steps in (4, 2, 1):
        sel = [h for h in cands if fits(h) and N * (H // h) >= min_steps]
        if sel:
            hb = sel[0]
            break
    n_bands = H // hb

    kernel = functools.partial(_span_conv_kernel, k=k, Hb=hb, W=W,
                               Cina=Cina, Cout=Cout)
    out = pl.pallas_call(
        kernel,
        out_shape=jax.ShapeDtypeStruct((N, Cout, H, W), jnp.float32),
        grid=(N, n_bands),
        in_specs=[
            # fused tap weights: whole (tiny) array in scalar memory
            pl.BlockSpec(memory_space=pltpu.MemorySpace.SMEM),
            # one padded image per n; same block for every band b -> resident,
            # DMA'd from HBM once per image.
            pl.BlockSpec((None, Cina, Hp, Wp), lambda n, b: (n, 0, 0, 0)),
        ],
        # non-overlapping output row-bands, written back once per grid step
        out_specs=pl.BlockSpec((None, Cout, hb, W), lambda n, b: (n, 0, b, 0)),
        compiler_params=pltpu.CompilerParams(
            dimension_semantics=("parallel", "arbitrary"),
            vmem_limit_bytes=48 * 1024 * 1024,
        ),
    )(w_flat, x_pad)
    return out


def ref_span_conv(x_nchw, params, k):
    """Pure-JAX reference matching the PyTorch semantics (NCHW)."""
    p = (k - 1) // 2

    def pw(x, w, b):  # w: (Cin, Cout) -> torch weight (Cout, Cin, 1, 1)
        wt = w.T[:, :, None, None]
        y = jax.lax.conv_general_dilated(
            x, wt, (1, 1), "VALID",
            dimension_numbers=("NCHW", "OIHW", "NCHW"))
        return y + b.reshape(1, -1, 1, 1)

    def dw(x, w, b):  # w: (k*k, Cout) -> torch depthwise weight (Cout, 1, k, k)
        cout = w.shape[1]
        wt = w.T.reshape(cout, 1, k, k)
        y = jax.lax.conv_general_dilated(
            x, wt, (1, 1), [(p, p), (p, p)],
            dimension_numbers=("NCHW", "OIHW", "NCHW"),
            feature_group_count=cout)
        return y + b.reshape(1, -1, 1, 1)

    o1 = dw(pw(x_nchw, params["pw1_w"], params["pw1_b"]),
            params["dw1_w"], params["dw1_b"])
    o2 = dw(pw(x_nchw, params["pw2_w"], params["pw2_b"]),
            params["dw2_w"], params["dw2_b"])
    return o1 + o2


if __name__ == "__main__":
    N, Cin, H, W = 2, 4, 16, 16
    Cout, k = 8, 3

    key = jax.random.PRNGKey(0)
    keys = jax.random.split(key, 9)
    x_nchw = jax.random.normal(keys[0], (N, Cin, H, W), jnp.float32)
    params = {
        "pw1_w": 0.1 * jax.random.normal(keys[1], (Cin, Cout), jnp.float32),
        "pw1_b": 0.1 * jax.random.normal(keys[2], (1, Cout), jnp.float32),
        "dw1_w": 0.1 * jax.random.normal(keys[3], (k * k, Cout), jnp.float32),
        "dw1_b": 0.1 * jax.random.normal(keys[4], (1, Cout), jnp.float32),
        "pw2_w": 0.1 * jax.random.normal(keys[5], (Cin, Cout), jnp.float32),
        "pw2_b": 0.1 * jax.random.normal(keys[6], (1, Cout), jnp.float32),
        "dw2_w": 0.1 * jax.random.normal(keys[7], (k * k, Cout), jnp.float32),
        "dw2_b": 0.1 * jax.random.normal(keys[8], (1, Cout), jnp.float32),
    }

    fwd = jax.jit(lambda x, prm: span_conv(x, prm, k))
    out = fwd(x_nchw, params)
    jax.block_until_ready(out)

    ref = ref_span_conv(x_nchw, params, k)
    np.testing.assert_allclose(np.asarray(out), np.asarray(ref),
                               rtol=1e-4, atol=1e-4)
    print("KERNEL_OK")
</pallas_src>

<mosaic_0001>
module attributes {stable_mosaic.version = 11 : i64} {
  func.func @_span_conv_kernel(%arg0: i32, %arg1: i32, %arg2: memref<360xf32, #tpu.memory_space<smem>>, %arg3: memref<1x5x18x18xf32, #tpu.memory_space<vmem>>, %arg4: memref<1x8x8x16xf32, #tpu.memory_space<vmem>>) attributes {dimension_semantics = [#tpu.dimension_semantics<parallel>, #tpu.dimension_semantics<arbitrary>], iteration_bounds = array<i64: 2, 2>, scalar_prefetch = 0 : i64, scratch_operands = 0 : i64, tpu.core_type = #tpu.core_type<tc>, window_params = [{transform_indices = @transform_0, window_bounds = array<i64: 360>}, {transform_indices = @transform_1, window_bounds = array<i64: 1, 5, 18, 18>}, {transform_indices = @transform_2, window_bounds = array<i64: 1, 8, 8, 16>}]} {
    %c8_i32 = arith.constant 8 : i32
    %0 = arith.muli %arg1, %c8_i32 : i32
    %cst = arith.constant 0.000000e+00 : f32
    %1 = vector.broadcast %cst : f32 to vector<8x16xf32>
    %cst_0 = arith.constant 0.000000e+00 : f32
    %2 = vector.broadcast %cst_0 : f32 to vector<8x16xf32>
    %cst_1 = arith.constant 0.000000e+00 : f32
    %3 = vector.broadcast %cst_1 : f32 to vector<8x16xf32>
    %cst_2 = arith.constant 0.000000e+00 : f32
    %4 = vector.broadcast %cst_2 : f32 to vector<8x16xf32>
    %cst_3 = arith.constant 0.000000e+00 : f32
    %5 = vector.broadcast %cst_3 : f32 to vector<8x16xf32>
    %cst_4 = arith.constant 0.000000e+00 : f32
    %6 = vector.broadcast %cst_4 : f32 to vector<8x16xf32>
    %cst_5 = arith.constant 0.000000e+00 : f32
    %7 = vector.broadcast %cst_5 : f32 to vector<8x16xf32>
    %cst_6 = arith.constant 0.000000e+00 : f32
    %8 = vector.broadcast %cst_6 : f32 to vector<8x16xf32>
    %c0_i32 = arith.constant 0 : i32
    %9 = arith.addi %0, %c0_i32 : i32
    %c0 = arith.constant 0 : index
    %c0_7 = arith.constant 0 : index
    %10 = arith.index_cast %9 : i32 to index
    %c0_8 = arith.constant 0 : index
    %11 = vector.load %arg3[%c0, %c0_7, %10, %c0_8] : memref<1x5x18x18xf32, #tpu.memory_space<vmem>>, vector<1x1x8x16xf32>
    %12 = vector.shape_cast %11 : vector<1x1x8x16xf32> to vector<8x16xf32>
    %c0_9 = arith.constant 0 : index
    %13 = memref.load %arg2[%c0_9] : memref<360xf32, #tpu.memory_space<smem>>
    %14 = vector.broadcast %13 : f32 to vector<8x16xf32>
    %15 = arith.mulf %14, %12 : vector<8x16xf32>
    %16 = arith.addf %1, %15 : vector<8x16xf32>
    %c1 = arith.constant 1 : index
    %17 = memref.load %arg2[%c1] : memref<360xf32, #tpu.memory_space<smem>>
    %18 = vector.broadcast %17 : f32 to vector<8x16xf32>
    %19 = arith.mulf %18, %12 : vector<8x16xf32>
    %20 = arith.addf %2, %19 : vector<8x16xf32>
    %c2 = arith.constant 2 : index
    %21 = memref.load %arg2[%c2] : memref<360xf32, #tpu.memory_space<smem>>
    %22 = vector.broadcast %21 : f32 to vector<8x16xf32>
    %23 = arith.mulf %22, %12 : vector<8x16xf32>
    %24 = arith.addf %3, %23 : vector<8x16xf32>
    %c3 = arith.constant 3 : index
    %25 = memref.load %arg2[%c3] : memref<360xf32, #tpu.memory_space<smem>>
    %26 = vector.broadcast %25 : f32 to vector<8x16xf32>
    %27 = arith.mulf %26, %12 : vector<8x16xf32>
    %28 = arith.addf %4, %27 : vector<8x16xf32>
    %c4 = arith.constant 4 : index
    %29 = memref.load %arg2[%c4] : memref<360xf32, #tpu.memory_space<smem>>
    %30 = vector.broadcast %29 : f32 to vector<8x16xf32>
    %31 = arith.mulf %30, %12 : vector<8x16xf32>
    %32 = arith.addf %5, %31 : vector<8x16xf32>
    %c5 = arith.constant 5 : index
    %33 = memref.load %arg2[%c5] : memref<360xf32, #tpu.memory_space<smem>>
    %34 = vector.broadcast %33 : f32 to vector<8x16xf32>
    %35 = arith.mulf %34, %12 : vector<8x16xf32>
    %36 = arith.addf %6, %35 : vector<8x16xf32>
    %c6 = arith.constant 6 : index
    %37 = memref.load %arg2[%c6] : memref<360xf32, #tpu.memory_space<smem>>
    %38 = vector.broadcast %37 : f32 to vector<8x16xf32>
    %39 = arith.mulf %38, %12 : vector<8x16xf32>
    %40 = arith.addf %7, %39 : vector<8x16xf32>
    %c7 = arith.constant 7 : index
    %41 = memref.load %arg2[%c7] : memref<360xf32, #tpu.memory_space<smem>>
    %42 = vector.broadcast %41 : f32 to vector<8x16xf32>
    %43 = arith.mulf %42, %12 : vector<8x16xf32>
    %44 = arith.addf %8, %43 : vector<8x16xf32>
    %c0_i32_10 = arith.constant 0 : i32
    %45 = arith.addi %0, %c0_i32_10 : i32
    %c0_11 = arith.constant 0 : index
    %c0_12 = arith.constant 0 : index
    %46 = arith.index_cast %45 : i32 to index
    %c1_13 = arith.constant 1 : index
    %47 = vector.load %arg3[%c0_11, %c0_12, %46, %c1_13] : memref<1x5x18x18xf32, #tpu.memory_space<vmem>>, vector<1x1x8x16xf32>
    %48 = vector.shape_cast %47 : vector<1x1x8x16xf32> to vector<8x16xf32>
    %c40 = arith.constant 40 : index
    %49 = memref.load %arg2[%c40] : memref<360xf32, #tpu.memory_space<smem>>
    %50 = vector.broadcast %49 : f32 to vector<8x16xf32>
    %51 = arith.mulf %50, %48 : vector<8x16xf32>
    %52 = arith.addf %16, %51 : vector<8x16xf32>
    %c41 = arith.constant 41 : index
    %53 = memref.load %arg2[%c41] : memref<360xf32, #tpu.memory_space<smem>>
    %54 = vector.broadcast %53 : f32 to vector<8x16xf32>
    %55 = arith.mulf %54, %48 : vector<8x16xf32>
    %56 = arith.addf %20, %55 : vector<8x16xf32>
    %c42 = arith.constant 42 : index
    %57 = memref.load %arg2[%c42] : memref<360xf32, #tpu.memory_space<smem>>
    %58 = vector.broadcast %57 : f32 to vector<8x16xf32>
    %59 = arith.mulf %58, %48 : vector<8x16xf32>
    %60 = arith.addf %24, %59 : vector<8x16xf32>
    %c43 = arith.constant 43 : index
    %61 = memref.load %arg2[%c43] : memref<360xf32, #tpu.memory_space<smem>>
    %62 = vector.broadcast %61 : f32 to vector<8x16xf32>
    %63 = arith.mulf %62, %48 : vector<8x16xf32>
    %64 = arith.addf %28, %63 : vector<8x16xf32>
    %c44 = arith.constant 44 : index
    %65 = memref.load %arg2[%c44] : memref<360xf32, #tpu.memory_space<smem>>
    %66 = vector.broadcast %65 : f32 to vector<8x16xf32>
    %67 = arith.mulf %66, %48 : vector<8x16xf32>
    %68 = arith.addf %32, %67 : vector<8x16xf32>
    %c45 = arith.constant 45 : index
    %69 = memref.load %arg2[%c45] : memref<360xf32, #tpu.memory_space<smem>>
    %70 = vector.broadcast %69 : f32 to vector<8x16xf32>
    %71 = arith.mulf %70, %48 : vector<8x16xf32>
    %72 = arith.addf %36, %71 : vector<8x16xf32>
    %c46 = arith.constant 46 : index
    %73 = memref.load %arg2[%c46] : memref<360xf32, #tpu.memory_space<smem>>
    %74 = vector.broadcast %73 : f32 to vector<8x16xf32>
    %75 = arith.mulf %74, %48 : vector<8x16xf32>
    %76 = arith.addf %40, %75 : vector<8x16xf32>
    %c47 = arith.constant 47 : index
    %77 = memref.load %arg2[%c47] : memref<360xf32, #tpu.memory_space<smem>>
    %78 = vector.broadcast %77 : f32 to vector<8x16xf32>
    %79 = arith.mulf %78, %48 : vector<8x16xf32>
    %80 = arith.addf %44, %79 : vector<8x16xf32>
    %c0_i32_14 = arith.constant 0 : i32
    %81 = arith.addi %0, %c0_i32_14 : i32
    %c0_15 = arith.constant 0 : index
    %c0_16 = arith.constant 0 : index
    %82 = arith.index_cast %81 : i32 to index
    %c2_17 = arith.constant 2 : index
    %83 = vector.load %arg3[%c0_15, %c0_16, %82, %c2_17] : memref<1x5x18x18xf32, #tpu.memory_space<vmem>>, vector<1x1x8x16xf32>
    %84 = vector.shape_cast %83 : vector<1x1x8x16xf32> to vector<8x16xf32>
    %c80 = arith.constant 80 : index
    %85 = memref.load %arg2[%c80] : memref<360xf32, #tpu.memory_space<smem>>
    %86 = vector.broadcast %85 : f32 to vector<8x16xf32>
    %87 = arith.mulf %86, %84 : vector<8x16xf32>
    %88 = arith.addf %52, %87 : vector<8x16xf32>
    %c81 = arith.constant 81 : index
    %89 = memref.load %arg2[%c81] : memref<360xf32, #tpu.memory_space<smem>>
    %90 = vector.broadcast %89 : f32 to vector<8x16xf32>
    %91 = arith.mulf %90, %84 : vector<8x16xf32>
    %92 = arith.addf %56, %91 : vector<8x16xf32>
    %c82 = arith.constant 82 : index
    %93 = memref.load %arg2[%c82] : memref<360xf32, #tpu.memory_space<smem>>
    %94 = vector.broadcast %93 : f32 to vector<8x16xf32>
    %95 = arith.mulf %94, %84 : vector<8x16xf32>
    %96 = arith.addf %60, %95 : vector<8x16xf32>
    %c83 = arith.constant 83 : index
    %97 = memref.load %arg2[%c83] : memref<360xf32, #tpu.memory_space<smem>>
    %98 = vector.broadcast %97 : f32 to vector<8x16xf32>
    %99 = arith.mulf %98, %84 : vector<8x16xf32>
    %100 = arith.addf %64, %99 : vector<8x16xf32>
    %c84 = arith.constant 84 : index
    %101 = memref.load %arg2[%c84] : memref<360xf32, #tpu.memory_space<smem>>
    %102 = vector.broadcast %101 : f32 to vector<8x16xf32>
    %103 = arith.mulf %102, %84 : vector<8x16xf32>
    %104 = arith.addf %68, %103 : vector<8x16xf32>
    %c85 = arith.constant 85 : index
    %105 = memref.load %arg2[%c85] : memref<360xf32, #tpu.memory_space<smem>>
    %106 = vector.broadcast %105 : f32 to vector<8x16xf32>
    %107 = arith.mulf %106, %84 : vector<8x16xf32>
    %108 = arith.addf %72, %107 : vector<8x16xf32>
    %c86 = arith.constant 86 : index
    %109 = memref.load %arg2[%c86] : memref<360xf32, #tpu.memory_space<smem>>
    %110 = vector.broadcast %109 : f32 to vector<8x16xf32>
    %111 = arith.mulf %110, %84 : vector<8x16xf32>
    %112 = arith.addf %76, %111 : vector<8x16xf32>
    %c87 = arith.constant 87 : index
    %113 = memref.load %arg2[%c87] : memref<360xf32, #tpu.memory_space<smem>>
    %114 = vector.broadcast %113 : f32 to vector<8x16xf32>
    %115 = arith.mulf %114, %84 : vector<8x16xf32>
    %116 = arith.addf %80, %115 : vector<8x16xf32>
    %c1_i32 = arith.constant 1 : i32
    %117 = arith.addi %0, %c1_i32 : i32
    %c0_18 = arith.constant 0 : index
    %c0_19 = arith.constant 0 : index
    %118 = arith.index_cast %117 : i32 to index
    %c0_20 = arith.constant 0 : index
    %119 = vector.load %arg3[%c0_18, %c0_19, %118, %c0_20] : memref<1x5x18x18xf32, #tpu.memory_space<vmem>>, vector<1x1x8x16xf32>
    %120 = vector.shape_cast %119 : vector<1x1x8x16xf32> to vector<8x16xf32>
    %c120 = arith.constant 120 : index
    %121 = memref.load %arg2[%c120] : memref<360xf32, #tpu.memory_space<smem>>
    %122 = vector.broadcast %121 : f32 to vector<8x16xf32>
    %123 = arith.mulf %122, %120 : vector<8x16xf32>
    %124 = arith.addf %88, %123 : vector<8x16xf32>
    %c121 = arith.constant 121 : index
    %125 = memref.load %arg2[%c121] : memref<360xf32, #tpu.memory_space<smem>>
    %126 = vector.broadcast %125 : f32 to vector<8x16xf32>
    %127 = arith.mulf %126, %120 : vector<8x16xf32>
    %128 = arith.addf %92, %127 : vector<8x16xf32>
    %c122 = arith.constant 122 : index
    %129 = memref.load %arg2[%c122] : memref<360xf32, #tpu.memory_space<smem>>
    %130 = vector.broadcast %129 : f32 to vector<8x16xf32>
    %131 = arith.mulf %130, %120 : vector<8x16xf32>
    %132 = arith.addf %96, %131 : vector<8x16xf32>
    %c123 = arith.constant 123 : index
    %133 = memref.load %arg2[%c123] : memref<360xf32, #tpu.memory_space<smem>>
    %134 = vector.broadcast %133 : f32 to vector<8x16xf32>
    %135 = arith.mulf %134, %120 : vector<8x16xf32>
    %136 = arith.addf %100, %135 : vector<8x16xf32>
    %c124 = arith.constant 124 : index
    %137 = memref.load %arg2[%c124] : memref<360xf32, #tpu.memory_space<smem>>
    %138 = vector.broadcast %137 : f32 to vector<8x16xf32>
    %139 = arith.mulf %138, %120 : vector<8x16xf32>
    %140 = arith.addf %104, %139 : vector<8x16xf32>
    %c125 = arith.constant 125 : index
    %141 = memref.load %arg2[%c125] : memref<360xf32, #tpu.memory_space<smem>>
    %142 = vector.broadcast %141 : f32 to vector<8x16xf32>
    %143 = arith.mulf %142, %120 : vector<8x16xf32>
    %144 = arith.addf %108, %143 : vector<8x16xf32>
    %c126 = arith.constant 126 : index
    %145 = memref.load %arg2[%c126] : memref<360xf32, #tpu.memory_space<smem>>
    %146 = vector.broadcast %145 : f32 to vector<8x16xf32>
    %147 = arith.mulf %146, %120 : vector<8x16xf32>
    %148 = arith.addf %112, %147 : vector<8x16xf32>
    %c127 = arith.constant 127 : index
    %149 = memref.load %arg2[%c127] : memref<360xf32, #tpu.memory_space<smem>>
    %150 = vector.broadcast %149 : f32 to vector<8x16xf32>
    %151 = arith.mulf %150, %120 : vector<8x16xf32>
    %152 = arith.addf %116, %151 : vector<8x16xf32>
    %c1_i32_21 = arith.constant 1 : i32
    %153 = arith.addi %0, %c1_i32_21 : i32
    %c0_22 = arith.constant 0 : index
    %c0_23 = arith.constant 0 : index
    %154 = arith.index_cast %153 : i32 to index
    %c1_24 = arith.constant 1 : index
    %155 = vector.load %arg3[%c0_22, %c0_23, %154, %c1_24] : memref<1x5x18x18xf32, #tpu.memory_space<vmem>>, vector<1x1x8x16xf32>
    %156 = vector.shape_cast %155 : vector<1x1x8x16xf32> to vector<8x16xf32>
    %c160 = arith.constant 160 : index
    %157 = memref.load %arg2[%c160] : memref<360xf32, #tpu.memory_space<smem>>
    %158 = vector.broadcast %157 : f32 to vector<8x16xf32>
    %159 = arith.mulf %158, %156 : vector<8x16xf32>
    %160 = arith.addf %124, %159 : vector<8x16xf32>
    %c161 = arith.constant 161 : index
    %161 = memref.load %arg2[%c161] : memref<360xf32, #tpu.memory_space<smem>>
    %162 = vector.broadcast %161 : f32 to vector<8x16xf32>
    %163 = arith.mulf %162, %156 : vector<8x16xf32>
    %164 = arith.addf %128, %163 : vector<8x16xf32>
    %c162 = arith.constant 162 : index
    %165 = memref.load %arg2[%c162] : memref<360xf32, #tpu.memory_space<smem>>
    %166 = vector.broadcast %165 : f32 to vector<8x16xf32>
    %167 = arith.mulf %166, %156 : vector<8x16xf32>
    %168 = arith.addf %132, %167 : vector<8x16xf32>
    %c163 = arith.constant 163 : index
    %169 = memref.load %arg2[%c163] : memref<360xf32, #tpu.memory_space<smem>>
    %170 = vector.broadcast %169 : f32 to vector<8x16xf32>
    %171 = arith.mulf %170, %156 : vector<8x16xf32>
    %172 = arith.addf %136, %171 : vector<8x16xf32>
    %c164 = arith.constant 164 : index
    %173 = memref.load %arg2[%c164] : memref<360xf32, #tpu.memory_space<smem>>
    %174 = vector.broadcast %173 : f32 to vector<8x16xf32>
    %175 = arith.mulf %174, %156 : vector<8x16xf32>
    %176 = arith.addf %140, %175 : vector<8x16xf32>
    %c165 = arith.constant 165 : index
    %177 = memref.load %arg2[%c165] : memref<360xf32, #tpu.memory_space<smem>>
    %178 = vector.broadcast %177 : f32 to vector<8x16xf32>
    %179 = arith.mulf %178, %156 : vector<8x16xf32>
    %180 = arith.addf %144, %179 : vector<8x16xf32>
    %c166 = arith.constant 166 : index
    %181 = memref.load %arg2[%c166] : memref<360xf32, #tpu.memory_space<smem>>
    %182 = vector.broadcast %181 : f32 to vector<8x16xf32>
    %183 = arith.mulf %182, %156 : vector<8x16xf32>
    %184 = arith.addf %148, %183 : vector<8x16xf32>
    %c167 = arith.constant 167 : index
    %185 = memref.load %arg2[%c167] : memref<360xf32, #tpu.memory_space<smem>>
    %186 = vector.broadcast %185 : f32 to vector<8x16xf32>
    %187 = arith.mulf %186, %156 : vector<8x16xf32>
    %188 = arith.addf %152, %187 : vector<8x16xf32>
    %c1_i32_25 = arith.constant 1 : i32
    %189 = arith.addi %0, %c1_i32_25 : i32
    %c0_26 = arith.constant 0 : index
    %c0_27 = arith.constant 0 : index
    %190 = arith.index_cast %189 : i32 to index
    %c2_28 = arith.constant 2 : index
    %191 = vector.load %arg3[%c0_26, %c0_27, %190, %c2_28] : memref<1x5x18x18xf32, #tpu.memory_space<vmem>>, vector<1x1x8x16xf32>
    %192 = vector.shape_cast %191 : vector<1x1x8x16xf32> to vector<8x16xf32>
    %c200 = arith.constant 200 : index
    %193 = memref.load %arg2[%c200] : memref<360xf32, #tpu.memory_space<smem>>
    %194 = vector.broadcast %193 : f32 to vector<8x16xf32>
    %195 = arith.mulf %194, %192 : vector<8x16xf32>
    %196 = arith.addf %160, %195 : vector<8x16xf32>
    %c201 = arith.constant 201 : index
    %197 = memref.load %arg2[%c201] : memref<360xf32, #tpu.memory_space<smem>>
    %198 = vector.broadcast %197 : f32 to vector<8x16xf32>
    %199 = arith.mulf %198, %192 : vector<8x16xf32>
    %200 = arith.addf %164, %199 : vector<8x16xf32>
    %c202 = arith.constant 202 : index
    %201 = memref.load %arg2[%c202] : memref<360xf32, #tpu.memory_space<smem>>
    %202 = vector.broadcast %201 : f32 to vector<8x16xf32>
    %203 = arith.mulf %202, %192 : vector<8x16xf32>
    %204 = arith.addf %168, %203 : vector<8x16xf32>
    %c203 = arith.constant 203 : index
    %205 = memref.load %arg2[%c203] : memref<360xf32, #tpu.memory_space<smem>>
    %206 = vector.broadcast %205 : f32 to vector<8x16xf32>
    %207 = arith.mulf %206, %192 : vector<8x16xf32>
    %208 = arith.addf %172, %207 : vector<8x16xf32>
    %c204 = arith.constant 204 : index
    %209 = memref.load %arg2[%c204] : memref<360xf32, #tpu.memory_space<smem>>
    %210 = vector.broadcast %209 : f32 to vector<8x16xf32>
    %211 = arith.mulf %210, %192 : vector<8x16xf32>
    %212 = arith.addf %176, %211 : vector<8x16xf32>
    %c205 = arith.constant 205 : index
    %213 = memref.load %arg2[%c205] : memref<360xf32, #tpu.memory_space<smem>>
    %214 = vector.broadcast %213 : f32 to vector<8x16xf32>
    %215 = arith.mulf %214, %192 : vector<8x16xf32>
    %216 = arith.addf %180, %215 : vector<8x16xf32>
    %c206 = arith.constant 206 : index
    %217 = memref.load %arg2[%c206] : memref<360xf32, #tpu.memory_space<smem>>
    %218 = vector.broadcast %217 : f32 to vector<8x16xf32>
    %219 = arith.mulf %218, %192 : vector<8x16xf32>
    %220 = arith.addf %184, %219 : vector<8x16xf32>
    %c207 = arith.constant 207 : index
    %221 = memref.load %arg2[%c207] : memref<360xf32, #tpu.memory_space<smem>>
    %222 = vector.broadcast %221 : f32 to vector<8x16xf32>
    %223 = arith.mulf %222, %192 : vector<8x16xf32>
    %224 = arith.addf %188, %223 : vector<8x16xf32>
    %c2_i32 = arith.constant 2 : i32
    %225 = arith.addi %0, %c2_i32 : i32
    %c0_29 = arith.constant 0 : index
    %c0_30 = arith.constant 0 : index
    %226 = arith.index_cast %225 : i32 to index
    %c0_31 = arith.constant 0 : index
    %227 = vector.load %arg3[%c0_29, %c0_30, %226, %c0_31] : memref<1x5x18x18xf32, #tpu.memory_space<vmem>>, vector<1x1x8x16xf32>
    %228 = vector.shape_cast %227 : vector<1x1x8x16xf32> to vector<8x16xf32>
    %c240 = arith.constant 240 : index
    %229 = memref.load %arg2[%c240] : memref<360xf32, #tpu.memory_space<smem>>
    %230 = vector.broadcast %229 : f32 to vector<8x16xf32>
    %231 = arith.mulf %230, %228 : vector<8x16xf32>
    %232 = arith.addf %196, %231 : vector<8x16xf32>
    %c241 = arith.constant 241 : index
    %233 = memref.load %arg2[%c241] : memref<360xf32, #tpu.memory_space<smem>>
    %234 = vector.broadcast %233 : f32 to vector<8x16xf32>
    %235 = arith.mulf %234, %228 : vector<8x16xf32>
    %236 = arith.addf %200, %235 : vector<8x16xf32>
    %c242 = arith.constant 242 : index
    %237 = memref.load %arg2[%c242] : memref<360xf32, #tpu.memory_space<smem>>
    %238 = vector.broadcast %237 : f32 to vector<8x16xf32>
    %239 = arith.mulf %238, %228 : vector<8x16xf32>
    %240 = arith.addf %204, %239 : vector<8x16xf32>
    %c243 = arith.constant 243 : index
    %241 = memref.load %arg2[%c243] : memref<360xf32, #tpu.memory_space<smem>>
    %242 = vector.broadcast %241 : f32 to vector<8x16xf32>
    %243 = arith.mulf %242, %228 : vector<8x16xf32>
    %244 = arith.addf %208, %243 : vector<8x16xf32>
    %c244 = arith.constant 244 : index
    %245 = memref.load %arg2[%c244] : memref<360xf32, #tpu.memory_space<smem>>
    %246 = vector.broadcast %245 : f32 to vector<8x16xf32>
    %247 = arith.mulf %246, %228 : vector<8x16xf32>
    %248 = arith.addf %212, %247 : vector<8x16xf32>
    %c245 = arith.constant 245 : index
    %249 = memref.load %arg2[%c245] : memref<360xf32, #tpu.memory_space<smem>>
    %250 = vector.broadcast %249 : f32 to vector<8x16xf32>
    %251 = arith.mulf %250, %228 : vector<8x16xf32>
    %252 = arith.addf %216, %251 : vector<8x16xf32>
    %c246 = arith.constant 246 : index
    %253 = memref.load %arg2[%c246] : memref<360xf32, #tpu.memory_space<smem>>
    %254 = vector.broadcast %253 : f32 to vector<8x16xf32>
    %255 = arith.mulf %254, %228 : vector<8x16xf32>
    %256 = arith.addf %220, %255 : vector<8x16xf32>
    %c247 = arith.constant 247 : index
    %257 = memref.load %arg2[%c247] : memref<360xf32, #tpu.memory_space<smem>>
    %258 = vector.broadcast %257 : f32 to vector<8x16xf32>
    %259 = arith.mulf %258, %228 : vector<8x16xf32>
    %260 = arith.addf %224, %259 : vector<8x16xf32>
    %c2_i32_32 = arith.constant 2 : i32
    %261 = arith.addi %0, %c2_i32_32 : i32
    %c0_33 = arith.constant 0 : index
    %c0_34 = arith.constant 0 : index
    %262 = arith.index_cast %261 : i32 to index
    %c1_35 = arith.constant 1 : index
    %263 = vector.load %arg3[%c0_33, %c0_34, %262, %c1_35] : memref<1x5x18x18xf32, #tpu.memory_space<vmem>>, vector<1x1x8x16xf32>
    %264 = vector.shape_cast %263 : vector<1x1x8x16xf32> to vector<8x16xf32>
    %c280 = arith.constant 280 : index
    %265 = memref.load %arg2[%c280] : memref<360xf32, #tpu.memory_space<smem>>
    %266 = vector.broadcast %265 : f32 to vector<8x16xf32>
    %267 = arith.mulf %266, %264 : vector<8x16xf32>
    %268 = arith.addf %232, %267 : vector<8x16xf32>
    %c281 = arith.constant 281 : index
    %269 = memref.load %arg2[%c281] : memref<360xf32, #tpu.memory_space<smem>>
    %270 = vector.broadcast %269 : f32 to vector<8x16xf32>
    %271 = arith.mulf %270, %264 : vector<8x16xf32>
    %272 = arith.addf %236, %271 : vector<8x16xf32>
    %c282 = arith.constant 282 : index
    %273 = memref.load %arg2[%c282] : memref<360xf32, #tpu.memory_space<smem>>
    %274 = vector.broadcast %273 : f32 to vector<8x16xf32>
    %275 = arith.mulf %274, %264 : vector<8x16xf32>
    %276 = arith.addf %240, %275 : vector<8x16xf32>
    %c283 = arith.constant 283 : index
    %277 = memref.load %arg2[%c283] : memref<360xf32, #tpu.memory_space<smem>>
    %278 = vector.broadcast %277 : f32 to vector<8x16xf32>
    %279 = arith.mulf %278, %264 : vector<8x16xf32>
    %280 = arith.addf %244, %279 : vector<8x16xf32>
    %c284 = arith.constant 284 : index
    %281 = memref.load %arg2[%c284] : memref<360xf32, #tpu.memory_space<smem>>
    %282 = vector.broadcast %281 : f32 to vector<8x16xf32>
    %283 = arith.mulf %282, %264 : vector<8x16xf32>
    %284 = arith.addf %248, %283 : vector<8x16xf32>
    %c285 = arith.constant 285 : index
    %285 = memref.load %arg2[%c285] : memref<360xf32, #tpu.memory_space<smem>>
    %286 = vector.broadcast %285 : f32 to vector<8x16xf32>
    %287 = arith.mulf %286, %264 : vector<8x16xf32>
    %288 = arith.addf %252, %287 : vector<8x16xf32>
    %c286 = arith.constant 286 : index
    %289 = memref.load %arg2[%c286] : memref<360xf32, #tpu.memory_space<smem>>
    %290 = vector.broadcast %289 : f32 to vector<8x16xf32>
    %291 = arith.mulf %290, %264 : vector<8x16xf32>
    %292 = arith.addf %256, %291 : vector<8x16xf32>
    %c287 = arith.constant 287 : index
    %293 = memref.load %arg2[%c287] : memref<360xf32, #tpu.memory_space<smem>>
    %294 = vector.broadcast %293 : f32 to vector<8x16xf32>
    %295 = arith.mulf %294, %264 : vector<8x16xf32>
    %296 = arith.addf %260, %295 : vector<8x16xf32>
    %c2_i32_36 = arith.constant 2 : i32
    %297 = arith.addi %0, %c2_i32_36 : i32
    %c0_37 = arith.constant 0 : index
    %c0_38 = arith.constant 0 : index
    %298 = arith.index_cast %297 : i32 to index
    %c2_39 = arith.constant 2 : index
    %299 = vector.load %arg3[%c0_37, %c0_38, %298, %c2_39] : memref<1x5x18x18xf32, #tpu.memory_space<vmem>>, vector<1x1x8x16xf32>
    %300 = vector.shape_cast %299 : vector<1x1x8x16xf32> to vector<8x16xf32>
    %c320 = arith.constant 320 : index
    %301 = memref.load %arg2[%c320] : memref<360xf32, #tpu.memory_space<smem>>
    %302 = vector.broadcast %301 : f32 to vector<8x16xf32>
    %303 = arith.mulf %302, %300 : vector<8x16xf32>
    %304 = arith.addf %268, %303 : vector<8x16xf32>
    %c321 = arith.constant 321 : index
    %305 = memref.load %arg2[%c321] : memref<360xf32, #tpu.memory_space<smem>>
    %306 = vector.broadcast %305 : f32 to vector<8x16xf32>
    %307 = arith.mulf %306, %300 : vector<8x16xf32>
    %308 = arith.addf %272, %307 : vector<8x16xf32>
    %c322 = arith.constant 322 : index
    %309 = memref.load %arg2[%c322] : memref<360xf32, #tpu.memory_space<smem>>
    %310 = vector.broadcast %309 : f32 to vector<8x16xf32>
    %311 = arith.mulf %310, %300 : vector<8x16xf32>
    %312 = arith.addf %276, %311 : vector<8x16xf32>
    %c323 = arith.constant 323 : index
    %313 = memref.load %arg2[%c323] : memref<360xf32, #tpu.memory_space<smem>>
    %314 = vector.broadcast %313 : f32 to vector<8x16xf32>
    %315 = arith.mulf %314, %300 : vector<8x16xf32>
    %316 = arith.addf %280, %315 : vector<8x16xf32>
    %c324 = arith.constant 324 : index
    %317 = memref.load %arg2[%c324] : memref<360xf32, #tpu.memory_space<smem>>
    %318 = vector.broadcast %317 : f32 to vector<8x16xf32>
    %319 = arith.mulf %318, %300 : vector<8x16xf32>
    %320 = arith.addf %284, %319 : vector<8x16xf32>
    %c325 = arith.constant 325 : index
    %321 = memref.load %arg2[%c325] : memref<360xf32, #tpu.memory_space<smem>>
    %322 = vector.broadcast %321 : f32 to vector<8x16xf32>
    %323 = arith.mulf %322, %300 : vector<8x16xf32>
    %324 = arith.addf %288, %323 : vector<8x16xf32>
    %c326 = arith.constant 326 : index
    %325 = memref.load %arg2[%c326] : memref<360xf32, #tpu.memory_space<smem>>
    %326 = vector.broadcast %325 : f32 to vector<8x16xf32>
    %327 = arith.mulf %326, %300 : vector<8x16xf32>
    %328 = arith.addf %292, %327 : vector<8x16xf32>
    %c327 = arith.constant 327 : index
    %329 = memref.load %arg2[%c327] : memref<360xf32, #tpu.memory_space<smem>>
    %330 = vector.broadcast %329 : f32 to vector<8x16xf32>
    %331 = arith.mulf %330, %300 : vector<8x16xf32>
    %332 = arith.addf %296, %331 : vector<8x16xf32>
    %c0_i32_40 = arith.constant 0 : i32
    %333 = arith.addi %0, %c0_i32_40 : i32
    %c0_41 = arith.constant 0 : index
    %c1_42 = arith.constant 1 : index
    %334 = arith.index_cast %333 : i32 to index
    %c0_43 = arith.constant 0 : index
    %335 = vector.load %arg3[%c0_41, %c1_42, %334, %c0_43] : memref<1x5x18x18xf32, #tpu.memory_space<vmem>>, vector<1x1x8x16xf32>
    %336 = vector.shape_cast %335 : vector<1x1x8x16xf32> to vector<8x16xf32>
    %c8 = arith.constant 8 : index
    %337 = memref.load %arg2[%c8] : memref<360xf32, #tpu.memory_space<smem>>
    %338 = vector.broadcast %337 : f32 to vector<8x16xf32>
    %339 = arith.mulf %338, %336 : vector<8x16xf32>
    %340 = arith.addf %304, %339 : vector<8x16xf32>
    %c9 = arith.constant 9 : index
    %341 = memref.load %arg2[%c9] : memref<360xf32, #tpu.memory_space<smem>>
    %342 = vector.broadcast %341 : f32 to vector<8x16xf32>
    %343 = arith.mulf %342, %336 : vector<8x16xf32>
    %344 = arith.addf %308, %343 : vector<8x16xf32>
    %c10 = arith.constant 10 : index
    %345 = memref.load %arg2[%c10] : memref<360xf32, #tpu.memory_space<smem>>
    %346 = vector.broadcast %345 : f32 to vector<8x16xf32>
    %347 = arith.mulf %346, %336 : vector<8x16xf32>
    %348 = arith.addf %312, %347 : vector<8x16xf32>
    %c11 = arith.constant 11 : index
    %349 = memref.load %arg2[%c11] : memref<360xf32, #tpu.memory_space<smem>>
    %350 = vector.broadcast %349 : f32 to vector<8x16xf32>
    %351 = arith.mulf %350, %336 : vector<8x16xf32>
    %352 = arith.addf %316, %351 : vector<8x16xf32>
    %c12 = arith.constant 12 : index
    %353 = memref.load %arg2[%c12] : memref<360xf32, #tpu.memory_space<smem>>
    %354 = vector.broadcast %353 : f32 to vector<8x16xf32>
    %355 = arith.mulf %354, %336 : vector<8x16xf32>
    %356 = arith.addf %320, %355 : vector<8x16xf32>
    %c13 = arith.constant 13 : index
    %357 = memref.load %arg2[%c13] : memref<360xf32, #tpu.memory_space<smem>>
    %358 = vector.broadcast %357 : f32 to vector<8x16xf32>
    %359 = arith.mulf %358, %336 : vector<8x16xf32>
    %360 = arith.addf %324, %359 : vector<8x16xf32>
    %c14 = arith.constant 14 : index
    %361 = memref.load %arg2[%c14] : memref<360xf32, #tpu.memory_space<smem>>
    %362 = vector.broadcast %361 : f32 to vector<8x16xf32>
    %363 = arith.mulf %362, %336 : vector<8x16xf32>
    %364 = arith.addf %328, %363 : vector<8x16xf32>
    %c15 = arith.constant 15 : index
    %365 = memref.load %arg2[%c15] : memref<360xf32, #tpu.memory_space<smem>>
    %366 = vector.broadcast %365 : f32 to vector<8x16xf32>
    %367 = arith.mulf %366, %336 : vector<8x16xf32>
    %368 = arith.addf %332, %367 : vector<8x16xf32>
    %c0_i32_44 = arith.constant 0 : i32
    %369 = arith.addi %0, %c0_i32_44 : i32
    %c0_45 = arith.constant 0 : index
    %c1_46 = arith.constant 1 : index
    %370 = arith.index_cast %369 : i32 to index
    %c1_47 = arith.constant 1 : index
    %371 = vector.load %arg3[%c0_45, %c1_46, %370, %c1_47] : memref<1x5x18x18xf32, #tpu.memory_space<vmem>>, vector<1x1x8x16xf32>
    %372 = vector.shape_cast %371 : vector<1x1x8x16xf32> to vector<8x16xf32>
    %c48 = arith.constant 48 : index
    %373 = memref.load %arg2[%c48] : memref<360xf32, #tpu.memory_space<smem>>
    %374 = vector.broadcast %373 : f32 to vector<8x16xf32>
    %375 = arith.mulf %374, %372 : vector<8x16xf32>
    %376 = arith.addf %340, %375 : vector<8x16xf32>
    %c49 = arith.constant 49 : index
    %377 = memref.load %arg2[%c49] : memref<360xf32, #tpu.memory_space<smem>>
    %378 = vector.broadcast %377 : f32 to vector<8x16xf32>
    %379 = arith.mulf %378, %372 : vector<8x16xf32>
    %380 = arith.addf %344, %379 : vector<8x16xf32>
    %c50 = arith.constant 50 : index
    %381 = memref.load %arg2[%c50] : memref<360xf32, #tpu.memory_space<smem>>
    %382 = vector.broadcast %381 : f32 to vector<8x16xf32>
    %383 = arith.mulf %382, %372 : vector<8x16xf32>
    %384 = arith.addf %348, %383 : vector<8x16xf32>
    %c51 = arith.constant 51 : index
    %385 = memref.load %arg2[%c51] : memref<360xf32, #tpu.memory_space<smem>>
    %386 = vector.broadcast %385 : f32 to vector<8x16xf32>
    %387 = arith.mulf %386, %372 : vector<8x16xf32>
    %388 = arith.addf %352, %387 : vector<8x16xf32>
    %c52 = arith.constant 52 : index
    %389 = memref.load %arg2[%c52] : memref<360xf32, #tpu.memory_space<smem>>
    %390 = vector.broadcast %389 : f32 to vector<8x16xf32>
    %391 = arith.mulf %390, %372 : vector<8x16xf32>
    %392 = arith.addf %356, %391 : vector<8x16xf32>
    %c53 = arith.constant 53 : index
    %393 = memref.load %arg2[%c53] : memref<360xf32, #tpu.memory_space<smem>>
    %394 = vector.broadcast %393 : f32 to vector<8x16xf32>
    %395 = arith.mulf %394, %372 : vector<8x16xf32>
    %396 = arith.addf %360, %395 : vector<8x16xf32>
    %c54 = arith.constant 54 : index
    %397 = memref.load %arg2[%c54] : memref<360xf32, #tpu.memory_space<smem>>
    %398 = vector.broadcast %397 : f32 to vector<8x16xf32>
    %399 = arith.mulf %398, %372 : vector<8x16xf32>
    %400 = arith.addf %364, %399 : vector<8x16xf32>
    %c55 = arith.constant 55 : index
    %401 = memref.load %arg2[%c55] : memref<360xf32, #tpu.memory_space<smem>>
    %402 = vector.broadcast %401 : f32 to vector<8x16xf32>
    %403 = arith.mulf %402, %372 : vector<8x16xf32>
    %404 = arith.addf %368, %403 : vector<8x16xf32>
    %c0_i32_48 = arith.constant 0 : i32
    %405 = arith.addi %0, %c0_i32_48 : i32
    %c0_49 = arith.constant 0 : index
    %c1_50 = arith.constant 1 : index
    %406 = arith.index_cast %405 : i32 to index
    %c2_51 = arith.constant 2 : index
    %407 = vector.load %arg3[%c0_49, %c1_50, %406, %c2_51] : memref<1x5x18x18xf32, #tpu.memory_space<vmem>>, vector<1x1x8x16xf32>
    %408 = vector.shape_cast %407 : vector<1x1x8x16xf32> to vector<8x16xf32>
    %c88 = arith.constant 88 : index
    %409 = memref.load %arg2[%c88] : memref<360xf32, #tpu.memory_space<smem>>
    %410 = vector.broadcast %409 : f32 to vector<8x16xf32>
    %411 = arith.mulf %410, %408 : vector<8x16xf32>
    %412 = arith.addf %376, %411 : vector<8x16xf32>
    %c89 = arith.constant 89 : index
    %413 = memref.load %arg2[%c89] : memref<360xf32, #tpu.memory_space<smem>>
    %414 = vector.broadcast %413 : f32 to vector<8x16xf32>
    %415 = arith.mulf %414, %408 : vector<8x16xf32>
    %416 = arith.addf %380, %415 : vector<8x16xf32>
    %c90 = arith.constant 90 : index
    %417 = memref.load %arg2[%c90] : memref<360xf32, #tpu.memory_space<smem>>
    %418 = vector.broadcast %417 : f32 to vector<8x16xf32>
    %419 = arith.mulf %418, %408 : vector<8x16xf32>
    %420 = arith.addf %384, %419 : vector<8x16xf32>
    %c91 = arith.constant 91 : index
    %421 = memref.load %arg2[%c91] : memref<360xf32, #tpu.memory_space<smem>>
    %422 = vector.broadcast %421 : f32 to vector<8x16xf32>
    %423 = arith.mulf %422, %408 : vector<8x16xf32>
    %424 = arith.addf %388, %423 : vector<8x16xf32>
    %c92 = arith.constant 92 : index
    %425 = memref.load %arg2[%c92] : memref<360xf32, #tpu.memory_space<smem>>
    %426 = vector.broadcast %425 : f32 to vector<8x16xf32>
    %427 = arith.mulf %426, %408 : vector<8x16xf32>
    %428 = arith.addf %392, %427 : vector<8x16xf32>
    %c93 = arith.constant 93 : index
    %429 = memref.load %arg2[%c93] : memref<360xf32, #tpu.memory_space<smem>>
    %430 = vector.broadcast %429 : f32 to vector<8x16xf32>
    %431 = arith.mulf %430, %408 : vector<8x16xf32>
    %432 = arith.addf %396, %431 : vector<8x16xf32>
    %c94 = arith.constant 94 : index
    %433 = memref.load %arg2[%c94] : memref<360xf32, #tpu.memory_space<smem>>
    %434 = vector.broadcast %433 : f32 to vector<8x16xf32>
    %435 = arith.mulf %434, %408 : vector<8x16xf32>
    %436 = arith.addf %400, %435 : vector<8x16xf32>
    %c95 = arith.constant 95 : index
    %437 = memref.load %arg2[%c95] : memref<360xf32, #tpu.memory_space<smem>>
    %438 = vector.broadcast %437 : f32 to vector<8x16xf32>
    %439 = arith.mulf %438, %408 : vector<8x16xf32>
    %440 = arith.addf %404, %439 : vector<8x16xf32>
    %c1_i32_52 = arith.constant 1 : i32
    %441 = arith.addi %0, %c1_i32_52 : i32
    %c0_53 = arith.constant 0 : index
    %c1_54 = arith.constant 1 : index
    %442 = arith.index_cast %441 : i32 to index
    %c0_55 = arith.constant 0 : index
    %443 = vector.load %arg3[%c0_53, %c1_54, %442, %c0_55] : memref<1x5x18x18xf32, #tpu.memory_space<vmem>>, vector<1x1x8x16xf32>
    %444 = vector.shape_cast %443 : vector<1x1x8x16xf32> to vector<8x16xf32>
    %c128 = arith.constant 128 : index
    %445 = memref.load %arg2[%c128] : memref<360xf32, #tpu.memory_space<smem>>
    %446 = vector.broadcast %445 : f32 to vector<8x16xf32>
    %447 = arith.mulf %446, %444 : vector<8x16xf32>
    %448 = arith.addf %412, %447 : vector<8x16xf32>
    %c129 = arith.constant 129 : index
    %449 = memref.load %arg2[%c129] : memref<360xf32, #tpu.memory_space<smem>>
    %450 = vector.broadcast %449 : f32 to vector<8x16xf32>
    %451 = arith.mulf %450, %444 : vector<8x16xf32>
    %452 = arith.addf %416, %451 : vector<8x16xf32>
    %c130 = arith.constant 130 : index
    %453 = memref.load %arg2[%c130] : memref<360xf32, #tpu.memory_space<smem>>
    %454 = vector.broadcast %453 : f32 to vector<8x16xf32>
    %455 = arith.mulf %454, %444 : vector<8x16xf32>
    %456 = arith.addf %420, %455 : vector<8x16xf32>
    %c131 = arith.constant 131 : index
    %457 = memref.load %arg2[%c131] : memref<360xf32, #tpu.memory_space<smem>>
    %458 = vector.broadcast %457 : f32 to vector<8x16xf32>
    %459 = arith.mulf %458, %444 : vector<8x16xf32>
    %460 = arith.addf %424, %459 : vector<8x16xf32>
    %c132 = arith.constant 132 : index
    %461 = memref.load %arg2[%c132] : memref<360xf32, #tpu.memory_space<smem>>
    %462 = vector.broadcast %461 : f32 to vector<8x16xf32>
    %463 = arith.mulf %462, %444 : vector<8x16xf32>
    %464 = arith.addf %428, %463 : vector<8x16xf32>
    %c133 = arith.constant 133 : index
    %465 = memref.load %arg2[%c133] : memref<360xf32, #tpu.memory_space<smem>>
    %466 = vector.broadcast %465 : f32 to vector<8x16xf32>
    %467 = arith.mulf %466, %444 : vector<8x16xf32>
    %468 = arith.addf %432, %467 : vector<8x16xf32>
    %c134 = arith.constant 134 : index
    %469 = memref.load %arg2[%c134] : memref<360xf32, #tpu.memory_space<smem>>
    %470 = vector.broadcast %469 : f32 to vector<8x16xf32>
    %471 = arith.mulf %470, %444 : vector<8x16xf32>
    %472 = arith.addf %436, %471 : vector<8x16xf32>
    %c135 = arith.constant 135 : index
    %473 = memref.load %arg2[%c135] : memref<360xf32, #tpu.memory_space<smem>>
    %474 = vector.broadcast %473 : f32 to vector<8x16xf32>
    %475 = arith.mulf %474, %444 : vector<8x16xf32>
    %476 = arith.addf %440, %475 : vector<8x16xf32>
    %c1_i32_56 = arith.constant 1 : i32
    %477 = arith.addi %0, %c1_i32_56 : i32
    %c0_57 = arith.constant 0 : index
    %c1_58 = arith.constant 1 : index
    %478 = arith.index_cast %477 : i32 to index
    %c1_59 = arith.constant 1 : index
    %479 = vector.load %arg3[%c0_57, %c1_58, %478, %c1_59] : memref<1x5x18x18xf32, #tpu.memory_space<vmem>>, vector<1x1x8x16xf32>
    %480 = vector.shape_cast %479 : vector<1x1x8x16xf32> to vector<8x16xf32>
    %c168 = arith.constant 168 : index
    %481 = memref.load %arg2[%c168] : memref<360xf32, #tpu.memory_space<smem>>
    %482 = vector.broadcast %481 : f32 to vector<8x16xf32>
    %483 = arith.mulf %482, %480 : vector<8x16xf32>
    %484 = arith.addf %448, %483 : vector<8x16xf32>
    %c169 = arith.constant 169 : index
    %485 = memref.load %arg2[%c169] : memref<360xf32, #tpu.memory_space<smem>>
    %486 = vector.broadcast %485 : f32 to vector<8x16xf32>
    %487 = arith.mulf %486, %480 : vector<8x16xf32>
    %488 = arith.addf %452, %487 : vector<8x16xf32>
    %c170 = arith.constant 170 : index
    %489 = memref.load %arg2[%c170] : memref<360xf32, #tpu.memory_space<smem>>
    %490 = vector.broadcast %489 : f32 to vector<8x16xf32>
    %491 = arith.mulf %490, %480 : vector<8x16xf32>
    %492 = arith.addf %456, %491 : vector<8x16xf32>
    %c171 = arith.constant 171 : index
    %493 = memref.load %arg2[%c171] : memref<360xf32, #tpu.memory_space<smem>>
    %494 = vector.broadcast %493 : f32 to vector<8x16xf32>
    %495 = arith.mulf %494, %480 : vector<8x16xf32>
    %496 = arith.addf %460, %495 : vector<8x16xf32>
    %c172 = arith.constant 172 : index
    %497 = memref.load %arg2[%c172] : memref<360xf32, #tpu.memory_space<smem>>
    %498 = vector.broadcast %497 : f32 to vector<8x16xf32>
    %499 = arith.mulf %498, %480 : vector<8x16xf32>
    %500 = arith.addf %464, %499 : vector<8x16xf32>
    %c173 = arith.constant 173 : index
    %501 = memref.load %arg2[%c173] : memref<360xf32, #tpu.memory_space<smem>>
    %502 = vector.broadcast %501 : f32 to vector<8x16xf32>
    %503 = arith.mulf %502, %480 : vector<8x16xf32>
    %504 = arith.addf %468, %503 : vector<8x16xf32>
    %c174 = arith.constant 174 : index
    %505 = memref.load %arg2[%c174] : memref<360xf32, #tpu.memory_space<smem>>
    %506 = vector.broadcast %505 : f32 to vector<8x16xf32>
    %507 = arith.mulf %506, %480 : vector<8x16xf32>
    %508 = arith.addf %472, %507 : vector<8x16xf32>
    %c175 = arith.constant 175 : index
    %509 = memref.load %arg2[%c175] : memref<360xf32, #tpu.memory_space<smem>>
    %510 = vector.broadcast %509 : f32 to vector<8x16xf32>
    %511 = arith.mulf %510, %480 : vector<8x16xf32>
    %512 = arith.addf %476, %511 : vector<8x16xf32>
    %c1_i32_60 = arith.constant 1 : i32
    %513 = arith.addi %0, %c1_i32_60 : i32
    %c0_61 = arith.constant 0 : index
    %c1_62 = arith.constant 1 : index
    %514 = arith.index_cast %513 : i32 to index
    %c2_63 = arith.constant 2 : index
    %515 = vector.load %arg3[%c0_61, %c1_62, %514, %c2_63] : memref<1x5x18x18xf32, #tpu.memory_space<vmem>>, vector<1x1x8x16xf32>
    %516 = vector.shape_cast %515 : vector<1x1x8x16xf32> to vector<8x16xf32>
    %c208 = arith.constant 208 : index
    %517 = memref.load %arg2[%c208] : memref<360xf32, #tpu.memory_space<smem>>
    %518 = vector.broadcast %517 : f32 to vector<8x16xf32>
    %519 = arith.mulf %518, %516 : vector<8x16xf32>
    %520 = arith.addf %484, %519 : vector<8x16xf32>
    %c209 = arith.constant 209 : index
    %521 = memref.load %arg2[%c209] : memref<360xf32, #tpu.memory_space<smem>>
    %522 = vector.broadcast %521 : f32 to vector<8x16xf32>
    %523 = arith.mulf %522, %516 : vector<8x16xf32>
    %524 = arith.addf %488, %523 : vector<8x16xf32>
    %c210 = arith.constant 210 : index
    %525 = memref.load %arg2[%c210] : memref<360xf32, #tpu.memory_space<smem>>
    %526 = vector.broadcast %525 : f32 to vector<8x16xf32>
    %527 = arith.mulf %526, %516 : vector<8x16xf32>
    %528 = arith.addf %492, %527 : vector<8x16xf32>
    %c211 = arith.constant 211 : index
    %529 = memref.load %arg2[%c211] : memref<360xf32, #tpu.memory_space<smem>>
    %530 = vector.broadcast %529 : f32 to vector<8x16xf32>
    %531 = arith.mulf %530, %516 : vector<8x16xf32>
    %532 = arith.addf %496, %531 : vector<8x16xf32>
    %c212 = arith.constant 212 : index
    %533 = memref.load %arg2[%c212] : memref<360xf32, #tpu.memory_space<smem>>
    %534 = vector.broadcast %533 : f32 to vector<8x16xf32>
    %535 = arith.mulf %534, %516 : vector<8x16xf32>
    %536 = arith.addf %500, %535 : vector<8x16xf32>
    %c213 = arith.constant 213 : index
    %537 = memref.load %arg2[%c213] : memref<360xf32, #tpu.memory_space<smem>>
    %538 = vector.broadcast %537 : f32 to vector<8x16xf32>
    %539 = arith.mulf %538, %516 : vector<8x16xf32>
    %540 = arith.addf %504, %539 : vector<8x16xf32>
    %c214 = arith.constant 214 : index
    %541 = memref.load %arg2[%c214] : memref<360xf32, #tpu.memory_space<smem>>
    %542 = vector.broadcast %541 : f32 to vector<8x16xf32>
    %543 = arith.mulf %542, %516 : vector<8x16xf32>
    %544 = arith.addf %508, %543 : vector<8x16xf32>
    %c215 = arith.constant 215 : index
    %545 = memref.load %arg2[%c215] : memref<360xf32, #tpu.memory_space<smem>>
    %546 = vector.broadcast %545 : f32 to vector<8x16xf32>
    %547 = arith.mulf %546, %516 : vector<8x16xf32>
    %548 = arith.addf %512, %547 : vector<8x16xf32>
    %c2_i32_64 = arith.constant 2 : i32
    %549 = arith.addi %0, %c2_i32_64 : i32
    %c0_65 = arith.constant 0 : index
    %c1_66 = arith.constant 1 : index
    %550 = arith.index_cast %549 : i32 to index
    %c0_67 = arith.constant 0 : index
    %551 = vector.load %arg3[%c0_65, %c1_66, %550, %c0_67] : memref<1x5x18x18xf32, #tpu.memory_space<vmem>>, vector<1x1x8x16xf32>
    %552 = vector.shape_cast %551 : vector<1x1x8x16xf32> to vector<8x16xf32>
    %c248 = arith.constant 248 : index
    %553 = memref.load %arg2[%c248] : memref<360xf32, #tpu.memory_space<smem>>
    %554 = vector.broadcast %553 : f32 to vector<8x16xf32>
    %555 = arith.mulf %554, %552 : vector<8x16xf32>
    %556 = arith.addf %520, %555 : vector<8x16xf32>
    %c249 = arith.constant 249 : index
    %557 = memref.load %arg2[%c249] : memref<360xf32, #tpu.memory_space<smem>>
    %558 = vector.broadcast %557 : f32 to vector<8x16xf32>
    %559 = arith.mulf %558, %552 : vector<8x16xf32>
    %560 = arith.addf %524, %559 : vector<8x16xf32>
    %c250 = arith.constant 250 : index
    %561 = memref.load %arg2[%c250] : memref<360xf32, #tpu.memory_space<smem>>
    %562 = vector.broadcast %561 : f32 to vector<8x16xf32>
    %563 = arith.mulf %562, %552 : vector<8x16xf32>
    %564 = arith.addf %528, %563 : vector<8x16xf32>
    %c251 = arith.constant 251 : index
    %565 = memref.load %arg2[%c251] : memref<360xf32, #tpu.memory_space<smem>>
    %566 = vector.broadcast %565 : f32 to vector<8x16xf32>
    %567 = arith.mulf %566, %552 : vector<8x16xf32>
    %568 = arith.addf %532, %567 : vector<8x16xf32>
    %c252 = arith.constant 252 : index
    %569 = memref.load %arg2[%c252] : memref<360xf32, #tpu.memory_space<smem>>
    %570 = vector.broadcast %569 : f32 to vector<8x16xf32>
    %571 = arith.mulf %570, %552 : vector<8x16xf32>
    %572 = arith.addf %536, %571 : vector<8x16xf32>
    %c253 = arith.constant 253 : index
    %573 = memref.load %arg2[%c253] : memref<360xf32, #tpu.memory_space<smem>>
    %574 = vector.broadcast %573 : f32 to vector<8x16xf32>
    %575 = arith.mulf %574, %552 : vector<8x16xf32>
    %576 = arith.addf %540, %575 : vector<8x16xf32>
    %c254 = arith.constant 254 : index
    %577 = memref.load %arg2[%c254] : memref<360xf32, #tpu.memory_space<smem>>
    %578 = vector.broadcast %577 : f32 to vector<8x16xf32>
    %579 = arith.mulf %578, %552 : vector<8x16xf32>
    %580 = arith.addf %544, %579 : vector<8x16xf32>
    %c255 = arith.constant 255 : index
    %581 = memref.load %arg2[%c255] : memref<360xf32, #tpu.memory_space<smem>>
    %582 = vector.broadcast %581 : f32 to vector<8x16xf32>
    %583 = arith.mulf %582, %552 : vector<8x16xf32>
    %584 = arith.addf %548, %583 : vector<8x16xf32>
    %c2_i32_68 = arith.constant 2 : i32
    %585 = arith.addi %0, %c2_i32_68 : i32
    %c0_69 = arith.constant 0 : index
    %c1_70 = arith.constant 1 : index
    %586 = arith.index_cast %585 : i32 to index
    %c1_71 = arith.constant 1 : index
    %587 = vector.load %arg3[%c0_69, %c1_70, %586, %c1_71] : memref<1x5x18x18xf32, #tpu.memory_space<vmem>>, vector<1x1x8x16xf32>
    %588 = vector.shape_cast %587 : vector<1x1x8x16xf32> to vector<8x16xf32>
    %c288 = arith.constant 288 : index
    %589 = memref.load %arg2[%c288] : memref<360xf32, #tpu.memory_space<smem>>
    %590 = vector.broadcast %589 : f32 to vector<8x16xf32>
    %591 = arith.mulf %590, %588 : vector<8x16xf32>
    %592 = arith.addf %556, %591 : vector<8x16xf32>
    %c289 = arith.constant 289 : index
    %593 = memref.load %arg2[%c289] : memref<360xf32, #tpu.memory_space<smem>>
    %594 = vector.broadcast %593 : f32 to vector<8x16xf32>
    %595 = arith.mulf %594, %588 : vector<8x16xf32>
    %596 = arith.addf %560, %595 : vector<8x16xf32>
    %c290 = arith.constant 290 : index
    %597 = memref.load %arg2[%c290] : memref<360xf32, #tpu.memory_space<smem>>
    %598 = vector.broadcast %597 : f32 to vector<8x16xf32>
    %599 = arith.mulf %598, %588 : vector<8x16xf32>
    %600 = arith.addf %564, %599 : vector<8x16xf32>
    %c291 = arith.constant 291 : index
    %601 = memref.load %arg2[%c291] : memref<360xf32, #tpu.memory_space<smem>>
    %602 = vector.broadcast %601 : f32 to vector<8x16xf32>
    %603 = arith.mulf %602, %588 : vector<8x16xf32>
    %604 = arith.addf %568, %603 : vector<8x16xf32>
    %c292 = arith.constant 292 : index
    %605 = memref.load %arg2[%c292] : memref<360xf32, #tpu.memory_space<smem>>
    %606 = vector.broadcast %605 : f32 to vector<8x16xf32>
    %607 = arith.mulf %606, %588 : vector<8x16xf32>
    %608 = arith.addf %572, %607 : vector<8x16xf32>
    %c293 = arith.constant 293 : index
    %609 = memref.load %arg2[%c293] : memref<360xf32, #tpu.memory_space<smem>>
    %610 = vector.broadcast %609 : f32 to vector<8x16xf32>
    %611 = arith.mulf %610, %588 : vector<8x16xf32>
    %612 = arith.addf %576, %611 : vector<8x16xf32>
    %c294 = arith.constant 294 : index
    %613 = memref.load %arg2[%c294] : memref<360xf32, #tpu.memory_space<smem>>
    %614 = vector.broadcast %613 : f32 to vector<8x16xf32>
    %615 = arith.mulf %614, %588 : vector<8x16xf32>
    %616 = arith.addf %580, %615 : vector<8x16xf32>
    %c295 = arith.constant 295 : index
    %617 = memref.load %arg2[%c295] : memref<360xf32, #tpu.memory_space<smem>>
    %618 = vector.broadcast %617 : f32 to vector<8x16xf32>
    %619 = arith.mulf %618, %588 : vector<8x16xf32>
    %620 = arith.addf %584, %619 : vector<8x16xf32>
    %c2_i32_72 = arith.constant 2 : i32
    %621 = arith.addi %0, %c2_i32_72 : i32
    %c0_73 = arith.constant 0 : index
    %c1_74 = arith.constant 1 : index
    %622 = arith.index_cast %621 : i32 to index
    %c2_75 = arith.constant 2 : index
    %623 = vector.load %arg3[%c0_73, %c1_74, %622, %c2_75] : memref<1x5x18x18xf32, #tpu.memory_space<vmem>>, vector<1x1x8x16xf32>
    %624 = vector.shape_cast %623 : vector<1x1x8x16xf32> to vector<8x16xf32>
    %c328 = arith.constant 328 : index
    %625 = memref.load %arg2[%c328] : memref<360xf32, #tpu.memory_space<smem>>
    %626 = vector.broadcast %625 : f32 to vector<8x16xf32>
    %627 = arith.mulf %626, %624 : vector<8x16xf32>
    %628 = arith.addf %592, %627 : vector<8x16xf32>
    %c329 = arith.constant 329 : index
    %629 = memref.load %arg2[%c329] : memref<360xf32, #tpu.memory_space<smem>>
    %630 = vector.broadcast %629 : f32 to vector<8x16xf32>
    %631 = arith.mulf %630, %624 : vector<8x16xf32>
    %632 = arith.addf %596, %631 : vector<8x16xf32>
    %c330 = arith.constant 330 : index
    %633 = memref.load %arg2[%c330] : memref<360xf32, #tpu.memory_space<smem>>
    %634 = vector.broadcast %633 : f32 to vector<8x16xf32>
    %635 = arith.mulf %634, %624 : vector<8x16xf32>
    %636 = arith.addf %600, %635 : vector<8x16xf32>
    %c331 = arith.constant 331 : index
    %637 = memref.load %arg2[%c331] : memref<360xf32, #tpu.memory_space<smem>>
    %638 = vector.broadcast %637 : f32 to vector<8x16xf32>
    %639 = arith.mulf %638, %624 : vector<8x16xf32>
    %640 = arith.addf %604, %639 : vector<8x16xf32>
    %c332 = arith.constant 332 : index
    %641 = memref.load %arg2[%c332] : memref<360xf32, #tpu.memory_space<smem>>
    %642 = vector.broadcast %641 : f32 to vector<8x16xf32>
    %643 = arith.mulf %642, %624 : vector<8x16xf32>
    %644 = arith.addf %608, %643 : vector<8x16xf32>
    %c333 = arith.constant 333 : index
    %645 = memref.load %arg2[%c333] : memref<360xf32, #tpu.memory_space<smem>>
    %646 = vector.broadcast %645 : f32 to vector<8x16xf32>
    %647 = arith.mulf %646, %624 : vector<8x16xf32>
    %648 = arith.addf %612, %647 : vector<8x16xf32>
    %c334 = arith.constant 334 : index
    %649 = memref.load %arg2[%c334] : memref<360xf32, #tpu.memory_space<smem>>
    %650 = vector.broadcast %649 : f32 to vector<8x16xf32>
    %651 = arith.mulf %650, %624 : vector<8x16xf32>
    %652 = arith.addf %616, %651 : vector<8x16xf32>
    %c335 = arith.constant 335 : index
    %653 = memref.load %arg2[%c335] : memref<360xf32, #tpu.memory_space<smem>>
    %654 = vector.broadcast %653 : f32 to vector<8x16xf32>
    %655 = arith.mulf %654, %624 : vector<8x16xf32>
    %656 = arith.addf %620, %655 : vector<8x16xf32>
    %c0_i32_76 = arith.constant 0 : i32
    %657 = arith.addi %0, %c0_i32_76 : i32
    %c0_77 = arith.constant 0 : index
    %c2_78 = arith.constant 2 : index
    %658 = arith.index_cast %657 : i32 to index
    %c0_79 = arith.constant 0 : index
    %659 = vector.load %arg3[%c0_77, %c2_78, %658, %c0_79] : memref<1x5x18x18xf32, #tpu.memory_space<vmem>>, vector<1x1x8x16xf32>
    %660 = vector.shape_cast %659 : vector<1x1x8x16xf32> to vector<8x16xf32>
    %c16 = arith.constant 16 : index
    %661 = memref.load %arg2[%c16] : memref<360xf32, #tpu.memory_space<smem>>
    %662 = vector.broadcast %661 : f32 to vector<8x16xf32>
    %663 = arith.mulf %662, %660 : vector<8x16xf32>
    %664 = arith.addf %628, %663 : vector<8x16xf32>
    %c17 = arith.constant 17 : index
    %665 = memref.load %arg2[%c17] : memref<360xf32, #tpu.memory_space<smem>>
    %666 = vector.broadcast %665 : f32 to vector<8x16xf32>
    %667 = arith.mulf %666, %660 : vector<8x16xf32>
    %668 = arith.addf %632, %667 : vector<8x16xf32>
    %c18 = arith.constant 18 : index
    %669 = memref.load %arg2[%c18] : memref<360xf32, #tpu.memory_space<smem>>
    %670 = vector.broadcast %669 : f32 to vector<8x16xf32>
    %671 = arith.mulf %670, %660 : vector<8x16xf32>
    %672 = arith.addf %636, %671 : vector<8x16xf32>
    %c19 = arith.constant 19 : index
    %673 = memref.load %arg2[%c19] : memref<360xf32, #tpu.memory_space<smem>>
    %674 = vector.broadcast %673 : f32 to vector<8x16xf32>
    %675 = arith.mulf %674, %660 : vector<8x16xf32>
    %676 = arith.addf %640, %675 : vector<8x16xf32>
    %c20 = arith.constant 20 : index
    %677 = memref.load %arg2[%c20] : memref<360xf32, #tpu.memory_space<smem>>
    %678 = vector.broadcast %677 : f32 to vector<8x16xf32>
    %679 = arith.mulf %678, %660 : vector<8x16xf32>
    %680 = arith.addf %644, %679 : vector<8x16xf32>
    %c21 = arith.constant 21 : index
    %681 = memref.load %arg2[%c21] : memref<360xf32, #tpu.memory_space<smem>>
    %682 = vector.broadcast %681 : f32 to vector<8x16xf32>
    %683 = arith.mulf %682, %660 : vector<8x16xf32>
    %684 = arith.addf %648, %683 : vector<8x16xf32>
    %c22 = arith.constant 22 : index
    %685 = memref.load %arg2[%c22] : memref<360xf32, #tpu.memory_space<smem>>
    %686 = vector.broadcast %685 : f32 to vector<8x16xf32>
    %687 = arith.mulf %686, %660 : vector<8x16xf32>
    %688 = arith.addf %652, %687 : vector<8x16xf32>
    %c23 = arith.constant 23 : index
    %689 = memref.load %arg2[%c23] : memref<360xf32, #tpu.memory_space<smem>>
    %690 = vector.broadcast %689 : f32 to vector<8x16xf32>
    %691 = arith.mulf %690, %660 : vector<8x16xf32>
    %692 = arith.addf %656, %691 : vector<8x16xf32>
    %c0_i32_80 = arith.constant 0 : i32
    %693 = arith.addi %0, %c0_i32_80 : i32
    %c0_81 = arith.constant 0 : index
    %c2_82 = arith.constant 2 : index
    %694 = arith.index_cast %693 : i32 to index
    %c1_83 = arith.constant 1 : index
    %695 = vector.load %arg3[%c0_81, %c2_82, %694, %c1_83] : memref<1x5x18x18xf32, #tpu.memory_space<vmem>>, vector<1x1x8x16xf32>
    %696 = vector.shape_cast %695 : vector<1x1x8x16xf32> to vector<8x16xf32>
    %c56 = arith.constant 56 : index
    %697 = memref.load %arg2[%c56] : memref<360xf32, #tpu.memory_space<smem>>
    %698 = vector.broadcast %697 : f32 to vector<8x16xf32>
    %699 = arith.mulf %698, %696 : vector<8x16xf32>
    %700 = arith.addf %664, %699 : vector<8x16xf32>
    %c57 = arith.constant 57 : index
    %701 = memref.load %arg2[%c57] : memref<360xf32, #tpu.memory_space<smem>>
    %702 = vector.broadcast %701 : f32 to vector<8x16xf32>
    %703 = arith.mulf %702, %696 : vector<8x16xf32>
    %704 = arith.addf %668, %703 : vector<8x16xf32>
    %c58 = arith.constant 58 : index
    %705 = memref.load %arg2[%c58] : memref<360xf32, #tpu.memory_space<smem>>
    %706 = vector.broadcast %705 : f32 to vector<8x16xf32>
    %707 = arith.mulf %706, %696 : vector<8x16xf32>
    %708 = arith.addf %672, %707 : vector<8x16xf32>
    %c59 = arith.constant 59 : index
    %709 = memref.load %arg2[%c59] : memref<360xf32, #tpu.memory_space<smem>>
    %710 = vector.broadcast %709 : f32 to vector<8x16xf32>
    %711 = arith.mulf %710, %696 : vector<8x16xf32>
    %712 = arith.addf %676, %711 : vector<8x16xf32>
    %c60 = arith.constant 60 : index
    %713 = memref.load %arg2[%c60] : memref<360xf32, #tpu.memory_space<smem>>
    %714 = vector.broadcast %713 : f32 to vector<8x16xf32>
    %715 = arith.mulf %714, %696 : vector<8x16xf32>
    %716 = arith.addf %680, %715 : vector<8x16xf32>
    %c61 = arith.constant 61 : index
    %717 = memref.load %arg2[%c61] : memref<360xf32, #tpu.memory_space<smem>>
    %718 = vector.broadcast %717 : f32 to vector<8x16xf32>
    %719 = arith.mulf %718, %696 : vector<8x16xf32>
    %720 = arith.addf %684, %719 : vector<8x16xf32>
    %c62 = arith.constant 62 : index
    %721 = memref.load %arg2[%c62] : memref<360xf32, #tpu.memory_space<smem>>
    %722 = vector.broadcast %721 : f32 to vector<8x16xf32>
    %723 = arith.mulf %722, %696 : vector<8x16xf32>
    %724 = arith.addf %688, %723 : vector<8x16xf32>
    %c63 = arith.constant 63 : index
    %725 = memref.load %arg2[%c63] : memref<360xf32, #tpu.memory_space<smem>>
    %726 = vector.broadcast %725 : f32 to vector<8x16xf32>
    %727 = arith.mulf %726, %696 : vector<8x16xf32>
    %728 = arith.addf %692, %727 : vector<8x16xf32>
    %c0_i32_84 = arith.constant 0 : i32
    %729 = arith.addi %0, %c0_i32_84 : i32
    %c0_85 = arith.constant 0 : index
    %c2_86 = arith.constant 2 : index
    %730 = arith.index_cast %729 : i32 to index
    %c2_87 = arith.constant 2 : index
    %731 = vector.load %arg3[%c0_85, %c2_86, %730, %c2_87] : memref<1x5x18x18xf32, #tpu.memory_space<vmem>>, vector<1x1x8x16xf32>
    %732 = vector.shape_cast %731 : vector<1x1x8x16xf32> to vector<8x16xf32>
    %c96 = arith.constant 96 : index
    %733 = memref.load %arg2[%c96] : memref<360xf32, #tpu.memory_space<smem>>
    %734 = vector.broadcast %733 : f32 to vector<8x16xf32>
    %735 = arith.mulf %734, %732 : vector<8x16xf32>
    %736 = arith.addf %700, %735 : vector<8x16xf32>
    %c97 = arith.constant 97 : index
    %737 = memref.load %arg2[%c97] : memref<360xf32, #tpu.memory_space<smem>>
    %738 = vector.broadcast %737 : f32 to vector<8x16xf32>
    %739 = arith.mulf %738, %732 : vector<8x16xf32>
    %740 = arith.addf %704, %739 : vector<8x16xf32>
    %c98 = arith.constant 98 : index
    %741 = memref.load %arg2[%c98] : memref<360xf32, #tpu.memory_space<smem>>
    %742 = vector.broadcast %741 : f32 to vector<8x16xf32>
    %743 = arith.mulf %742, %732 : vector<8x16xf32>
    %744 = arith.addf %708, %743 : vector<8x16xf32>
    %c99 = arith.constant 99 : index
    %745 = memref.load %arg2[%c99] : memref<360xf32, #tpu.memory_space<smem>>
    %746 = vector.broadcast %745 : f32 to vector<8x16xf32>
    %747 = arith.mulf %746, %732 : vector<8x16xf32>
    %748 = arith.addf %712, %747 : vector<8x16xf32>
    %c100 = arith.constant 100 : index
    %749 = memref.load %arg2[%c100] : memref<360xf32, #tpu.memory_space<smem>>
    %750 = vector.broadcast %749 : f32 to vector<8x16xf32>
    %751 = arith.mulf %750, %732 : vector<8x16xf32>
    %752 = arith.addf %716, %751 : vector<8x16xf32>
    %c101 = arith.constant 101 : index
    %753 = memref.load %arg2[%c101] : memref<360xf32, #tpu.memory_space<smem>>
    %754 = vector.broadcast %753 : f32 to vector<8x16xf32>
    %755 = arith.mulf %754, %732 : vector<8x16xf32>
    %756 = arith.addf %720, %755 : vector<8x16xf32>
    %c102 = arith.constant 102 : index
    %757 = memref.load %arg2[%c102] : memref<360xf32, #tpu.memory_space<smem>>
    %758 = vector.broadcast %757 : f32 to vector<8x16xf32>
    %759 = arith.mulf %758, %732 : vector<8x16xf32>
    %760 = arith.addf %724, %759 : vector<8x16xf32>
    %c103 = arith.constant 103 : index
    %761 = memref.load %arg2[%c103] : memref<360xf32, #tpu.memory_space<smem>>
    %762 = vector.broadcast %761 : f32 to vector<8x16xf32>
    %763 = arith.mulf %762, %732 : vector<8x16xf32>
    %764 = arith.addf %728, %763 : vector<8x16xf32>
    %c1_i32_88 = arith.constant 1 : i32
    %765 = arith.addi %0, %c1_i32_88 : i32
    %c0_89 = arith.constant 0 : index
    %c2_90 = arith.constant 2 : index
    %766 = arith.index_cast %765 : i32 to index
    %c0_91 = arith.constant 0 : index
    %767 = vector.load %arg3[%c0_89, %c2_90, %766, %c0_91] : memref<1x5x18x18xf32, #tpu.memory_space<vmem>>, vector<1x1x8x16xf32>
    %768 = vector.shape_cast %767 : vector<1x1x8x16xf32> to vector<8x16xf32>
    %c136 = arith.constant 136 : index
    %769 = memref.load %arg2[%c136] : memref<360xf32, #tpu.memory_space<smem>>
    %770 = vector.broadcast %769 : f32 to vector<8x16xf32>
    %771 = arith.mulf %770, %768 : vector<8x16xf32>
    %772 = arith.addf %736, %771 : vector<8x16xf32>
    %c137 = arith.constant 137 : index
    %773 = memref.load %arg2[%c137] : memref<360xf32, #tpu.memory_space<smem>>
    %774 = vector.broadcast %773 : f32 to vector<8x16xf32>
    %775 = arith.mulf %774, %768 : vector<8x16xf32>
    %776 = arith.addf %740, %775 : vector<8x16xf32>
    %c138 = arith.constant 138 : index
    %777 = memref.load %arg2[%c138] : memref<360xf32, #tpu.memory_space<smem>>
    %778 = vector.broadcast %777 : f32 to vector<8x16xf32>
    %779 = arith.mulf %778, %768 : vector<8x16xf32>
    %780 = arith.addf %744, %779 : vector<8x16xf32>
    %c139 = arith.constant 139 : index
    %781 = memref.load %arg2[%c139] : memref<360xf32, #tpu.memory_space<smem>>
    %782 = vector.broadcast %781 : f32 to vector<8x16xf32>
    %783 = arith.mulf %782, %768 : vector<8x16xf32>
    %784 = arith.addf %748, %783 : vector<8x16xf32>
    %c140 = arith.constant 140 : index
    %785 = memref.load %arg2[%c140] : memref<360xf32, #tpu.memory_space<smem>>
    %786 = vector.broadcast %785 : f32 to vector<8x16xf32>
    %787 = arith.mulf %786, %768 : vector<8x16xf32>
    %788 = arith.addf %752, %787 : vector<8x16xf32>
    %c141 = arith.constant 141 : index
    %789 = memref.load %arg2[%c141] : memref<360xf32, #tpu.memory_space<smem>>
    %790 = vector.broadcast %789 : f32 to vector<8x16xf32>
    %791 = arith.mulf %790, %768 : vector<8x16xf32>
    %792 = arith.addf %756, %791 : vector<8x16xf32>
    %c142 = arith.constant 142 : index
    %793 = memref.load %arg2[%c142] : memref<360xf32, #tpu.memory_space<smem>>
    %794 = vector.broadcast %793 : f32 to vector<8x16xf32>
    %795 = arith.mulf %794, %768 : vector<8x16xf32>
    %796 = arith.addf %760, %795 : vector<8x16xf32>
    %c143 = arith.constant 143 : index
    %797 = memref.load %arg2[%c143] : memref<360xf32, #tpu.memory_space<smem>>
    %798 = vector.broadcast %797 : f32 to vector<8x16xf32>
    %799 = arith.mulf %798, %768 : vector<8x16xf32>
    %800 = arith.addf %764, %799 : vector<8x16xf32>
    %c1_i32_92 = arith.constant 1 : i32
    %801 = arith.addi %0, %c1_i32_92 : i32
    %c0_93 = arith.constant 0 : index
    %c2_94 = arith.constant 2 : index
    %802 = arith.index_cast %801 : i32 to index
    %c1_95 = arith.constant 1 : index
    %803 = vector.load %arg3[%c0_93, %c2_94, %802, %c1_95] : memref<1x5x18x18xf32, #tpu.memory_space<vmem>>, vector<1x1x8x16xf32>
    %804 = vector.shape_cast %803 : vector<1x1x8x16xf32> to vector<8x16xf32>
    %c176 = arith.constant 176 : index
    %805 = memref.load %arg2[%c176] : memref<360xf32, #tpu.memory_space<smem>>
    %806 = vector.broadcast %805 : f32 to vector<8x16xf32>
    %807 = arith.mulf %806, %804 : vector<8x16xf32>
    %808 = arith.addf %772, %807 : vector<8x16xf32>
    %c177 = arith.constant 177 : index
    %809 = memref.load %arg2[%c177] : memref<360xf32, #tpu.memory_space<smem>>
    %810 = vector.broadcast %809 : f32 to vector<8x16xf32>
    %811 = arith.mulf %810, %804 : vector<8x16xf32>
    %812 = arith.addf %776, %811 : vector<8x16xf32>
    %c178 = arith.constant 178 : index
    %813 = memref.load %arg2[%c178] : memref<360xf32, #tpu.memory_space<smem>>
    %814 = vector.broadcast %813 : f32 to vector<8x16xf32>
    %815 = arith.mulf %814, %804 : vector<8x16xf32>
    %816 = arith.addf %780, %815 : vector<8x16xf32>
    %c179 = arith.constant 179 : index
    %817 = memref.load %arg2[%c179] : memref<360xf32, #tpu.memory_space<smem>>
    %818 = vector.broadcast %817 : f32 to vector<8x16xf32>
    %819 = arith.mulf %818, %804 : vector<8x16xf32>
    %820 = arith.addf %784, %819 : vector<8x16xf32>
    %c180 = arith.constant 180 : index
    %821 = memref.load %arg2[%c180] : memref<360xf32, #tpu.memory_space<smem>>
    %822 = vector.broadcast %821 : f32 to vector<8x16xf32>
    %823 = arith.mulf %822, %804 : vector<8x16xf32>
    %824 = arith.addf %788, %823 : vector<8x16xf32>
    %c181 = arith.constant 181 : index
    %825 = memref.load %arg2[%c181] : memref<360xf32, #tpu.memory_space<smem>>
    %826 = vector.broadcast %825 : f32 to vector<8x16xf32>
    %827 = arith.mulf %826, %804 : vector<8x16xf32>
    %828 = arith.addf %792, %827 : vector<8x16xf32>
    %c182 = arith.constant 182 : index
    %829 = memref.load %arg2[%c182] : memref<360xf32, #tpu.memory_space<smem>>
    %830 = vector.broadcast %829 : f32 to vector<8x16xf32>
    %831 = arith.mulf %830, %804 : vector<8x16xf32>
    %832 = arith.addf %796, %831 : vector<8x16xf32>
    %c183 = arith.constant 183 : index
    %833 = memref.load %arg2[%c183] : memref<360xf32, #tpu.memory_space<smem>>
    %834 = vector.broadcast %833 : f32 to vector<8x16xf32>
    %835 = arith.mulf %834, %804 : vector<8x16xf32>
    %836 = arith.addf %800, %835 : vector<8x16xf32>
    %c1_i32_96 = arith.constant 1 : i32
    %837 = arith.addi %0, %c1_i32_96 : i32
    %c0_97 = arith.constant 0 : index
    %c2_98 = arith.constant 2 : index
    %838 = arith.index_cast %837 : i32 to index
    %c2_99 = arith.constant 2 : index
    %839 = vector.load %arg3[%c0_97, %c2_98, %838, %c2_99] : memref<1x5x18x18xf32, #tpu.memory_space<vmem>>, vector<1x1x8x16xf32>
    %840 = vector.shape_cast %839 : vector<1x1x8x16xf32> to vector<8x16xf32>
    %c216 = arith.constant 216 : index
    %841 = memref.load %arg2[%c216] : memref<360xf32, #tpu.memory_space<smem>>
    %842 = vector.broadcast %841 : f32 to vector<8x16xf32>
    %843 = arith.mulf %842, %840 : vector<8x16xf32>
    %844 = arith.addf %808, %843 : vector<8x16xf32>
    %c217 = arith.constant 217 : index
    %845 = memref.load %arg2[%c217] : memref<360xf32, #tpu.memory_space<smem>>
    %846 = vector.broadcast %845 : f32 to vector<8x16xf32>
    %847 = arith.mulf %846, %840 : vector<8x16xf32>
    %848 = arith.addf %812, %847 : vector<8x16xf32>
    %c218 = arith.constant 218 : index
    %849 = memref.load %arg2[%c218] : memref<360xf32, #tpu.memory_space<smem>>
    %850 = vector.broadcast %849 : f32 to vector<8x16xf32>
    %851 = arith.mulf %850, %840 : vector<8x16xf32>
    %852 = arith.addf %816, %851 : vector<8x16xf32>
    %c219 = arith.constant 219 : index
    %853 = memref.load %arg2[%c219] : memref<360xf32, #tpu.memory_space<smem>>
    %854 = vector.broadcast %853 : f32 to vector<8x16xf32>
    %855 = arith.mulf %854, %840 : vector<8x16xf32>
    %856 = arith.addf %820, %855 : vector<8x16xf32>
    %c220 = arith.constant 220 : index
    %857 = memref.load %arg2[%c220] : memref<360xf32, #tpu.memory_space<smem>>
    %858 = vector.broadcast %857 : f32 to vector<8x16xf32>
    %859 = arith.mulf %858, %840 : vector<8x16xf32>
    %860 = arith.addf %824, %859 : vector<8x16xf32>
    %c221 = arith.constant 221 : index
    %861 = memref.load %arg2[%c221] : memref<360xf32, #tpu.memory_space<smem>>
    %862 = vector.broadcast %861 : f32 to vector<8x16xf32>
    %863 = arith.mulf %862, %840 : vector<8x16xf32>
    %864 = arith.addf %828, %863 : vector<8x16xf32>
    %c222 = arith.constant 222 : index
    %865 = memref.load %arg2[%c222] : memref<360xf32, #tpu.memory_space<smem>>
    %866 = vector.broadcast %865 : f32 to vector<8x16xf32>
    %867 = arith.mulf %866, %840 : vector<8x16xf32>
    %868 = arith.addf %832, %867 : vector<8x16xf32>
    %c223 = arith.constant 223 : index
    %869 = memref.load %arg2[%c223] : memref<360xf32, #tpu.memory_space<smem>>
    %870 = vector.broadcast %869 : f32 to vector<8x16xf32>
    %871 = arith.mulf %870, %840 : vector<8x16xf32>
    %872 = arith.addf %836, %871 : vector<8x16xf32>
    %c2_i32_100 = arith.constant 2 : i32
    %873 = arith.addi %0, %c2_i32_100 : i32
    %c0_101 = arith.constant 0 : index
    %c2_102 = arith.constant 2 : index
    %874 = arith.index_cast %873 : i32 to index
    %c0_103 = arith.constant 0 : index
    %875 = vector.load %arg3[%c0_101, %c2_102, %874, %c0_103] : memref<1x5x18x18xf32, #tpu.memory_space<vmem>>, vector<1x1x8x16xf32>
    %876 = vector.shape_cast %875 : vector<1x1x8x16xf32> to vector<8x16xf32>
    %c256 = arith.constant 256 : index
    %877 = memref.load %arg2[%c256] : memref<360xf32, #tpu.memory_space<smem>>
    %878 = vector.broadcast %877 : f32 to vector<8x16xf32>
    %879 = arith.mulf %878, %876 : vector<8x16xf32>
    %880 = arith.addf %844, %879 : vector<8x16xf32>
    %c257 = arith.constant 257 : index
    %881 = memref.load %arg2[%c257] : memref<360xf32, #tpu.memory_space<smem>>
    %882 = vector.broadcast %881 : f32 to vector<8x16xf32>
    %883 = arith.mulf %882, %876 : vector<8x16xf32>
    %884 = arith.addf %848, %883 : vector<8x16xf32>
    %c258 = arith.constant 258 : index
    %885 = memref.load %arg2[%c258] : memref<360xf32, #tpu.memory_space<smem>>
    %886 = vector.broadcast %885 : f32 to vector<8x16xf32>
    %887 = arith.mulf %886, %876 : vector<8x16xf32>
    %888 = arith.addf %852, %887 : vector<8x16xf32>
    %c259 = arith.constant 259 : index
    %889 = memref.load %arg2[%c259] : memref<360xf32, #tpu.memory_space<smem>>
    %890 = vector.broadcast %889 : f32 to vector<8x16xf32>
    %891 = arith.mulf %890, %876 : vector<8x16xf32>
    %892 = arith.addf %856, %891 : vector<8x16xf32>
    %c260 = arith.constant 260 : index
    %893 = memref.load %arg2[%c260] : memref<360xf32, #tpu.memory_space<smem>>
    %894 = vector.broadcast %893 : f32 to vector<8x16xf32>
    %895 = arith.mulf %894, %876 : vector<8x16xf32>
    %896 = arith.addf %860, %895 : vector<8x16xf32>
    %c261 = arith.constant 261 : index
    %897 = memref.load %arg2[%c261] : memref<360xf32, #tpu.memory_space<smem>>
    %898 = vector.broadcast %897 : f32 to vector<8x16xf32>
    %899 = arith.mulf %898, %876 : vector<8x16xf32>
    %900 = arith.addf %864, %899 : vector<8x16xf32>
    %c262 = arith.constant 262 : index
    %901 = memref.load %arg2[%c262] : memref<360xf32, #tpu.memory_space<smem>>
    %902 = vector.broadcast %901 : f32 to vector<8x16xf32>
    %903 = arith.mulf %902, %876 : vector<8x16xf32>
    %904 = arith.addf %868, %903 : vector<8x16xf32>
    %c263 = arith.constant 263 : index
    %905 = memref.load %arg2[%c263] : memref<360xf32, #tpu.memory_space<smem>>
    %906 = vector.broadcast %905 : f32 to vector<8x16xf32>
    %907 = arith.mulf %906, %876 : vector<8x16xf32>
    %908 = arith.addf %872, %907 : vector<8x16xf32>
    %c2_i32_104 = arith.constant 2 : i32
    %909 = arith.addi %0, %c2_i32_104 : i32
    %c0_105 = arith.constant 0 : index
    %c2_106 = arith.constant 2 : index
    %910 = arith.index_cast %909 : i32 to index
    %c1_107 = arith.constant 1 : index
    %911 = vector.load %arg3[%c0_105, %c2_106, %910, %c1_107] : memref<1x5x18x18xf32, #tpu.memory_space<vmem>>, vector<1x1x8x16xf32>
    %912 = vector.shape_cast %911 : vector<1x1x8x16xf32> to vector<8x16xf32>
    %c296 = arith.constant 296 : index
    %913 = memref.load %arg2[%c296] : memref<360xf32, #tpu.memory_space<smem>>
    %914 = vector.broadcast %913 : f32 to vector<8x16xf32>
    %915 = arith.mulf %914, %912 : vector<8x16xf32>
    %916 = arith.addf %880, %915 : vector<8x16xf32>
    %c297 = arith.constant 297 : index
    %917 = memref.load %arg2[%c297] : memref<360xf32, #tpu.memory_space<smem>>
    %918 = vector.broadcast %917 : f32 to vector<8x16xf32>
    %919 = arith.mulf %918, %912 : vector<8x16xf32>
    %920 = arith.addf %884, %919 : vector<8x16xf32>
    %c298 = arith.constant 298 : index
    %921 = memref.load %arg2[%c298] : memref<360xf32, #tpu.memory_space<smem>>
    %922 = vector.broadcast %921 : f32 to vector<8x16xf32>
    %923 = arith.mulf %922, %912 : vector<8x16xf32>
    %924 = arith.addf %888, %923 : vector<8x16xf32>
    %c299 = arith.constant 299 : index
    %925 = memref.load %arg2[%c299] : memref<360xf32, #tpu.memory_space<smem>>
    %926 = vector.broadcast %925 : f32 to vector<8x16xf32>
    %927 = arith.mulf %926, %912 : vector<8x16xf32>
    %928 = arith.addf %892, %927 : vector<8x16xf32>
    %c300 = arith.constant 300 : index
    %929 = memref.load %arg2[%c300] : memref<360xf32, #tpu.memory_space<smem>>
    %930 = vector.broadcast %929 : f32 to vector<8x16xf32>
    %931 = arith.mulf %930, %912 : vector<8x16xf32>
    %932 = arith.addf %896, %931 : vector<8x16xf32>
    %c301 = arith.constant 301 : index
    %933 = memref.load %arg2[%c301] : memref<360xf32, #tpu.memory_space<smem>>
    %934 = vector.broadcast %933 : f32 to vector<8x16xf32>
    %935 = arith.mulf %934, %912 : vector<8x16xf32>
    %936 = arith.addf %900, %935 : vector<8x16xf32>
    %c302 = arith.constant 302 : index
    %937 = memref.load %arg2[%c302] : memref<360xf32, #tpu.memory_space<smem>>
    %938 = vector.broadcast %937 : f32 to vector<8x16xf32>
    %939 = arith.mulf %938, %912 : vector<8x16xf32>
    %940 = arith.addf %904, %939 : vector<8x16xf32>
    %c303 = arith.constant 303 : index
    %941 = memref.load %arg2[%c303] : memref<360xf32, #tpu.memory_space<smem>>
    %942 = vector.broadcast %941 : f32 to vector<8x16xf32>
    %943 = arith.mulf %942, %912 : vector<8x16xf32>
    %944 = arith.addf %908, %943 : vector<8x16xf32>
    %c2_i32_108 = arith.constant 2 : i32
    %945 = arith.addi %0, %c2_i32_108 : i32
    %c0_109 = arith.constant 0 : index
    %c2_110 = arith.constant 2 : index
    %946 = arith.index_cast %945 : i32 to index
    %c2_111 = arith.constant 2 : index
    %947 = vector.load %arg3[%c0_109, %c2_110, %946, %c2_111] : memref<1x5x18x18xf32, #tpu.memory_space<vmem>>, vector<1x1x8x16xf32>
    %948 = vector.shape_cast %947 : vector<1x1x8x16xf32> to vector<8x16xf32>
    %c336 = arith.constant 336 : index
    %949 = memref.load %arg2[%c336] : memref<360xf32, #tpu.memory_space<smem>>
    %950 = vector.broadcast %949 : f32 to vector<8x16xf32>
    %951 = arith.mulf %950, %948 : vector<8x16xf32>
    %952 = arith.addf %916, %951 : vector<8x16xf32>
    %c337 = arith.constant 337 : index
    %953 = memref.load %arg2[%c337] : memref<360xf32, #tpu.memory_space<smem>>
    %954 = vector.broadcast %953 : f32 to vector<8x16xf32>
    %955 = arith.mulf %954, %948 : vector<8x16xf32>
    %956 = arith.addf %920, %955 : vector<8x16xf32>
    %c338 = arith.constant 338 : index
    %957 = memref.load %arg2[%c338] : memref<360xf32, #tpu.memory_space<smem>>
    %958 = vector.broadcast %957 : f32 to vector<8x16xf32>
    %959 = arith.mulf %958, %948 : vector<8x16xf32>
    %960 = arith.addf %924, %959 : vector<8x16xf32>
    %c339 = arith.constant 339 : index
    %961 = memref.load %arg2[%c339] : memref<360xf32, #tpu.memory_space<smem>>
    %962 = vector.broadcast %961 : f32 to vector<8x16xf32>
    %963 = arith.mulf %962, %948 : vector<8x16xf32>
    %964 = arith.addf %928, %963 : vector<8x16xf32>
    %c340 = arith.constant 340 : index
    %965 = memref.load %arg2[%c340] : memref<360xf32, #tpu.memory_space<smem>>
    %966 = vector.broadcast %965 : f32 to vector<8x16xf32>
    %967 = arith.mulf %966, %948 : vector<8x16xf32>
    %968 = arith.addf %932, %967 : vector<8x16xf32>
    %c341 = arith.constant 341 : index
    %969 = memref.load %arg2[%c341] : memref<360xf32, #tpu.memory_space<smem>>
    %970 = vector.broadcast %969 : f32 to vector<8x16xf32>
    %971 = arith.mulf %970, %948 : vector<8x16xf32>
    %972 = arith.addf %936, %971 : vector<8x16xf32>
    %c342 = arith.constant 342 : index
    %973 = memref.load %arg2[%c342] : memref<360xf32, #tpu.memory_space<smem>>
    %974 = vector.broadcast %973 : f32 to vector<8x16xf32>
    %975 = arith.mulf %974, %948 : vector<8x16xf32>
    %976 = arith.addf %940, %975 : vector<8x16xf32>
    %c343 = arith.constant 343 : index
    %977 = memref.load %arg2[%c343] : memref<360xf32, #tpu.memory_space<smem>>
    %978 = vector.broadcast %977 : f32 to vector<8x16xf32>
    %979 = arith.mulf %978, %948 : vector<8x16xf32>
    %980 = arith.addf %944, %979 : vector<8x16xf32>
    %c0_i32_112 = arith.constant 0 : i32
    %981 = arith.addi %0, %c0_i32_112 : i32
    %c0_113 = arith.constant 0 : index
    %c3_114 = arith.constant 3 : index
    %982 = arith.index_cast %981 : i32 to index
    %c0_115 = arith.constant 0 : index
    %983 = vector.load %arg3[%c0_113, %c3_114, %982, %c0_115] : memref<1x5x18x18xf32, #tpu.memory_space<vmem>>, vector<1x1x8x16xf32>
    %984 = vector.shape_cast %983 : vector<1x1x8x16xf32> to vector<8x16xf32>
    %c24 = arith.constant 24 : index
    %985 = memref.load %arg2[%c24] : memref<360xf32, #tpu.memory_space<smem>>
    %986 = vector.broadcast %985 : f32 to vector<8x16xf32>
    %987 = arith.mulf %986, %984 : vector<8x16xf32>
    %988 = arith.addf %952, %987 : vector<8x16xf32>
    %c25 = arith.constant 25 : index
    %989 = memref.load %arg2[%c25] : memref<360xf32, #tpu.memory_space<smem>>
    %990 = vector.broadcast %989 : f32 to vector<8x16xf32>
    %991 = arith.mulf %990, %984 : vector<8x16xf32>
    %992 = arith.addf %956, %991 : vector<8x16xf32>
    %c26 = arith.constant 26 : index
    %993 = memref.load %arg2[%c26] : memref<360xf32, #tpu.memory_space<smem>>
    %994 = vector.broadcast %993 : f32 to vector<8x16xf32>
    %995 = arith.mulf %994, %984 : vector<8x16xf32>
    %996 = arith.addf %960, %995 : vector<8x16xf32>
    %c27 = arith.constant 27 : index
    %997 = memref.load %arg2[%c27] : memref<360xf32, #tpu.memory_space<smem>>
    %998 = vector.broadcast %997 : f32 to vector<8x16xf32>
    %999 = arith.mulf %998, %984 : vector<8x16xf32>
    %1000 = arith.addf %964, %999 : vector<8x16xf32>
    %c28 = arith.constant 28 : index
    %1001 = memref.load %arg2[%c28] : memref<360xf32, #tpu.memory_space<smem>>
    %1002 = vector.broadcast %1001 : f32 to vector<8x16xf32>
    %1003 = arith.mulf %1002, %984 : vector<8x16xf32>
    %1004 = arith.addf %968, %1003 : vector<8x16xf32>
    %c29 = arith.constant 29 : index
    %1005 = memref.load %arg2[%c29] : memref<360xf32, #tpu.memory_space<smem>>
    %1006 = vector.broadcast %1005 : f32 to vector<8x16xf32>
    %1007 = arith.mulf %1006, %984 : vector<8x16xf32>
    %1008 = arith.addf %972, %1007 : vector<8x16xf32>
    %c30 = arith.constant 30 : index
    %1009 = memref.load %arg2[%c30] : memref<360xf32, #tpu.memory_space<smem>>
    %1010 = vector.broadcast %1009 : f32 to vector<8x16xf32>
    %1011 = arith.mulf %1010, %984 : vector<8x16xf32>
    %1012 = arith.addf %976, %1011 : vector<8x16xf32>
    %c31 = arith.constant 31 : index
    %1013 = memref.load %arg2[%c31] : memref<360xf32, #tpu.memory_space<smem>>
    %1014 = vector.broadcast %1013 : f32 to vector<8x16xf32>
    %1015 = arith.mulf %1014, %984 : vector<8x16xf32>
    %1016 = arith.addf %980, %1015 : vector<8x16xf32>
    %c0_i32_116 = arith.constant 0 : i32
    %1017 = arith.addi %0, %c0_i32_116 : i32
    %c0_117 = arith.constant 0 : index
    %c3_118 = arith.constant 3 : index
    %1018 = arith.index_cast %1017 : i32 to index
    %c1_119 = arith.constant 1 : index
    %1019 = vector.load %arg3[%c0_117, %c3_118, %1018, %c1_119] : memref<1x5x18x18xf32, #tpu.memory_space<vmem>>, vector<1x1x8x16xf32>
    %1020 = vector.shape_cast %1019 : vector<1x1x8x16xf32> to vector<8x16xf32>
    %c64 = arith.constant 64 : index
    %1021 = memref.load %arg2[%c64] : memref<360xf32, #tpu.memory_space<smem>>
    %1022 = vector.broadcast %1021 : f32 to vector<8x16xf32>
    %1023 = arith.mulf %1022, %1020 : vector<8x16xf32>
    %1024 = arith.addf %988, %1023 : vector<8x16xf32>
    %c65 = arith.constant 65 : index
    %1025 = memref.load %arg2[%c65] : memref<360xf32, #tpu.memory_space<smem>>
    %1026 = vector.broadcast %1025 : f32 to vector<8x16xf32>
    %1027 = arith.mulf %1026, %1020 : vector<8x16xf32>
    %1028 = arith.addf %992, %1027 : vector<8x16xf32>
    %c66 = arith.constant 66 : index
    %1029 = memref.load %arg2[%c66] : memref<360xf32, #tpu.memory_space<smem>>
    %1030 = vector.broadcast %1029 : f32 to vector<8x16xf32>
    %1031 = arith.mulf %1030, %1020 : vector<8x16xf32>
    %1032 = arith.addf %996, %1031 : vector<8x16xf32>
    %c67 = arith.constant 67 : index
    %1033 = memref.load %arg2[%c67] : memref<360xf32, #tpu.memory_space<smem>>
    %1034 = vector.broadcast %1033 : f32 to vector<8x16xf32>
    %1035 = arith.mulf %1034, %1020 : vector<8x16xf32>
    %1036 = arith.addf %1000, %1035 : vector<8x16xf32>
    %c68 = arith.constant 68 : index
    %1037 = memref.load %arg2[%c68] : memref<360xf32, #tpu.memory_space<smem>>
    %1038 = vector.broadcast %1037 : f32 to vector<8x16xf32>
    %1039 = arith.mulf %1038, %1020 : vector<8x16xf32>
    %1040 = arith.addf %1004, %1039 : vector<8x16xf32>
    %c69 = arith.constant 69 : index
    %1041 = memref.load %arg2[%c69] : memref<360xf32, #tpu.memory_space<smem>>
    %1042 = vector.broadcast %1041 : f32 to vector<8x16xf32>
    %1043 = arith.mulf %1042, %1020 : vector<8x16xf32>
    %1044 = arith.addf %1008, %1043 : vector<8x16xf32>
    %c70 = arith.constant 70 : index
    %1045 = memref.load %arg2[%c70] : memref<360xf32, #tpu.memory_space<smem>>
    %1046 = vector.broadcast %1045 : f32 to vector<8x16xf32>
    %1047 = arith.mulf %1046, %1020 : vector<8x16xf32>
    %1048 = arith.addf %1012, %1047 : vector<8x16xf32>
    %c71 = arith.constant 71 : index
    %1049 = memref.load %arg2[%c71] : memref<360xf32, #tpu.memory_space<smem>>
    %1050 = vector.broadcast %1049 : f32 to vector<8x16xf32>
    %1051 = arith.mulf %1050, %1020 : vector<8x16xf32>
    %1052 = arith.addf %1016, %1051 : vector<8x16xf32>
    %c0_i32_120 = arith.constant 0 : i32
    %1053 = arith.addi %0, %c0_i32_120 : i32
    %c0_121 = arith.constant 0 : index
    %c3_122 = arith.constant 3 : index
    %1054 = arith.index_cast %1053 : i32 to index
    %c2_123 = arith.constant 2 : index
    %1055 = vector.load %arg3[%c0_121, %c3_122, %1054, %c2_123] : memref<1x5x18x18xf32, #tpu.memory_space<vmem>>, vector<1x1x8x16xf32>
    %1056 = vector.shape_cast %1055 : vector<1x1x8x16xf32> to vector<8x16xf32>
    %c104 = arith.constant 104 : index
    %1057 = memref.load %arg2[%c104] : memref<360xf32, #tpu.memory_space<smem>>
    %1058 = vector.broadcast %1057 : f32 to vector<8x16xf32>
    %1059 = arith.mulf %1058, %1056 : vector<8x16xf32>
    %1060 = arith.addf %1024, %1059 : vector<8x16xf32>
    %c105 = arith.constant 105 : index
    %1061 = memref.load %arg2[%c105] : memref<360xf32, #tpu.memory_space<smem>>
    %1062 = vector.broadcast %1061 : f32 to vector<8x16xf32>
    %1063 = arith.mulf %1062, %1056 : vector<8x16xf32>
    %1064 = arith.addf %1028, %1063 : vector<8x16xf32>
    %c106 = arith.constant 106 : index
    %1065 = memref.load %arg2[%c106] : memref<360xf32, #tpu.memory_space<smem>>
    %1066 = vector.broadcast %1065 : f32 to vector<8x16xf32>
    %1067 = arith.mulf %1066, %1056 : vector<8x16xf32>
    %1068 = arith.addf %1032, %1067 : vector<8x16xf32>
    %c107 = arith.constant 107 : index
    %1069 = memref.load %arg2[%c107] : memref<360xf32, #tpu.memory_space<smem>>
    %1070 = vector.broadcast %1069 : f32 to vector<8x16xf32>
    %1071 = arith.mulf %1070, %1056 : vector<8x16xf32>
    %1072 = arith.addf %1036, %1071 : vector<8x16xf32>
    %c108 = arith.constant 108 : index
    %1073 = memref.load %arg2[%c108] : memref<360xf32, #tpu.memory_space<smem>>
    %1074 = vector.broadcast %1073 : f32 to vector<8x16xf32>
    %1075 = arith.mulf %1074, %1056 : vector<8x16xf32>
    %1076 = arith.addf %1040, %1075 : vector<8x16xf32>
    %c109 = arith.constant 109 : index
    %1077 = memref.load %arg2[%c109] : memref<360xf32, #tpu.memory_space<smem>>
    %1078 = vector.broadcast %1077 : f32 to vector<8x16xf32>
    %1079 = arith.mulf %1078, %1056 : vector<8x16xf32>
    %1080 = arith.addf %1044, %1079 : vector<8x16xf32>
    %c110 = arith.constant 110 : index
    %1081 = memref.load %arg2[%c110] : memref<360xf32, #tpu.memory_space<smem>>
    %1082 = vector.broadcast %1081 : f32 to vector<8x16xf32>
    %1083 = arith.mulf %1082, %1056 : vector<8x16xf32>
    %1084 = arith.addf %1048, %1083 : vector<8x16xf32>
    %c111 = arith.constant 111 : index
    %1085 = memref.load %arg2[%c111] : memref<360xf32, #tpu.memory_space<smem>>
    %1086 = vector.broadcast %1085 : f32 to vector<8x16xf32>
    %1087 = arith.mulf %1086, %1056 : vector<8x16xf32>
    %1088 = arith.addf %1052, %1087 : vector<8x16xf32>
    %c1_i32_124 = arith.constant 1 : i32
    %1089 = arith.addi %0, %c1_i32_124 : i32
    %c0_125 = arith.constant 0 : index
    %c3_126 = arith.constant 3 : index
    %1090 = arith.index_cast %1089 : i32 to index
    %c0_127 = arith.constant 0 : index
    %1091 = vector.load %arg3[%c0_125, %c3_126, %1090, %c0_127] : memref<1x5x18x18xf32, #tpu.memory_space<vmem>>, vector<1x1x8x16xf32>
    %1092 = vector.shape_cast %1091 : vector<1x1x8x16xf32> to vector<8x16xf32>
    %c144 = arith.constant 144 : index
    %1093 = memref.load %arg2[%c144] : memref<360xf32, #tpu.memory_space<smem>>
    %1094 = vector.broadcast %1093 : f32 to vector<8x16xf32>
    %1095 = arith.mulf %1094, %1092 : vector<8x16xf32>
    %1096 = arith.addf %1060, %1095 : vector<8x16xf32>
    %c145 = arith.constant 145 : index
    %1097 = memref.load %arg2[%c145] : memref<360xf32, #tpu.memory_space<smem>>
    %1098 = vector.broadcast %1097 : f32 to vector<8x16xf32>
    %1099 = arith.mulf %1098, %1092 : vector<8x16xf32>
    %1100 = arith.addf %1064, %1099 : vector<8x16xf32>
    %c146 = arith.constant 146 : index
    %1101 = memref.load %arg2[%c146] : memref<360xf32, #tpu.memory_space<smem>>
    %1102 = vector.broadcast %1101 : f32 to vector<8x16xf32>
    %1103 = arith.mulf %1102, %1092 : vector<8x16xf32>
    %1104 = arith.addf %1068, %1103 : vector<8x16xf32>
    %c147 = arith.constant 147 : index
    %1105 = memref.load %arg2[%c147] : memref<360xf32, #tpu.memory_space<smem>>
    %1106 = vector.broadcast %1105 : f32 to vector<8x16xf32>
    %1107 = arith.mulf %1106, %1092 : vector<8x16xf32>
    %1108 = arith.addf %1072, %1107 : vector<8x16xf32>
    %c148 = arith.constant 148 : index
    %1109 = memref.load %arg2[%c148] : memref<360xf32, #tpu.memory_space<smem>>
    %1110 = vector.broadcast %1109 : f32 to vector<8x16xf32>
    %1111 = arith.mulf %1110, %1092 : vector<8x16xf32>
    %1112 = arith.addf %1076, %1111 : vector<8x16xf32>
    %c149 = arith.constant 149 : index
    %1113 = memref.load %arg2[%c149] : memref<360xf32, #tpu.memory_space<smem>>
    %1114 = vector.broadcast %1113 : f32 to vector<8x16xf32>
    %1115 = arith.mulf %1114, %1092 : vector<8x16xf32>
    %1116 = arith.addf %1080, %1115 : vector<8x16xf32>
    %c150 = arith.constant 150 : index
    %1117 = memref.load %arg2[%c150] : memref<360xf32, #tpu.memory_space<smem>>
    %1118 = vector.broadcast %1117 : f32 to vector<8x16xf32>
    %1119 = arith.mulf %1118, %1092 : vector<8x16xf32>
    %1120 = arith.addf %1084, %1119 : vector<8x16xf32>
    %c151 = arith.constant 151 : index
    %1121 = memref.load %arg2[%c151] : memref<360xf32, #tpu.memory_space<smem>>
    %1122 = vector.broadcast %1121 : f32 to vector<8x16xf32>
    %1123 = arith.mulf %1122, %1092 : vector<8x16xf32>
    %1124 = arith.addf %1088, %1123 : vector<8x16xf32>
    %c1_i32_128 = arith.constant 1 : i32
    %1125 = arith.addi %0, %c1_i32_128 : i32
    %c0_129 = arith.constant 0 : index
    %c3_130 = arith.constant 3 : index
    %1126 = arith.index_cast %1125 : i32 to index
    %c1_131 = arith.constant 1 : index
    %1127 = vector.load %arg3[%c0_129, %c3_130, %1126, %c1_131] : memref<1x5x18x18xf32, #tpu.memory_space<vmem>>, vector<1x1x8x16xf32>
    %1128 = vector.shape_cast %1127 : vector<1x1x8x16xf32> to vector<8x16xf32>
    %c184 = arith.constant 184 : index
    %1129 = memref.load %arg2[%c184] : memref<360xf32, #tpu.memory_space<smem>>
    %1130 = vector.broadcast %1129 : f32 to vector<8x16xf32>
    %1131 = arith.mulf %1130, %1128 : vector<8x16xf32>
    %1132 = arith.addf %1096, %1131 : vector<8x16xf32>
    %c185 = arith.constant 185 : index
    %1133 = memref.load %arg2[%c185] : memref<360xf32, #tpu.memory_space<smem>>
    %1134 = vector.broadcast %1133 : f32 to vector<8x16xf32>
    %1135 = arith.mulf %1134, %1128 : vector<8x16xf32>
    %1136 = arith.addf %1100, %1135 : vector<8x16xf32>
    %c186 = arith.constant 186 : index
    %1137 = memref.load %arg2[%c186] : memref<360xf32, #tpu.memory_space<smem>>
    %1138 = vector.broadcast %1137 : f32 to vector<8x16xf32>
    %1139 = arith.mulf %1138, %1128 : vector<8x16xf32>
    %1140 = arith.addf %1104, %1139 : vector<8x16xf32>
    %c187 = arith.constant 187 : index
    %1141 = memref.load %arg2[%c187] : memref<360xf32, #tpu.memory_space<smem>>
    %1142 = vector.broadcast %1141 : f32 to vector<8x16xf32>
    %1143 = arith.mulf %1142, %1128 : vector<8x16xf32>
    %1144 = arith.addf %1108, %1143 : vector<8x16xf32>
    %c188 = arith.constant 188 : index
    %1145 = memref.load %arg2[%c188] : memref<360xf32, #tpu.memory_space<smem>>
    %1146 = vector.broadcast %1145 : f32 to vector<8x16xf32>
    %1147 = arith.mulf %1146, %1128 : vector<8x16xf32>
    %1148 = arith.addf %1112, %1147 : vector<8x16xf32>
    %c189 = arith.constant 189 : index
    %1149 = memref.load %arg2[%c189] : memref<360xf32, #tpu.memory_space<smem>>
    %1150 = vector.broadcast %1149 : f32 to vector<8x16xf32>
    %1151 = arith.mulf %1150, %1128 : vector<8x16xf32>
    %1152 = arith.addf %1116, %1151 : vector<8x16xf32>
    %c190 = arith.constant 190 : index
    %1153 = memref.load %arg2[%c190] : memref<360xf32, #tpu.memory_space<smem>>
    %1154 = vector.broadcast %1153 : f32 to vector<8x16xf32>
    %1155 = arith.mulf %1154, %1128 : vector<8x16xf32>
    %1156 = arith.addf %1120, %1155 : vector<8x16xf32>
    %c191 = arith.constant 191 : index
    %1157 = memref.load %arg2[%c191] : memref<360xf32, #tpu.memory_space<smem>>
    %1158 = vector.broadcast %1157 : f32 to vector<8x16xf32>
    %1159 = arith.mulf %1158, %1128 : vector<8x16xf32>
    %1160 = arith.addf %1124, %1159 : vector<8x16xf32>
    %c1_i32_132 = arith.constant 1 : i32
    %1161 = arith.addi %0, %c1_i32_132 : i32
    %c0_133 = arith.constant 0 : index
    %c3_134 = arith.constant 3 : index
    %1162 = arith.index_cast %1161 : i32 to index
    %c2_135 = arith.constant 2 : index
    %1163 = vector.load %arg3[%c0_133, %c3_134, %1162, %c2_135] : memref<1x5x18x18xf32, #tpu.memory_space<vmem>>, vector<1x1x8x16xf32>
    %1164 = vector.shape_cast %1163 : vector<1x1x8x16xf32> to vector<8x16xf32>
    %c224 = arith.constant 224 : index
    %1165 = memref.load %arg2[%c224] : memref<360xf32, #tpu.memory_space<smem>>
    %1166 = vector.broadcast %1165 : f32 to vector<8x16xf32>
    %1167 = arith.mulf %1166, %1164 : vector<8x16xf32>
    %1168 = arith.addf %1132, %1167 : vector<8x16xf32>
    %c225 = arith.constant 225 : index
    %1169 = memref.load %arg2[%c225] : memref<360xf32, #tpu.memory_space<smem>>
    %1170 = vector.broadcast %1169 : f32 to vector<8x16xf32>
    %1171 = arith.mulf %1170, %1164 : vector<8x16xf32>
    %1172 = arith.addf %1136, %1171 : vector<8x16xf32>
    %c226 = arith.constant 226 : index
    %1173 = memref.load %arg2[%c226] : memref<360xf32, #tpu.memory_space<smem>>
    %1174 = vector.broadcast %1173 : f32 to vector<8x16xf32>
    %1175 = arith.mulf %1174, %1164 : vector<8x16xf32>
    %1176 = arith.addf %1140, %1175 : vector<8x16xf32>
    %c227 = arith.constant 227 : index
    %1177 = memref.load %arg2[%c227] : memref<360xf32, #tpu.memory_space<smem>>
    %1178 = vector.broadcast %1177 : f32 to vector<8x16xf32>
    %1179 = arith.mulf %1178, %1164 : vector<8x16xf32>
    %1180 = arith.addf %1144, %1179 : vector<8x16xf32>
    %c228 = arith.constant 228 : index
    %1181 = memref.load %arg2[%c228] : memref<360xf32, #tpu.memory_space<smem>>
    %1182 = vector.broadcast %1181 : f32 to vector<8x16xf32>
    %1183 = arith.mulf %1182, %1164 : vector<8x16xf32>
    %1184 = arith.addf %1148, %1183 : vector<8x16xf32>
    %c229 = arith.constant 229 : index
    %1185 = memref.load %arg2[%c229] : memref<360xf32, #tpu.memory_space<smem>>
    %1186 = vector.broadcast %1185 : f32 to vector<8x16xf32>
    %1187 = arith.mulf %1186, %1164 : vector<8x16xf32>
    %1188 = arith.addf %1152, %1187 : vector<8x16xf32>
    %c230 = arith.constant 230 : index
    %1189 = memref.load %arg2[%c230] : memref<360xf32, #tpu.memory_space<smem>>
    %1190 = vector.broadcast %1189 : f32 to vector<8x16xf32>
    %1191 = arith.mulf %1190, %1164 : vector<8x16xf32>
    %1192 = arith.addf %1156, %1191 : vector<8x16xf32>
    %c231 = arith.constant 231 : index
    %1193 = memref.load %arg2[%c231] : memref<360xf32, #tpu.memory_space<smem>>
    %1194 = vector.broadcast %1193 : f32 to vector<8x16xf32>
    %1195 = arith.mulf %1194, %1164 : vector<8x16xf32>
    %1196 = arith.addf %1160, %1195 : vector<8x16xf32>
    %c2_i32_136 = arith.constant 2 : i32
    %1197 = arith.addi %0, %c2_i32_136 : i32
    %c0_137 = arith.constant 0 : index
    %c3_138 = arith.constant 3 : index
    %1198 = arith.index_cast %1197 : i32 to index
    %c0_139 = arith.constant 0 : index
    %1199 = vector.load %arg3[%c0_137, %c3_138, %1198, %c0_139] : memref<1x5x18x18xf32, #tpu.memory_space<vmem>>, vector<1x1x8x16xf32>
    %1200 = vector.shape_cast %1199 : vector<1x1x8x16xf32> to vector<8x16xf32>
    %c264 = arith.constant 264 : index
    %1201 = memref.load %arg2[%c264] : memref<360xf32, #tpu.memory_space<smem>>
    %1202 = vector.broadcast %1201 : f32 to vector<8x16xf32>
    %1203 = arith.mulf %1202, %1200 : vector<8x16xf32>
    %1204 = arith.addf %1168, %1203 : vector<8x16xf32>
    %c265 = arith.constant 265 : index
    %1205 = memref.load %arg2[%c265] : memref<360xf32, #tpu.memory_space<smem>>
    %1206 = vector.broadcast %1205 : f32 to vector<8x16xf32>
    %1207 = arith.mulf %1206, %1200 : vector<8x16xf32>
    %1208 = arith.addf %1172, %1207 : vector<8x16xf32>
    %c266 = arith.constant 266 : index
    %1209 = memref.load %arg2[%c266] : memref<360xf32, #tpu.memory_space<smem>>
    %1210 = vector.broadcast %1209 : f32 to vector<8x16xf32>
    %1211 = arith.mulf %1210, %1200 : vector<8x16xf32>
    %1212 = arith.addf %1176, %1211 : vector<8x16xf32>
    %c267 = arith.constant 267 : index
    %1213 = memref.load %arg2[%c267] : memref<360xf32, #tpu.memory_space<smem>>
    %1214 = vector.broadcast %1213 : f32 to vector<8x16xf32>
    %1215 = arith.mulf %1214, %1200 : vector<8x16xf32>
    %1216 = arith.addf %1180, %1215 : vector<8x16xf32>
    %c268 = arith.constant 268 : index
    %1217 = memref.load %arg2[%c268] : memref<360xf32, #tpu.memory_space<smem>>
    %1218 = vector.broadcast %1217 : f32 to vector<8x16xf32>
    %1219 = arith.mulf %1218, %1200 : vector<8x16xf32>
    %1220 = arith.addf %1184, %1219 : vector<8x16xf32>
    %c269 = arith.constant 269 : index
    %1221 = memref.load %arg2[%c269] : memref<360xf32, #tpu.memory_space<smem>>
    %1222 = vector.broadcast %1221 : f32 to vector<8x16xf32>
    %1223 = arith.mulf %1222, %1200 : vector<8x16xf32>
    %1224 = arith.addf %1188, %1223 : vector<8x16xf32>
    %c270 = arith.constant 270 : index
    %1225 = memref.load %arg2[%c270] : memref<360xf32, #tpu.memory_space<smem>>
    %1226 = vector.broadcast %1225 : f32 to vector<8x16xf32>
    %1227 = arith.mulf %1226, %1200 : vector<8x16xf32>
    %1228 = arith.addf %1192, %1227 : vector<8x16xf32>
    %c271 = arith.constant 271 : index
    %1229 = memref.load %arg2[%c271] : memref<360xf32, #tpu.memory_space<smem>>
    %1230 = vector.broadcast %1229 : f32 to vector<8x16xf32>
    %1231 = arith.mulf %1230, %1200 : vector<8x16xf32>
    %1232 = arith.addf %1196, %1231 : vector<8x16xf32>
    %c2_i32_140 = arith.constant 2 : i32
    %1233 = arith.addi %0, %c2_i32_140 : i32
    %c0_141 = arith.constant 0 : index
    %c3_142 = arith.constant 3 : index
    %1234 = arith.index_cast %1233 : i32 to index
    %c1_143 = arith.constant 1 : index
    %1235 = vector.load %arg3[%c0_141, %c3_142, %1234, %c1_143] : memref<1x5x18x18xf32, #tpu.memory_space<vmem>>, vector<1x1x8x16xf32>
    %1236 = vector.shape_cast %1235 : vector<1x1x8x16xf32> to vector<8x16xf32>
    %c304 = arith.constant 304 : index
    %1237 = memref.load %arg2[%c304] : memref<360xf32, #tpu.memory_space<smem>>
    %1238 = vector.broadcast %1237 : f32 to vector<8x16xf32>
    %1239 = arith.mulf %1238, %1236 : vector<8x16xf32>
    %1240 = arith.addf %1204, %1239 : vector<8x16xf32>
    %c305 = arith.constant 305 : index
    %1241 = memref.load %arg2[%c305] : memref<360xf32, #tpu.memory_space<smem>>
    %1242 = vector.broadcast %1241 : f32 to vector<8x16xf32>
    %1243 = arith.mulf %1242, %1236 : vector<8x16xf32>
    %1244 = arith.addf %1208, %1243 : vector<8x16xf32>
    %c306 = arith.constant 306 : index
    %1245 = memref.load %arg2[%c306] : memref<360xf32, #tpu.memory_space<smem>>
    %1246 = vector.broadcast %1245 : f32 to vector<8x16xf32>
    %1247 = arith.mulf %1246, %1236 : vector<8x16xf32>
    %1248 = arith.addf %1212, %1247 : vector<8x16xf32>
    %c307 = arith.constant 307 : index
    %1249 = memref.load %arg2[%c307] : memref<360xf32, #tpu.memory_space<smem>>
    %1250 = vector.broadcast %1249 : f32 to vector<8x16xf32>
    %1251 = arith.mulf %1250, %1236 : vector<8x16xf32>
    %1252 = arith.addf %1216, %1251 : vector<8x16xf32>
    %c308 = arith.constant 308 : index
    %1253 = memref.load %arg2[%c308] : memref<360xf32, #tpu.memory_space<smem>>
    %1254 = vector.broadcast %1253 : f32 to vector<8x16xf32>
    %1255 = arith.mulf %1254, %1236 : vector<8x16xf32>
    %1256 = arith.addf %1220, %1255 : vector<8x16xf32>
    %c309 = arith.constant 309 : index
    %1257 = memref.load %arg2[%c309] : memref<360xf32, #tpu.memory_space<smem>>
    %1258 = vector.broadcast %1257 : f32 to vector<8x16xf32>
    %1259 = arith.mulf %1258, %1236 : vector<8x16xf32>
    %1260 = arith.addf %1224, %1259 : vector<8x16xf32>
    %c310 = arith.constant 310 : index
    %1261 = memref.load %arg2[%c310] : memref<360xf32, #tpu.memory_space<smem>>
    %1262 = vector.broadcast %1261 : f32 to vector<8x16xf32>
    %1263 = arith.mulf %1262, %1236 : vector<8x16xf32>
    %1264 = arith.addf %1228, %1263 : vector<8x16xf32>
    %c311 = arith.constant 311 : index
    %1265 = memref.load %arg2[%c311] : memref<360xf32, #tpu.memory_space<smem>>
    %1266 = vector.broadcast %1265 : f32 to vector<8x16xf32>
    %1267 = arith.mulf %1266, %1236 : vector<8x16xf32>
    %1268 = arith.addf %1232, %1267 : vector<8x16xf32>
    %c2_i32_144 = arith.constant 2 : i32
    %1269 = arith.addi %0, %c2_i32_144 : i32
    %c0_145 = arith.constant 0 : index
    %c3_146 = arith.constant 3 : index
    %1270 = arith.index_cast %1269 : i32 to index
    %c2_147 = arith.constant 2 : index
    %1271 = vector.load %arg3[%c0_145, %c3_146, %1270, %c2_147] : memref<1x5x18x18xf32, #tpu.memory_space<vmem>>, vector<1x1x8x16xf32>
    %1272 = vector.shape_cast %1271 : vector<1x1x8x16xf32> to vector<8x16xf32>
    %c344 = arith.constant 344 : index
    %1273 = memref.load %arg2[%c344] : memref<360xf32, #tpu.memory_space<smem>>
    %1274 = vector.broadcast %1273 : f32 to vector<8x16xf32>
    %1275 = arith.mulf %1274, %1272 : vector<8x16xf32>
    %1276 = arith.addf %1240, %1275 : vector<8x16xf32>
    %c345 = arith.constant 345 : index
    %1277 = memref.load %arg2[%c345] : memref<360xf32, #tpu.memory_space<smem>>
    %1278 = vector.broadcast %1277 : f32 to vector<8x16xf32>
    %1279 = arith.mulf %1278, %1272 : vector<8x16xf32>
    %1280 = arith.addf %1244, %1279 : vector<8x16xf32>
    %c346 = arith.constant 346 : index
    %1281 = memref.load %arg2[%c346] : memref<360xf32, #tpu.memory_space<smem>>
    %1282 = vector.broadcast %1281 : f32 to vector<8x16xf32>
    %1283 = arith.mulf %1282, %1272 : vector<8x16xf32>
    %1284 = arith.addf %1248, %1283 : vector<8x16xf32>
    %c347 = arith.constant 347 : index
    %1285 = memref.load %arg2[%c347] : memref<360xf32, #tpu.memory_space<smem>>
    %1286 = vector.broadcast %1285 : f32 to vector<8x16xf32>
    %1287 = arith.mulf %1286, %1272 : vector<8x16xf32>
    %1288 = arith.addf %1252, %1287 : vector<8x16xf32>
    %c348 = arith.constant 348 : index
    %1289 = memref.load %arg2[%c348] : memref<360xf32, #tpu.memory_space<smem>>
    %1290 = vector.broadcast %1289 : f32 to vector<8x16xf32>
    %1291 = arith.mulf %1290, %1272 : vector<8x16xf32>
    %1292 = arith.addf %1256, %1291 : vector<8x16xf32>
    %c349 = arith.constant 349 : index
    %1293 = memref.load %arg2[%c349] : memref<360xf32, #tpu.memory_space<smem>>
    %1294 = vector.broadcast %1293 : f32 to vector<8x16xf32>
    %1295 = arith.mulf %1294, %1272 : vector<8x16xf32>
    %1296 = arith.addf %1260, %1295 : vector<8x16xf32>
    %c350 = arith.constant 350 : index
    %1297 = memref.load %arg2[%c350] : memref<360xf32, #tpu.memory_space<smem>>
    %1298 = vector.broadcast %1297 : f32 to vector<8x16xf32>
    %1299 = arith.mulf %1298, %1272 : vector<8x16xf32>
    %1300 = arith.addf %1264, %1299 : vector<8x16xf32>
    %c351 = arith.constant 351 : index
    %1301 = memref.load %arg2[%c351] : memref<360xf32, #tpu.memory_space<smem>>
    %1302 = vector.broadcast %1301 : f32 to vector<8x16xf32>
    %1303 = arith.mulf %1302, %1272 : vector<8x16xf32>
    %1304 = arith.addf %1268, %1303 : vector<8x16xf32>
    %c0_i32_148 = arith.constant 0 : i32
    %1305 = arith.addi %0, %c0_i32_148 : i32
    %c0_149 = arith.constant 0 : index
    %c4_150 = arith.constant 4 : index
    %1306 = arith.index_cast %1305 : i32 to index
    %c0_151 = arith.constant 0 : index
    %1307 = vector.load %arg3[%c0_149, %c4_150, %1306, %c0_151] : memref<1x5x18x18xf32, #tpu.memory_space<vmem>>, vector<1x1x8x16xf32>
    %1308 = vector.shape_cast %1307 : vector<1x1x8x16xf32> to vector<8x16xf32>
    %c32 = arith.constant 32 : index
    %1309 = memref.load %arg2[%c32] : memref<360xf32, #tpu.memory_space<smem>>
    %1310 = vector.broadcast %1309 : f32 to vector<8x16xf32>
    %1311 = arith.mulf %1310, %1308 : vector<8x16xf32>
    %1312 = arith.addf %1276, %1311 : vector<8x16xf32>
    %c33 = arith.constant 33 : index
    %1313 = memref.load %arg2[%c33] : memref<360xf32, #tpu.memory_space<smem>>
    %1314 = vector.broadcast %1313 : f32 to vector<8x16xf32>
    %1315 = arith.mulf %1314, %1308 : vector<8x16xf32>
    %1316 = arith.addf %1280, %1315 : vector<8x16xf32>
    %c34 = arith.constant 34 : index
    %1317 = memref.load %arg2[%c34] : memref<360xf32, #tpu.memory_space<smem>>
    %1318 = vector.broadcast %1317 : f32 to vector<8x16xf32>
    %1319 = arith.mulf %1318, %1308 : vector<8x16xf32>
    %1320 = arith.addf %1284, %1319 : vector<8x16xf32>
    %c35 = arith.constant 35 : index
    %1321 = memref.load %arg2[%c35] : memref<360xf32, #tpu.memory_space<smem>>
    %1322 = vector.broadcast %1321 : f32 to vector<8x16xf32>
    %1323 = arith.mulf %1322, %1308 : vector<8x16xf32>
    %1324 = arith.addf %1288, %1323 : vector<8x16xf32>
    %c36 = arith.constant 36 : index
    %1325 = memref.load %arg2[%c36] : memref<360xf32, #tpu.memory_space<smem>>
    %1326 = vector.broadcast %1325 : f32 to vector<8x16xf32>
    %1327 = arith.mulf %1326, %1308 : vector<8x16xf32>
    %1328 = arith.addf %1292, %1327 : vector<8x16xf32>
    %c37 = arith.constant 37 : index
    %1329 = memref.load %arg2[%c37] : memref<360xf32, #tpu.memory_space<smem>>
    %1330 = vector.broadcast %1329 : f32 to vector<8x16xf32>
    %1331 = arith.mulf %1330, %1308 : vector<8x16xf32>
    %1332 = arith.addf %1296, %1331 : vector<8x16xf32>
    %c38 = arith.constant 38 : index
    %1333 = memref.load %arg2[%c38] : memref<360xf32, #tpu.memory_space<smem>>
    %1334 = vector.broadcast %1333 : f32 to vector<8x16xf32>
    %1335 = arith.mulf %1334, %1308 : vector<8x16xf32>
    %1336 = arith.addf %1300, %1335 : vector<8x16xf32>
    %c39 = arith.constant 39 : index
    %1337 = memref.load %arg2[%c39] : memref<360xf32, #tpu.memory_space<smem>>
    %1338 = vector.broadcast %1337 : f32 to vector<8x16xf32>
    %1339 = arith.mulf %1338, %1308 : vector<8x16xf32>
    %1340 = arith.addf %1304, %1339 : vector<8x16xf32>
    %c0_i32_152 = arith.constant 0 : i32
    %1341 = arith.addi %0, %c0_i32_152 : i32
    %c0_153 = arith.constant 0 : index
    %c4_154 = arith.constant 4 : index
    %1342 = arith.index_cast %1341 : i32 to index
    %c1_155 = arith.constant 1 : index
    %1343 = vector.load %arg3[%c0_153, %c4_154, %1342, %c1_155] : memref<1x5x18x18xf32, #tpu.memory_space<vmem>>, vector<1x1x8x16xf32>
    %1344 = vector.shape_cast %1343 : vector<1x1x8x16xf32> to vector<8x16xf32>
    %c72 = arith.constant 72 : index
    %1345 = memref.load %arg2[%c72] : memref<360xf32, #tpu.memory_space<smem>>
    %1346 = vector.broadcast %1345 : f32 to vector<8x16xf32>
    %1347 = arith.mulf %1346, %1344 : vector<8x16xf32>
    %1348 = arith.addf %1312, %1347 : vector<8x16xf32>
    %c73 = arith.constant 73 : index
    %1349 = memref.load %arg2[%c73] : memref<360xf32, #tpu.memory_space<smem>>
    %1350 = vector.broadcast %1349 : f32 to vector<8x16xf32>
    %1351 = arith.mulf %1350, %1344 : vector<8x16xf32>
    %1352 = arith.addf %1316, %1351 : vector<8x16xf32>
    %c74 = arith.constant 74 : index
    %1353 = memref.load %arg2[%c74] : memref<360xf32, #tpu.memory_space<smem>>
    %1354 = vector.broadcast %1353 : f32 to vector<8x16xf32>
    %1355 = arith.mulf %1354, %1344 : vector<8x16xf32>
    %1356 = arith.addf %1320, %1355 : vector<8x16xf32>
    %c75 = arith.constant 75 : index
    %1357 = memref.load %arg2[%c75] : memref<360xf32, #tpu.memory_space<smem>>
    %1358 = vector.broadcast %1357 : f32 to vector<8x16xf32>
    %1359 = arith.mulf %1358, %1344 : vector<8x16xf32>
    %1360 = arith.addf %1324, %1359 : vector<8x16xf32>
    %c76 = arith.constant 76 : index
    %1361 = memref.load %arg2[%c76] : memref<360xf32, #tpu.memory_space<smem>>
    %1362 = vector.broadcast %1361 : f32 to vector<8x16xf32>
    %1363 = arith.mulf %1362, %1344 : vector<8x16xf32>
    %1364 = arith.addf %1328, %1363 : vector<8x16xf32>
    %c77 = arith.constant 77 : index
    %1365 = memref.load %arg2[%c77] : memref<360xf32, #tpu.memory_space<smem>>
    %1366 = vector.broadcast %1365 : f32 to vector<8x16xf32>
    %1367 = arith.mulf %1366, %1344 : vector<8x16xf32>
    %1368 = arith.addf %1332, %1367 : vector<8x16xf32>
    %c78 = arith.constant 78 : index
    %1369 = memref.load %arg2[%c78] : memref<360xf32, #tpu.memory_space<smem>>
    %1370 = vector.broadcast %1369 : f32 to vector<8x16xf32>
    %1371 = arith.mulf %1370, %1344 : vector<8x16xf32>
    %1372 = arith.addf %1336, %1371 : vector<8x16xf32>
    %c79 = arith.constant 79 : index
    %1373 = memref.load %arg2[%c79] : memref<360xf32, #tpu.memory_space<smem>>
    %1374 = vector.broadcast %1373 : f32 to vector<8x16xf32>
    %1375 = arith.mulf %1374, %1344 : vector<8x16xf32>
    %1376 = arith.addf %1340, %1375 : vector<8x16xf32>
    %c0_i32_156 = arith.constant 0 : i32
    %1377 = arith.addi %0, %c0_i32_156 : i32
    %c0_157 = arith.constant 0 : index
    %c4_158 = arith.constant 4 : index
    %1378 = arith.index_cast %1377 : i32 to index
    %c2_159 = arith.constant 2 : index
    %1379 = vector.load %arg3[%c0_157, %c4_158, %1378, %c2_159] : memref<1x5x18x18xf32, #tpu.memory_space<vmem>>, vector<1x1x8x16xf32>
    %1380 = vector.shape_cast %1379 : vector<1x1x8x16xf32> to vector<8x16xf32>
    %c112 = arith.constant 112 : index
    %1381 = memref.load %arg2[%c112] : memref<360xf32, #tpu.memory_space<smem>>
    %1382 = vector.broadcast %1381 : f32 to vector<8x16xf32>
    %1383 = arith.mulf %1382, %1380 : vector<8x16xf32>
    %1384 = arith.addf %1348, %1383 : vector<8x16xf32>
    %c113 = arith.constant 113 : index
    %1385 = memref.load %arg2[%c113] : memref<360xf32, #tpu.memory_space<smem>>
    %1386 = vector.broadcast %1385 : f32 to vector<8x16xf32>
    %1387 = arith.mulf %1386, %1380 : vector<8x16xf32>
    %1388 = arith.addf %1352, %1387 : vector<8x16xf32>
    %c114 = arith.constant 114 : index
    %1389 = memref.load %arg2[%c114] : memref<360xf32, #tpu.memory_space<smem>>
    %1390 = vector.broadcast %1389 : f32 to vector<8x16xf32>
    %1391 = arith.mulf %1390, %1380 : vector<8x16xf32>
    %1392 = arith.addf %1356, %1391 : vector<8x16xf32>
    %c115 = arith.constant 115 : index
    %1393 = memref.load %arg2[%c115] : memref<360xf32, #tpu.memory_space<smem>>
    %1394 = vector.broadcast %1393 : f32 to vector<8x16xf32>
    %1395 = arith.mulf %1394, %1380 : vector<8x16xf32>
    %1396 = arith.addf %1360, %1395 : vector<8x16xf32>
    %c116 = arith.constant 116 : index
    %1397 = memref.load %arg2[%c116] : memref<360xf32, #tpu.memory_space<smem>>
    %1398 = vector.broadcast %1397 : f32 to vector<8x16xf32>
    %1399 = arith.mulf %1398, %1380 : vector<8x16xf32>
    %1400 = arith.addf %1364, %1399 : vector<8x16xf32>
    %c117 = arith.constant 117 : index
    %1401 = memref.load %arg2[%c117] : memref<360xf32, #tpu.memory_space<smem>>
    %1402 = vector.broadcast %1401 : f32 to vector<8x16xf32>
    %1403 = arith.mulf %1402, %1380 : vector<8x16xf32>
    %1404 = arith.addf %1368, %1403 : vector<8x16xf32>
    %c118 = arith.constant 118 : index
    %1405 = memref.load %arg2[%c118] : memref<360xf32, #tpu.memory_space<smem>>
    %1406 = vector.broadcast %1405 : f32 to vector<8x16xf32>
    %1407 = arith.mulf %1406, %1380 : vector<8x16xf32>
    %1408 = arith.addf %1372, %1407 : vector<8x16xf32>
    %c119 = arith.constant 119 : index
    %1409 = memref.load %arg2[%c119] : memref<360xf32, #tpu.memory_space<smem>>
    %1410 = vector.broadcast %1409 : f32 to vector<8x16xf32>
    %1411 = arith.mulf %1410, %1380 : vector<8x16xf32>
    %1412 = arith.addf %1376, %1411 : vector<8x16xf32>
    %c1_i32_160 = arith.constant 1 : i32
    %1413 = arith.addi %0, %c1_i32_160 : i32
    %c0_161 = arith.constant 0 : index
    %c4_162 = arith.constant 4 : index
    %1414 = arith.index_cast %1413 : i32 to index
    %c0_163 = arith.constant 0 : index
    %1415 = vector.load %arg3[%c0_161, %c4_162, %1414, %c0_163] : memref<1x5x18x18xf32, #tpu.memory_space<vmem>>, vector<1x1x8x16xf32>
    %1416 = vector.shape_cast %1415 : vector<1x1x8x16xf32> to vector<8x16xf32>
    %c152 = arith.constant 152 : index
    %1417 = memref.load %arg2[%c152] : memref<360xf32, #tpu.memory_space<smem>>
    %1418 = vector.broadcast %1417 : f32 to vector<8x16xf32>
    %1419 = arith.mulf %1418, %1416 : vector<8x16xf32>
    %1420 = arith.addf %1384, %1419 : vector<8x16xf32>
    %c153 = arith.constant 153 : index
    %1421 = memref.load %arg2[%c153] : memref<360xf32, #tpu.memory_space<smem>>
    %1422 = vector.broadcast %1421 : f32 to vector<8x16xf32>
    %1423 = arith.mulf %1422, %1416 : vector<8x16xf32>
    %1424 = arith.addf %1388, %1423 : vector<8x16xf32>
    %c154 = arith.constant 154 : index
    %1425 = memref.load %arg2[%c154] : memref<360xf32, #tpu.memory_space<smem>>
    %1426 = vector.broadcast %1425 : f32 to vector<8x16xf32>
    %1427 = arith.mulf %1426, %1416 : vector<8x16xf32>
    %1428 = arith.addf %1392, %1427 : vector<8x16xf32>
    %c155 = arith.constant 155 : index
    %1429 = memref.load %arg2[%c155] : memref<360xf32, #tpu.memory_space<smem>>
    %1430 = vector.broadcast %1429 : f32 to vector<8x16xf32>
    %1431 = arith.mulf %1430, %1416 : vector<8x16xf32>
    %1432 = arith.addf %1396, %1431 : vector<8x16xf32>
    %c156 = arith.constant 156 : index
    %1433 = memref.load %arg2[%c156] : memref<360xf32, #tpu.memory_space<smem>>
    %1434 = vector.broadcast %1433 : f32 to vector<8x16xf32>
    %1435 = arith.mulf %1434, %1416 : vector<8x16xf32>
    %1436 = arith.addf %1400, %1435 : vector<8x16xf32>
    %c157 = arith.constant 157 : index
    %1437 = memref.load %arg2[%c157] : memref<360xf32, #tpu.memory_space<smem>>
    %1438 = vector.broadcast %1437 : f32 to vector<8x16xf32>
    %1439 = arith.mulf %1438, %1416 : vector<8x16xf32>
    %1440 = arith.addf %1404, %1439 : vector<8x16xf32>
    %c158 = arith.constant 158 : index
    %1441 = memref.load %arg2[%c158] : memref<360xf32, #tpu.memory_space<smem>>
    %1442 = vector.broadcast %1441 : f32 to vector<8x16xf32>
    %1443 = arith.mulf %1442, %1416 : vector<8x16xf32>
    %1444 = arith.addf %1408, %1443 : vector<8x16xf32>
    %c159 = arith.constant 159 : index
    %1445 = memref.load %arg2[%c159] : memref<360xf32, #tpu.memory_space<smem>>
    %1446 = vector.broadcast %1445 : f32 to vector<8x16xf32>
    %1447 = arith.mulf %1446, %1416 : vector<8x16xf32>
    %1448 = arith.addf %1412, %1447 : vector<8x16xf32>
    %c1_i32_164 = arith.constant 1 : i32
    %1449 = arith.addi %0, %c1_i32_164 : i32
    %c0_165 = arith.constant 0 : index
    %c4_166 = arith.constant 4 : index
    %1450 = arith.index_cast %1449 : i32 to index
    %c1_167 = arith.constant 1 : index
    %1451 = vector.load %arg3[%c0_165, %c4_166, %1450, %c1_167] : memref<1x5x18x18xf32, #tpu.memory_space<vmem>>, vector<1x1x8x16xf32>
    %1452 = vector.shape_cast %1451 : vector<1x1x8x16xf32> to vector<8x16xf32>
    %c192 = arith.constant 192 : index
    %1453 = memref.load %arg2[%c192] : memref<360xf32, #tpu.memory_space<smem>>
    %1454 = vector.broadcast %1453 : f32 to vector<8x16xf32>
    %1455 = arith.mulf %1454, %1452 : vector<8x16xf32>
    %1456 = arith.addf %1420, %1455 : vector<8x16xf32>
    %c193 = arith.constant 193 : index
    %1457 = memref.load %arg2[%c193] : memref<360xf32, #tpu.memory_space<smem>>
    %1458 = vector.broadcast %1457 : f32 to vector<8x16xf32>
    %1459 = arith.mulf %1458, %1452 : vector<8x16xf32>
    %1460 = arith.addf %1424, %1459 : vector<8x16xf32>
    %c194 = arith.constant 194 : index
    %1461 = memref.load %arg2[%c194] : memref<360xf32, #tpu.memory_space<smem>>
    %1462 = vector.broadcast %1461 : f32 to vector<8x16xf32>
    %1463 = arith.mulf %1462, %1452 : vector<8x16xf32>
    %1464 = arith.addf %1428, %1463 : vector<8x16xf32>
    %c195 = arith.constant 195 : index
    %1465 = memref.load %arg2[%c195] : memref<360xf32, #tpu.memory_space<smem>>
    %1466 = vector.broadcast %1465 : f32 to vector<8x16xf32>
    %1467 = arith.mulf %1466, %1452 : vector<8x16xf32>
    %1468 = arith.addf %1432, %1467 : vector<8x16xf32>
    %c196 = arith.constant 196 : index
    %1469 = memref.load %arg2[%c196] : memref<360xf32, #tpu.memory_space<smem>>
    %1470 = vector.broadcast %1469 : f32 to vector<8x16xf32>
    %1471 = arith.mulf %1470, %1452 : vector<8x16xf32>
    %1472 = arith.addf %1436, %1471 : vector<8x16xf32>
    %c197 = arith.constant 197 : index
    %1473 = memref.load %arg2[%c197] : memref<360xf32, #tpu.memory_space<smem>>
    %1474 = vector.broadcast %1473 : f32 to vector<8x16xf32>
    %1475 = arith.mulf %1474, %1452 : vector<8x16xf32>
    %1476 = arith.addf %1440, %1475 : vector<8x16xf32>
    %c198 = arith.constant 198 : index
    %1477 = memref.load %arg2[%c198] : memref<360xf32, #tpu.memory_space<smem>>
    %1478 = vector.broadcast %1477 : f32 to vector<8x16xf32>
    %1479 = arith.mulf %1478, %1452 : vector<8x16xf32>
    %1480 = arith.addf %1444, %1479 : vector<8x16xf32>
    %c199 = arith.constant 199 : index
    %1481 = memref.load %arg2[%c199] : memref<360xf32, #tpu.memory_space<smem>>
    %1482 = vector.broadcast %1481 : f32 to vector<8x16xf32>
    %1483 = arith.mulf %1482, %1452 : vector<8x16xf32>
    %1484 = arith.addf %1448, %1483 : vector<8x16xf32>
    %c1_i32_168 = arith.constant 1 : i32
    %1485 = arith.addi %0, %c1_i32_168 : i32
    %c0_169 = arith.constant 0 : index
    %c4_170 = arith.constant 4 : index
    %1486 = arith.index_cast %1485 : i32 to index
    %c2_171 = arith.constant 2 : index
    %1487 = vector.load %arg3[%c0_169, %c4_170, %1486, %c2_171] : memref<1x5x18x18xf32, #tpu.memory_space<vmem>>, vector<1x1x8x16xf32>
    %1488 = vector.shape_cast %1487 : vector<1x1x8x16xf32> to vector<8x16xf32>
    %c232 = arith.constant 232 : index
    %1489 = memref.load %arg2[%c232] : memref<360xf32, #tpu.memory_space<smem>>
    %1490 = vector.broadcast %1489 : f32 to vector<8x16xf32>
    %1491 = arith.mulf %1490, %1488 : vector<8x16xf32>
    %1492 = arith.addf %1456, %1491 : vector<8x16xf32>
    %c233 = arith.constant 233 : index
    %1493 = memref.load %arg2[%c233] : memref<360xf32, #tpu.memory_space<smem>>
    %1494 = vector.broadcast %1493 : f32 to vector<8x16xf32>
    %1495 = arith.mulf %1494, %1488 : vector<8x16xf32>
    %1496 = arith.addf %1460, %1495 : vector<8x16xf32>
    %c234 = arith.constant 234 : index
    %1497 = memref.load %arg2[%c234] : memref<360xf32, #tpu.memory_space<smem>>
    %1498 = vector.broadcast %1497 : f32 to vector<8x16xf32>
    %1499 = arith.mulf %1498, %1488 : vector<8x16xf32>
    %1500 = arith.addf %1464, %1499 : vector<8x16xf32>
    %c235 = arith.constant 235 : index
    %1501 = memref.load %arg2[%c235] : memref<360xf32, #tpu.memory_space<smem>>
    %1502 = vector.broadcast %1501 : f32 to vector<8x16xf32>
    %1503 = arith.mulf %1502, %1488 : vector<8x16xf32>
    %1504 = arith.addf %1468, %1503 : vector<8x16xf32>
    %c236 = arith.constant 236 : index
    %1505 = memref.load %arg2[%c236] : memref<360xf32, #tpu.memory_space<smem>>
    %1506 = vector.broadcast %1505 : f32 to vector<8x16xf32>
    %1507 = arith.mulf %1506, %1488 : vector<8x16xf32>
    %1508 = arith.addf %1472, %1507 : vector<8x16xf32>
    %c237 = arith.constant 237 : index
    %1509 = memref.load %arg2[%c237] : memref<360xf32, #tpu.memory_space<smem>>
    %1510 = vector.broadcast %1509 : f32 to vector<8x16xf32>
    %1511 = arith.mulf %1510, %1488 : vector<8x16xf32>
    %1512 = arith.addf %1476, %1511 : vector<8x16xf32>
    %c238 = arith.constant 238 : index
    %1513 = memref.load %arg2[%c238] : memref<360xf32, #tpu.memory_space<smem>>
    %1514 = vector.broadcast %1513 : f32 to vector<8x16xf32>
    %1515 = arith.mulf %1514, %1488 : vector<8x16xf32>
    %1516 = arith.addf %1480, %1515 : vector<8x16xf32>
    %c239 = arith.constant 239 : index
    %1517 = memref.load %arg2[%c239] : memref<360xf32, #tpu.memory_space<smem>>
    %1518 = vector.broadcast %1517 : f32 to vector<8x16xf32>
    %1519 = arith.mulf %1518, %1488 : vector<8x16xf32>
    %1520 = arith.addf %1484, %1519 : vector<8x16xf32>
    %c2_i32_172 = arith.constant 2 : i32
    %1521 = arith.addi %0, %c2_i32_172 : i32
    %c0_173 = arith.constant 0 : index
    %c4_174 = arith.constant 4 : index
    %1522 = arith.index_cast %1521 : i32 to index
    %c0_175 = arith.constant 0 : index
    %1523 = vector.load %arg3[%c0_173, %c4_174, %1522, %c0_175] : memref<1x5x18x18xf32, #tpu.memory_space<vmem>>, vector<1x1x8x16xf32>
    %1524 = vector.shape_cast %1523 : vector<1x1x8x16xf32> to vector<8x16xf32>
    %c272 = arith.constant 272 : index
    %1525 = memref.load %arg2[%c272] : memref<360xf32, #tpu.memory_space<smem>>
    %1526 = vector.broadcast %1525 : f32 to vector<8x16xf32>
    %1527 = arith.mulf %1526, %1524 : vector<8x16xf32>
    %1528 = arith.addf %1492, %1527 : vector<8x16xf32>
    %c273 = arith.constant 273 : index
    %1529 = memref.load %arg2[%c273] : memref<360xf32, #tpu.memory_space<smem>>
    %1530 = vector.broadcast %1529 : f32 to vector<8x16xf32>
    %1531 = arith.mulf %1530, %1524 : vector<8x16xf32>
    %1532 = arith.addf %1496, %1531 : vector<8x16xf32>
    %c274 = arith.constant 274 : index
    %1533 = memref.load %arg2[%c274] : memref<360xf32, #tpu.memory_space<smem>>
    %1534 = vector.broadcast %1533 : f32 to vector<8x16xf32>
    %1535 = arith.mulf %1534, %1524 : vector<8x16xf32>
    %1536 = arith.addf %1500, %1535 : vector<8x16xf32>
    %c275 = arith.constant 275 : index
    %1537 = memref.load %arg2[%c275] : memref<360xf32, #tpu.memory_space<smem>>
    %1538 = vector.broadcast %1537 : f32 to vector<8x16xf32>
    %1539 = arith.mulf %1538, %1524 : vector<8x16xf32>
    %1540 = arith.addf %1504, %1539 : vector<8x16xf32>
    %c276 = arith.constant 276 : index
    %1541 = memref.load %arg2[%c276] : memref<360xf32, #tpu.memory_space<smem>>
    %1542 = vector.broadcast %1541 : f32 to vector<8x16xf32>
    %1543 = arith.mulf %1542, %1524 : vector<8x16xf32>
    %1544 = arith.addf %1508, %1543 : vector<8x16xf32>
    %c277 = arith.constant 277 : index
    %1545 = memref.load %arg2[%c277] : memref<360xf32, #tpu.memory_space<smem>>
    %1546 = vector.broadcast %1545 : f32 to vector<8x16xf32>
    %1547 = arith.mulf %1546, %1524 : vector<8x16xf32>
    %1548 = arith.addf %1512, %1547 : vector<8x16xf32>
    %c278 = arith.constant 278 : index
    %1549 = memref.load %arg2[%c278] : memref<360xf32, #tpu.memory_space<smem>>
    %1550 = vector.broadcast %1549 : f32 to vector<8x16xf32>
    %1551 = arith.mulf %1550, %1524 : vector<8x16xf32>
    %1552 = arith.addf %1516, %1551 : vector<8x16xf32>
    %c279 = arith.constant 279 : index
    %1553 = memref.load %arg2[%c279] : memref<360xf32, #tpu.memory_space<smem>>
    %1554 = vector.broadcast %1553 : f32 to vector<8x16xf32>
    %1555 = arith.mulf %1554, %1524 : vector<8x16xf32>
    %1556 = arith.addf %1520, %1555 : vector<8x16xf32>
    %c2_i32_176 = arith.constant 2 : i32
    %1557 = arith.addi %0, %c2_i32_176 : i32
    %c0_177 = arith.constant 0 : index
    %c4_178 = arith.constant 4 : index
    %1558 = arith.index_cast %1557 : i32 to index
    %c1_179 = arith.constant 1 : index
    %1559 = vector.load %arg3[%c0_177, %c4_178, %1558, %c1_179] : memref<1x5x18x18xf32, #tpu.memory_space<vmem>>, vector<1x1x8x16xf32>
    %1560 = vector.shape_cast %1559 : vector<1x1x8x16xf32> to vector<8x16xf32>
    %c312 = arith.constant 312 : index
    %1561 = memref.load %arg2[%c312] : memref<360xf32, #tpu.memory_space<smem>>
    %1562 = vector.broadcast %1561 : f32 to vector<8x16xf32>
    %1563 = arith.mulf %1562, %1560 : vector<8x16xf32>
    %1564 = arith.addf %1528, %1563 : vector<8x16xf32>
    %c313 = arith.constant 313 : index
    %1565 = memref.load %arg2[%c313] : memref<360xf32, #tpu.memory_space<smem>>
    %1566 = vector.broadcast %1565 : f32 to vector<8x16xf32>
    %1567 = arith.mulf %1566, %1560 : vector<8x16xf32>
    %1568 = arith.addf %1532, %1567 : vector<8x16xf32>
    %c314 = arith.constant 314 : index
    %1569 = memref.load %arg2[%c314] : memref<360xf32, #tpu.memory_space<smem>>
    %1570 = vector.broadcast %1569 : f32 to vector<8x16xf32>
    %1571 = arith.mulf %1570, %1560 : vector<8x16xf32>
    %1572 = arith.addf %1536, %1571 : vector<8x16xf32>
    %c315 = arith.constant 315 : index
    %1573 = memref.load %arg2[%c315] : memref<360xf32, #tpu.memory_space<smem>>
    %1574 = vector.broadcast %1573 : f32 to vector<8x16xf32>
    %1575 = arith.mulf %1574, %1560 : vector<8x16xf32>
    %1576 = arith.addf %1540, %1575 : vector<8x16xf32>
    %c316 = arith.constant 316 : index
    %1577 = memref.load %arg2[%c316] : memref<360xf32, #tpu.memory_space<smem>>
    %1578 = vector.broadcast %1577 : f32 to vector<8x16xf32>
    %1579 = arith.mulf %1578, %1560 : vector<8x16xf32>
    %1580 = arith.addf %1544, %1579 : vector<8x16xf32>
    %c317 = arith.constant 317 : index
    %1581 = memref.load %arg2[%c317] : memref<360xf32, #tpu.memory_space<smem>>
    %1582 = vector.broadcast %1581 : f32 to vector<8x16xf32>
    %1583 = arith.mulf %1582, %1560 : vector<8x16xf32>
    %1584 = arith.addf %1548, %1583 : vector<8x16xf32>
    %c318 = arith.constant 318 : index
    %1585 = memref.load %arg2[%c318] : memref<360xf32, #tpu.memory_space<smem>>
    %1586 = vector.broadcast %1585 : f32 to vector<8x16xf32>
    %1587 = arith.mulf %1586, %1560 : vector<8x16xf32>
    %1588 = arith.addf %1552, %1587 : vector<8x16xf32>
    %c319 = arith.constant 319 : index
    %1589 = memref.load %arg2[%c319] : memref<360xf32, #tpu.memory_space<smem>>
    %1590 = vector.broadcast %1589 : f32 to vector<8x16xf32>
    %1591 = arith.mulf %1590, %1560 : vector<8x16xf32>
    %1592 = arith.addf %1556, %1591 : vector<8x16xf32>
    %c2_i32_180 = arith.constant 2 : i32
    %1593 = arith.addi %0, %c2_i32_180 : i32
    %c0_181 = arith.constant 0 : index
    %c4_182 = arith.constant 4 : index
    %1594 = arith.index_cast %1593 : i32 to index
    %c2_183 = arith.constant 2 : index
    %1595 = vector.load %arg3[%c0_181, %c4_182, %1594, %c2_183] : memref<1x5x18x18xf32, #tpu.memory_space<vmem>>, vector<1x1x8x16xf32>
    %1596 = vector.shape_cast %1595 : vector<1x1x8x16xf32> to vector<8x16xf32>
    %c352 = arith.constant 352 : index
    %1597 = memref.load %arg2[%c352] : memref<360xf32, #tpu.memory_space<smem>>
    %1598 = vector.broadcast %1597 : f32 to vector<8x16xf32>
    %1599 = arith.mulf %1598, %1596 : vector<8x16xf32>
    %1600 = arith.addf %1564, %1599 : vector<8x16xf32>
    %c353 = arith.constant 353 : index
    %1601 = memref.load %arg2[%c353] : memref<360xf32, #tpu.memory_space<smem>>
    %1602 = vector.broadcast %1601 : f32 to vector<8x16xf32>
    %1603 = arith.mulf %1602, %1596 : vector<8x16xf32>
    %1604 = arith.addf %1568, %1603 : vector<8x16xf32>
    %c354 = arith.constant 354 : index
    %1605 = memref.load %arg2[%c354] : memref<360xf32, #tpu.memory_space<smem>>
    %1606 = vector.broadcast %1605 : f32 to vector<8x16xf32>
    %1607 = arith.mulf %1606, %1596 : vector<8x16xf32>
    %1608 = arith.addf %1572, %1607 : vector<8x16xf32>
    %c355 = arith.constant 355 : index
    %1609 = memref.load %arg2[%c355] : memref<360xf32, #tpu.memory_space<smem>>
    %1610 = vector.broadcast %1609 : f32 to vector<8x16xf32>
    %1611 = arith.mulf %1610, %1596 : vector<8x16xf32>
    %1612 = arith.addf %1576, %1611 : vector<8x16xf32>
    %c356 = arith.constant 356 : index
    %1613 = memref.load %arg2[%c356] : memref<360xf32, #tpu.memory_space<smem>>
    %1614 = vector.broadcast %1613 : f32 to vector<8x16xf32>
    %1615 = arith.mulf %1614, %1596 : vector<8x16xf32>
    %1616 = arith.addf %1580, %1615 : vector<8x16xf32>
    %c357 = arith.constant 357 : index
    %1617 = memref.load %arg2[%c357] : memref<360xf32, #tpu.memory_space<smem>>
    %1618 = vector.broadcast %1617 : f32 to vector<8x16xf32>
    %1619 = arith.mulf %1618, %1596 : vector<8x16xf32>
    %1620 = arith.addf %1584, %1619 : vector<8x16xf32>
    %c358 = arith.constant 358 : index
    %1621 = memref.load %arg2[%c358] : memref<360xf32, #tpu.memory_space<smem>>
    %1622 = vector.broadcast %1621 : f32 to vector<8x16xf32>
    %1623 = arith.mulf %1622, %1596 : vector<8x16xf32>
    %1624 = arith.addf %1588, %1623 : vector<8x16xf32>
    %c359 = arith.constant 359 : index
    %1625 = memref.load %arg2[%c359] : memref<360xf32, #tpu.memory_space<smem>>
    %1626 = vector.broadcast %1625 : f32 to vector<8x16xf32>
    %1627 = arith.mulf %1626, %1596 : vector<8x16xf32>
    %1628 = arith.addf %1592, %1627 : vector<8x16xf32>
    %c0_184 = arith.constant 0 : index
    %c0_185 = arith.constant 0 : index
    %c0_186 = arith.constant 0 : index
    %c0_187 = arith.constant 0 : index
    %1629 = vector.load %arg4[%c0_184, %c0_185, %c0_186, %c0_187] : memref<1x8x8x16xf32, #tpu.memory_space<vmem>>, vector<1x1x8x16xf32>
    %1630 = vector.shape_cast %1629 : vector<1x1x8x16xf32> to vector<8x16xf32>
    %1631 = vector.shape_cast %1600 : vector<8x16xf32> to vector<1x1x8x16xf32>
    tpu.vector_store %arg4[%c0_184, %c0_185, %c0_186, %c0_187], %1631 {strides = array<i32>} : memref<1x8x8x16xf32, #tpu.memory_space<vmem>>, vector<1x1x8x16xf32>,
    %c0_188 = arith.constant 0 : index
    %c1_189 = arith.constant 1 : index
    %c0_190 = arith.constant 0 : index
    %c0_191 = arith.constant 0 : index
    %1632 = vector.load %arg4[%c0_188, %c1_189, %c0_190, %c0_191] : memref<1x8x8x16xf32, #tpu.memory_space<vmem>>, vector<1x1x8x16xf32>
    %1633 = vector.shape_cast %1632 : vector<1x1x8x16xf32> to vector<8x16xf32>
    %1634 = vector.shape_cast %1604 : vector<8x16xf32> to vector<1x1x8x16xf32>
    tpu.vector_store %arg4[%c0_188, %c1_189, %c0_190, %c0_191], %1634 {strides = array<i32>} : memref<1x8x8x16xf32, #tpu.memory_space<vmem>>, vector<1x1x8x16xf32>,
    %c0_192 = arith.constant 0 : index
    %c2_193 = arith.constant 2 : index
    %c0_194 = arith.constant 0 : index
    %c0_195 = arith.constant 0 : index
    %1635 = vector.load %arg4[%c0_192, %c2_193, %c0_194, %c0_195] : memref<1x8x8x16xf32, #tpu.memory_space<vmem>>, vector<1x1x8x16xf32>
    %1636 = vector.shape_cast %1635 : vector<1x1x8x16xf32> to vector<8x16xf32>
    %1637 = vector.shape_cast %1608 : vector<8x16xf32> to vector<1x1x8x16xf32>
    tpu.vector_store %arg4[%c0_192, %c2_193, %c0_194, %c0_195], %1637 {strides = array<i32>} : memref<1x8x8x16xf32, #tpu.memory_space<vmem>>, vector<1x1x8x16xf32>,
    %c0_196 = arith.constant 0 : index
    %c3_197 = arith.constant 3 : index
    %c0_198 = arith.constant 0 : index
    %c0_199 = arith.constant 0 : index
    %1638 = vector.load %arg4[%c0_196, %c3_197, %c0_198, %c0_199] : memref<1x8x8x16xf32, #tpu.memory_space<vmem>>, vector<1x1x8x16xf32>
    %1639 = vector.shape_cast %1638 : vector<1x1x8x16xf32> to vector<8x16xf32>
    %1640 = vector.shape_cast %1612 : vector<8x16xf32> to vector<1x1x8x16xf32>
    tpu.vector_store %arg4[%c0_196, %c3_197, %c0_198, %c0_199], %1640 {strides = array<i32>} : memref<1x8x8x16xf32, #tpu.memory_space<vmem>>, vector<1x1x8x16xf32>,
    %c0_200 = arith.constant 0 : index
    %c4_201 = arith.constant 4 : index
    %c0_202 = arith.constant 0 : index
    %c0_203 = arith.constant 0 : index
    %1641 = vector.load %arg4[%c0_200, %c4_201, %c0_202, %c0_203] : memref<1x8x8x16xf32, #tpu.memory_space<vmem>>, vector<1x1x8x16xf32>
    %1642 = vector.shape_cast %1641 : vector<1x1x8x16xf32> to vector<8x16xf32>
    %1643 = vector.shape_cast %1616 : vector<8x16xf32> to vector<1x1x8x16xf32>
    tpu.vector_store %arg4[%c0_200, %c4_201, %c0_202, %c0_203], %1643 {strides = array<i32>} : memref<1x8x8x16xf32, #tpu.memory_space<vmem>>, vector<1x1x8x16xf32>,
    %c0_204 = arith.constant 0 : index
    %c5_205 = arith.constant 5 : index
    %c0_206 = arith.constant 0 : index
    %c0_207 = arith.constant 0 : index
    %1644 = vector.load %arg4[%c0_204, %c5_205, %c0_206, %c0_207] : memref<1x8x8x16xf32, #tpu.memory_space<vmem>>, vector<1x1x8x16xf32>
    %1645 = vector.shape_cast %1644 : vector<1x1x8x16xf32> to vector<8x16xf32>
    %1646 = vector.shape_cast %1620 : vector<8x16xf32> to vector<1x1x8x16xf32>
    tpu.vector_store %arg4[%c0_204, %c5_205, %c0_206, %c0_207], %1646 {strides = array<i32>} : memref<1x8x8x16xf32, #tpu.memory_space<vmem>>, vector<1x1x8x16xf32>,
    %c0_208 = arith.constant 0 : index
    %c6_209 = arith.constant 6 : index
    %c0_210 = arith.constant 0 : index
    %c0_211 = arith.constant 0 : index
    %1647 = vector.load %arg4[%c0_208, %c6_209, %c0_210, %c0_211] : memref<1x8x8x16xf32, #tpu.memory_space<vmem>>, vector<1x1x8x16xf32>
    %1648 = vector.shape_cast %1647 : vector<1x1x8x16xf32> to vector<8x16xf32>
    %1649 = vector.shape_cast %1624 : vector<8x16xf32> to vector<1x1x8x16xf32>
    tpu.vector_store %arg4[%c0_208, %c6_209, %c0_210, %c0_211], %1649 {strides = array<i32>} : memref<1x8x8x16xf32, #tpu.memory_space<vmem>>, vector<1x1x8x16xf32>,
    %c0_212 = arith.constant 0 : index
    %c7_213 = arith.constant 7 : index
    %c0_214 = arith.constant 0 : index
    %c0_215 = arith.constant 0 : index
    %1650 = vector.load %arg4[%c0_212, %c7_213, %c0_214, %c0_215] : memref<1x8x8x16xf32, #tpu.memory_space<vmem>>, vector<1x1x8x16xf32>
    %1651 = vector.shape_cast %1650 : vector<1x1x8x16xf32> to vector<8x16xf32>
    %1652 = vector.shape_cast %1628 : vector<8x16xf32> to vector<1x1x8x16xf32>
    tpu.vector_store %arg4[%c0_212, %c7_213, %c0_214, %c0_215], %1652 {strides = array<i32>} : memref<1x8x8x16xf32, #tpu.memory_space<vmem>>, vector<1x1x8x16xf32>,
    return
  }
  func.func @transform_0(%arg0: i32, %arg1: i32) -> i32 {
    %c0_i32 = arith.constant 0 : i32
    %c0_i32_0 = arith.constant 0 : i32
    return %c0_i32 : i32
  }
  func.func @transform_1(%arg0: i32, %arg1: i32) -> (i32, i32, i32, i32) {
    %c0_i32 = arith.constant 0 : i32
    %c0_i32_0 = arith.constant 0 : i32
    %c0_i32_1 = arith.constant 0 : i32
    %c0_i32_2 = arith.constant 0 : i32
    return %arg0, %c0_i32, %c0_i32_0, %c0_i32_1 : i32, i32, i32, i32
  }
  func.func @transform_2(%arg0: i32, %arg1: i32) -> (i32, i32, i32, i32) {
    %c0_i32 = arith.constant 0 : i32
    %c0_i32_0 = arith.constant 0 : i32
    %c0_i32_1 = arith.constant 0 : i32
    return %arg0, %c0_i32, %arg1, %c0_i32_0 : i32, i32, i32, i32
  }
}

</mosaic_0001>

<llo_original>
// kernel: _lambda_.1
$region0: #{_lambda_.1}
  #allocation0 [shape = 'u32[]', space=smem, size = 0x4, offset = 0x4, fixed_abs, tag = 'smem constant byte address 0x4 - core index']
  #allocation1 [shape = 'u32[72,128]{1,0:T(1,128)}', space=vmem, size = 0x9000, scoped, tag = 'internal scratch']
  %s0 = inlined_call_operand.vmem [shape: f32[360], index: 0, kind: input, shape index: {}]
  %s1 = inlined_call_operand.vmem [shape: f32[2,5,18,18], index: 1, kind: input, shape index: {}]
  %s2 = inlined_call_operand.hbm [shape: f32[2,8,16,16], index: 2, kind: output, shape index: {}]
  %s3 = sld [smem:[#allocation0]]
  $region45: #{_lambda_.1} parent=0
    _
  %s5 = ssub.s32 1, %s3
  %s6 = scalar_select 0, %s5, %s3
  $region1: #{_lambda_.1} parent=0
    #allocation2 [shape = 'u8[1536]{0}', space=smem, size = 0x600, scoped, tag = 'input window, operand 0, single buffered']
    #allocation3 [shape = 's32[2]{0}', space=sflag, size = 0x8, scoped, tag = 'scoped memory for _lambda_.1']
    #allocation4 [shape = 's32[2]{0}', space=sflag, size = 0x8, scoped, tag = 'scoped memory for _lambda_.1']
    #allocation5 [shape = 'u8[65536]{0}', space=vmem, size = 0x10000, scoped, tag = 'output window, operand 0']
    %7 = vsyncpa [#allocation4], 0
    %8 = vsyncpa [#allocation3], 0
    %s9 = scalar_lea.sflag [#allocation3], 1
    %10 = vsyncpa %s9, 0
    loop: start=0, step=1, limit=6
    $region2: #{_lambda_.1} parent=1 // loop_pre_header
      _
    $region3: #{_lambda_.1} parent=1 // loop_header
      %s12 = sphi 0, %s16
      %p13 = scmp.ge.s32.totalorder %s12, 6
      %s19 = sphi 0, %s31
      %s20 = sphi 0, %s27
      %s21 = sphi 0, %s19
      %s22 = sphi 0, %s20
      %s23 = sphi 0, %s21
      %s24 = sphi 0, %s22
      %s32 = sphi 0, %s32
      %s34 = sphi 0, %s32
      %s35 = sphi 0, %s34
      %s49 = sphi 0, %s35
      %s55 = sphi 0, %s57
      %s58 = sphi 0, %s55
      %s59 = sphi 0, %s58
      %s75 = sphi 0, %s59
      %s83 = sphi 0, %s85
      %s86 = sphi 0, %s83
      %s87 = sphi 0, %s86
      %s103 = sphi 0, %s87
    $region4: #{_lambda_.1} parent=1 // loop_header_branch
      %15 = sbr.rel (%p13) target = $region8
    $region5: #{_lambda_.1} parent=1 // loop_body
      %s17 = ssub.s32 %s12, 1
      %s18 = ssub.s32 %s12, 2
      %s25 = sadd.s32 1, %s20
      %p26 = scmp.ge.s32.totalorder %s25, 2
      %s27 = scalar_select %p26, 0, %s25
      %s28 = sadd.s32 1, %s19
      %s29 = scalar_select %p26, %s28, %s19
      %p30 = scmp.ge.s32.totalorder %s29, 2
      %s31 = scalar_select %p30, 0, %s29
      %s33 = sadd.s32 %s32, 1
      %p36 = scmp.eq.s32.totalorder %s12, 3
      %p37 = scmp.ne.s32.totalorder %s32, %s34
      %p38 = scmp.eq.s32.totalorder %s12, 0
      %p39 = por %p37, %p38
      %p40 = scmp.ne.s32.totalorder %s32, %s34
      %p41 = scmp.eq.s32.totalorder %s17, 3
      %p42 = por %p40, %p41
      %p43 = scmp.ne.s32.totalorder %s34, %s35
      %p44 = scmp.eq.s32.totalorder %s17, 0
      %p45 = por %p43, %p44
      %p46 = scmp.ne.s32.totalorder %s34, %s35
      %p47 = scmp.eq.s32.totalorder %s18, 3
      %p48 = por %p46, %p47
      %p50 = scmp.ne.s32.totalorder %s35, %s49
      %p51 = scmp.eq.s32.totalorder %s18, 0
      %p52 = por %p50, %p51
      %s53 = ssub.s32 %s19, %s31
      %p54 = scmp.eq.s32.totalorder %s53, 0
      %s56 = sadd.s32 %s55, 1
      %s57 = scalar_select %p54, %s55, %s56
      %p60 = pneg %p54
      %p61 = scmp.eq.s32.totalorder %s12, 3
      %p62 = por %p60, %p61
      %p63 = scmp.ne.s32.totalorder %s55, %s58
      %p64 = scmp.eq.s32.totalorder %s12, 0
      %p65 = por %p63, %p64
      %p66 = scmp.ne.s32.totalorder %s55, %s58
      %p67 = scmp.eq.s32.totalorder %s17, 3
      %p68 = por %p66, %p67
      %p69 = scmp.ne.s32.totalorder %s58, %s59
      %p70 = scmp.eq.s32.totalorder %s17, 0
      %p71 = por %p69, %p70
      %p72 = scmp.ne.s32.totalorder %s58, %s59
      %p73 = scmp.eq.s32.totalorder %s18, 3
      %p74 = por %p72, %p73
      %p76 = scmp.ne.s32.totalorder %s59, %s75
      %p77 = scmp.eq.s32.totalorder %s18, 0
      %p78 = por %p76, %p77
      %s79 = ssub.s32 %s19, %s31
      %s80 = ssub.s32 %s20, %s27
      %s81 = sor.u32 %s79, %s80
      %p82 = scmp.eq.s32.totalorder %s81, 0
      %s84 = sadd.s32 %s83, 1
      %s85 = scalar_select %p82, %s83, %s84
      %p88 = pneg %p82
      %p89 = scmp.eq.s32.totalorder %s12, 3
      %p90 = por %p88, %p89
      %p91 = scmp.ne.s32.totalorder %s83, %s86
      %p92 = scmp.eq.s32.totalorder %s12, 0
      %p93 = por %p91, %p92
      %p94 = scmp.ne.s32.totalorder %s83, %s86
      %p95 = scmp.eq.s32.totalorder %s17, 3
      %p96 = por %p94, %p95
      %p97 = scmp.ne.s32.totalorder %s86, %s87
      %p98 = scmp.eq.s32.totalorder %s17, 0
      %p99 = por %p97, %p98
      %p100 = scmp.ne.s32.totalorder %s86, %s87
      %p101 = scmp.eq.s32.totalorder %s18, 3
      %p102 = por %p100, %p101
      %p104 = scmp.ne.s32.totalorder %s87, %s103
      %p105 = scmp.eq.s32.totalorder %s18, 0
      %p106 = por %p104, %p105
      %p107 = scmp.le.s32.totalorder 1, %s12
      %p108 = scmp.lt.s32.totalorder %s12, 5
      %p109 = pnand %p107, %p108
      %p110 = pneg %p109
      // Predicated region
      $region9: #{_lambda_.1} parent=5 // pred_check
        _
      $region10: #{_lambda_.1} parent=5 // pred_check_branch
        %112 = sbr.rel (%p109) target = $region12
      $region11: #{_lambda_.1} parent=5 // pred_region
        %s113 = ssub.s32 %s12, 1
        // Predicated region
        $region13: #{_lambda_.1} parent=11 // pred_check
          %p114 = pneg %p45
        $region14: #{_lambda_.1} parent=11 // pred_check_branch
          %116 = sbr.rel (%p114) target = $region16
        $region15: #{_lambda_.1} parent=11 // pred_region
          %118 = vsyncadd [#allocation4], 0
          %s120 = sshll.u32 %s0, 4
          %s121 = int_to_ptr.vmem [resolvable:$true] %s120
          %123 = dma.vmem_to_smem %s121, 48, [#allocation2], [#allocation4]
        $region16: #{_lambda_.1} parent=11 // pred_fallthru
          _
      $region12: #{_lambda_.1} parent=5 // pred_fallthru
        _
      %p124 = scmp.lt.s32.totalorder %s12, 4
      // Predicated region
      $region17: #{_lambda_.1} parent=5 // pred_check
        %p125 = pneg %p124
      $region18: #{_lambda_.1} parent=5 // pred_check_branch
        %127 = sbr.rel (%p125) target = $region20
      $region19: #{_lambda_.1} parent=5 // pred_region
        // Predicated region
        $region21: #{_lambda_.1} parent=19 // pred_check
          %p128 = pneg %p65
        $region22: #{_lambda_.1} parent=19 // pred_check_branch
          %130 = sbr.rel (%p128) target = $region24
        $region23: #{_lambda_.1} parent=19 // pred_region
          %p131 = scmp.lt.s32.totalorder %s19, 1
          %s132 = scalar_select %p131, %s19, 1
          %s133 = smul.addr %s132, 15
          %s134 = smul.addr %s133, 8
          %s135 = scalar_lea.vmem %s1, %s134
        $region24: #{_lambda_.1} parent=19 // pred_fallthru
          _
      $region20: #{_lambda_.1} parent=5 // pred_fallthru
        _
      %p136 = scmp.le.s32.totalorder 1, %s12
      %p137 = scmp.lt.s32.totalorder %s12, 5
      %p138 = pnand %p136, %p137
      %p139 = pneg %p138
      // Predicated region
      $region25: #{_lambda_.1} parent=5 // pred_check
        _
      $region26: #{_lambda_.1} parent=5 // pred_check_branch
        %141 = sbr.rel (%p138) target = $region28
      $region27: #{_lambda_.1} parent=5 // pred_region
        %s142 = ssub.s32 %s12, 1
        // Predicated region
        $region29: #{_lambda_.1} parent=27 // pred_check
          %p143 = pneg %p45
        $region30: #{_lambda_.1} parent=27 // pred_check_branch
          %145 = sbr.rel (%p143) target = $region32
        $region31: #{_lambda_.1} parent=27 // pred_region
          %147 = dma.done [#allocation4], 48
        $region32: #{_lambda_.1} parent=27 // pred_fallthru
          _
        %148 = sfence
        %p149 = pneg %p45
        %p150 = pneg %p42
        %p151 = scmp.lt.s32.totalorder %s21, 1
        %s152 = scalar_select %p151, %s21, 1
        %s153 = smul.addr %s152, 15
        %s154 = smul.addr %s153, 8
        %s155 = scalar_lea.vmem %s1, %s154
        %p156 = pneg %p71
        %p157 = pneg %p68
        %p158 = pneg %p99
        %p159 = pneg %p96
        %s160 = sand.u32 %s86, 1
        %s161 = scalar_lea.sflag [#allocation3], %s160
        %s162 = sand.u32 %s86, 1
        %s163 = smul.addr %s162, 64
        %s164 = scalar_lea.vmem [#allocation5], %s163
        %p165 = scmp.lt.s32.totalorder %s21, 1
        %s166 = scalar_select %p165, %s21, 1
        %s167 = smul.addr %s166, 15
        %s168 = smul.addr %s167, 8
        %s169 = scalar_lea.vmem %s1, %s168
        %s170 = smul.u32 %s22, 8
        %s171 = scalar_lea.vmem %s169, %s170
        %v172 = vld [vmem:[%s171] sm:$0xff]
        %s173 = sld [smem:[#allocation2]]
        %v174 = vstv %s173
        %v175 = vmul.f32 %v174, %v172
        %v176 = vadd.f32 %v175, 0.0
        %s177 = sld [smem:[#allocation2 + $0x1]]
        %v178 = vstv %s177
        %v179 = vmul.f32 %v178, %v172
        %v180 = vadd.f32 %v179, 0.0
        %s181 = sld [smem:[#allocation2 + $0x2]]
        %v182 = vstv %s181
        %v183 = vmul.f32 %v182, %v172
        %v184 = vadd.f32 %v183, 0.0
        %s185 = sld [smem:[#allocation2 + $0x3]]
        %v186 = vstv %s185
        %v187 = vmul.f32 %v186, %v172
        %v188 = vadd.f32 %v187, 0.0
        %s189 = sld [smem:[#allocation2 + $0x4]]
        %v190 = vstv %s189
        %v191 = vmul.f32 %v190, %v172
        %v192 = vadd.f32 %v191, 0.0
        %s193 = sld [smem:[#allocation2 + $0x5]]
        %v194 = vstv %s193
        %v195 = vmul.f32 %v194, %v172
        %v196 = vadd.f32 %v195, 0.0
        %s197 = sld [smem:[#allocation2 + $0x6]]
        %v198 = vstv %s197
        %v199 = vmul.f32 %v198, %v172
        %v200 = vadd.f32 %v199, 0.0
        %s201 = sld [smem:[#allocation2 + $0x7]]
        %v202 = vstv %s201
        %v203 = vmul.f32 %v202, %v172
        %v204 = vadd.f32 %v203, 0.0
        %s205 = sld [smem:[#allocation2 + $0x28]]
        %v206 = vstv %s205
        %v207 = vmul.f32 %v206, %v172
        %209 = vrot.lane.b32.xlu0 %v207, 127
        %v210 = vpop.permute.xlu0 %209
        %v212 = vadd.f32 %v176, %v210
        %s213 = sld [smem:[#allocation2 + $0x29]]
        %v214 = vstv %s213
        %v215 = vmul.f32 %v214, %v172
        %217 = vrot.lane.b32.xlu0 %v215, 127
        %v218 = vpop.permute.xlu0 %217
        %v220 = vadd.f32 %v180, %v218
        %s221 = sld [smem:[#allocation2 + $0x2a]]
        %v222 = vstv %s221
        %v223 = vmul.f32 %v222, %v172
        %225 = vrot.lane.b32.xlu0 %v223, 127
        %v226 = vpop.permute.xlu0 %225
        %v228 = vadd.f32 %v184, %v226
        %s229 = sld [smem:[#allocation2 + $0x2b]]
        %v230 = vstv %s229
        %v231 = vmul.f32 %v230, %v172
        %233 = vrot.lane.b32.xlu0 %v231, 127
        %v234 = vpop.permute.xlu0 %233
        %v236 = vadd.f32 %v188, %v234
        %s237 = sld [smem:[#allocation2 + $0x2c]]
        %v238 = vstv %s237
        %v239 = vmul.f32 %v238, %v172
        %241 = vrot.lane.b32.xlu0 %v239, 127
        %v242 = vpop.permute.xlu0 %241
        %v244 = vadd.f32 %v192, %v242
        %s245 = sld [smem:[#allocation2 + $0x2d]]
        %v246 = vstv %s245
        %v247 = vmul.f32 %v246, %v172
        %249 = vrot.lane.b32.xlu0 %v247, 127
        %v250 = vpop.permute.xlu0 %249
        %v252 = vadd.f32 %v196, %v250
        %s253 = sld [smem:[#allocation2 + $0x2e]]
        %v254 = vstv %s253
        %v255 = vmul.f32 %v254, %v172
        %257 = vrot.lane.b32.xlu0 %v255, 127
        %v258 = vpop.permute.xlu0 %257
        %v260 = vadd.f32 %v200, %v258
        %s261 = sld [smem:[#allocation2 + $0x2f]]
        %v262 = vstv %s261
        %v263 = vmul.f32 %v262, %v172
        %265 = vrot.lane.b32.xlu0 %v263, 127
        %v266 = vpop.permute.xlu0 %265
        %v268 = vadd.f32 %v204, %v266
        %s269 = sld [smem:[#allocation2 + $0x50]]
        %v270 = vstv %s269
        %v271 = vmul.f32 %v270, %v172
        %273 = vrot.lane.b32.xlu0 %v271, 126
        %v274 = vpop.permute.xlu0 %273
        %v276 = vadd.f32 %v212, %v274
        %s277 = sld [smem:[#allocation2 + $0x51]]
        %v278 = vstv %s277
        %v279 = vmul.f32 %v278, %v172
        %281 = vrot.lane.b32.xlu0 %v279, 126
        %v282 = vpop.permute.xlu0 %281
        %v284 = vadd.f32 %v220, %v282
        %s285 = sld [smem:[#allocation2 + $0x52]]
        %v286 = vstv %s285
        %v287 = vmul.f32 %v286, %v172
        %289 = vrot.lane.b32.xlu0 %v287, 126
        %v290 = vpop.permute.xlu0 %289
        %v292 = vadd.f32 %v228, %v290
        %s293 = sld [smem:[#allocation2 + $0x53]]
        %v294 = vstv %s293
        %v295 = vmul.f32 %v294, %v172
        %297 = vrot.lane.b32.xlu0 %v295, 126
        %v298 = vpop.permute.xlu0 %297
        %v300 = vadd.f32 %v236, %v298
        %s301 = sld [smem:[#allocation2 + $0x54]]
        %v302 = vstv %s301
        %v303 = vmul.f32 %v302, %v172
        %305 = vrot.lane.b32.xlu0 %v303, 126
        %v306 = vpop.permute.xlu0 %305
        %v308 = vadd.f32 %v244, %v306
        %s309 = sld [smem:[#allocation2 + $0x55]]
        %v310 = vstv %s309
        %v311 = vmul.f32 %v310, %v172
        %313 = vrot.lane.b32.xlu0 %v311, 126
        %v314 = vpop.permute.xlu0 %313
        %v316 = vadd.f32 %v252, %v314
        %s317 = sld [smem:[#allocation2 + $0x56]]
        %v318 = vstv %s317
        %v319 = vmul.f32 %v318, %v172
        %321 = vrot.lane.b32.xlu0 %v319, 126
        %v322 = vpop.permute.xlu0 %321
        %v324 = vadd.f32 %v260, %v322
        %s325 = sld [smem:[#allocation2 + $0x57]]
        %v326 = vstv %s325
        %v327 = vmul.f32 %v326, %v172
        %329 = vrot.lane.b32.xlu0 %v327, 126
        %v330 = vpop.permute.xlu0 %329
        %v332 = vadd.f32 %v268, %v330
        %s333 = sadd.s32 %s170, 1
        %s334 = scalar_lea.vmem %s169, %s333
        %v335 = vld [vmem:[%s334] sm:$0xff]
        %s336 = sld [smem:[#allocation2 + $0x78]]
        %v337 = vstv %s336
        %v338 = vmul.f32 %v337, %v335
        %v339 = vadd.f32 %v276, %v338
        %s340 = sld [smem:[#allocation2 + $0x79]]
        %v341 = vstv %s340
        %v342 = vmul.f32 %v341, %v335
        %v343 = vadd.f32 %v284, %v342
        %s344 = sld [smem:[#allocation2 + $0x7a]]
        %v345 = vstv %s344
        %v346 = vmul.f32 %v345, %v335
        %v347 = vadd.f32 %v292, %v346
        %s348 = sld [smem:[#allocation2 + $0x7b]]
        %v349 = vstv %s348
        %v350 = vmul.f32 %v349, %v335
        %v351 = vadd.f32 %v300, %v350
        %s352 = sld [smem:[#allocation2 + $0x7c]]
        %v353 = vstv %s352
        %v354 = vmul.f32 %v353, %v335
        %v355 = vadd.f32 %v308, %v354
        %s356 = sld [smem:[#allocation2 + $0x7d]]
        %v357 = vstv %s356
        %v358 = vmul.f32 %v357, %v335
        %v359 = vadd.f32 %v316, %v358
        %s360 = sld [smem:[#allocation2 + $0x7e]]
        %v361 = vstv %s360
        %v362 = vmul.f32 %v361, %v335
        %v363 = vadd.f32 %v324, %v362
        %s364 = sld [smem:[#allocation2 + $0x7f]]
        %v365 = vstv %s364
        %v366 = vmul.f32 %v365, %v335
        %v367 = vadd.f32 %v332, %v366
        %s368 = sld [smem:[#allocation2 + $0xa0]]
        %v369 = vstv %s368
        %v370 = vmul.f32 %v369, %v335
        %372 = vrot.lane.b32.xlu0 %v370, 127
        %v373 = vpop.permute.xlu0 %372
        %v375 = vadd.f32 %v339, %v373
        %s376 = sld [smem:[#allocation2 + $0xa1]]
        %v377 = vstv %s376
        %v378 = vmul.f32 %v377, %v335
        %380 = vrot.lane.b32.xlu0 %v378, 127
        %v381 = vpop.permute.xlu0 %380
        %v383 = vadd.f32 %v343, %v381
        %s384 = sld [smem:[#allocation2 + $0xa2]]
        %v385 = vstv %s384
        %v386 = vmul.f32 %v385, %v335
        %388 = vrot.lane.b32.xlu0 %v386, 127
        %v389 = vpop.permute.xlu0 %388
        %v391 = vadd.f32 %v347, %v389
        %s392 = sld [smem:[#allocation2 + $0xa3]]
        %v393 = vstv %s392
        %v394 = vmul.f32 %v393, %v335
        %396 = vrot.lane.b32.xlu0 %v394, 127
        %v397 = vpop.permute.xlu0 %396
        %v399 = vadd.f32 %v351, %v397
        %s400 = sld [smem:[#allocation2 + $0xa4]]
        %v401 = vstv %s400
        %v402 = vmul.f32 %v401, %v335
        %404 = vrot.lane.b32.xlu0 %v402, 127
        %v405 = vpop.permute.xlu0 %404
        %v407 = vadd.f32 %v355, %v405
        %s408 = sld [smem:[#allocation2 + $0xa5]]
        %v409 = vstv %s408
        %v410 = vmul.f32 %v409, %v335
        %412 = vrot.lane.b32.xlu0 %v410, 127
        %v413 = vpop.permute.xlu0 %412
        %v415 = vadd.f32 %v359, %v413
        %s416 = sld [smem:[#allocation2 + $0xa6]]
        %v417 = vstv %s416
        %v418 = vmul.f32 %v417, %v335
        %420 = vrot.lane.b32.xlu0 %v418, 127
        %v421 = vpop.permute.xlu0 %420
        %v423 = vadd.f32 %v363, %v421
        %s424 = sld [smem:[#allocation2 + $0xa7]]
        %v425 = vstv %s424
        %v426 = vmul.f32 %v425, %v335
        %428 = vrot.lane.b32.xlu0 %v426, 127
        %v429 = vpop.permute.xlu0 %428
        %v431 = vadd.f32 %v367, %v429
        %s432 = sld [smem:[#allocation2 + $0xc8]]
        %v433 = vstv %s432
        %v434 = vmul.f32 %v433, %v335
        %436 = vrot.lane.b32.xlu0 %v434, 126
        %v437 = vpop.permute.xlu0 %436
        %v439 = vadd.f32 %v375, %v437
        %s440 = sld [smem:[#allocation2 + $0xc9]]
        %v441 = vstv %s440
        %v442 = vmul.f32 %v441, %v335
        %444 = vrot.lane.b32.xlu0 %v442, 126
        %v445 = vpop.permute.xlu0 %444
        %v447 = vadd.f32 %v383, %v445
        %s448 = sld [smem:[#allocation2 + $0xca]]
        %v449 = vstv %s448
        %v450 = vmul.f32 %v449, %v335
        %452 = vrot.lane.b32.xlu0 %v450, 126
        %v453 = vpop.permute.xlu0 %452
        %v455 = vadd.f32 %v391, %v453
        %s456 = sld [smem:[#allocation2 + $0xcb]]
        %v457 = vstv %s456
        %v458 = vmul.f32 %v457, %v335
        %460 = vrot.lane.b32.xlu0 %v458, 126
        %v461 = vpop.permute.xlu0 %460
        %v463 = vadd.f32 %v399, %v461
        %s464 = sld [smem:[#allocation2 + $0xcc]]
        %v465 = vstv %s464
        %v466 = vmul.f32 %v465, %v335
        %468 = vrot.lane.b32.xlu0 %v466, 126
        %v469 = vpop.permute.xlu0 %468
        %v471 = vadd.f32 %v407, %v469
        %s472 = sld [smem:[#allocation2 + $0xcd]]
        %v473 = vstv %s472
        %v474 = vmul.f32 %v473, %v335
        %476 = vrot.lane.b32.xlu0 %v474, 126
        %v477 = vpop.permute.xlu0 %476
        %v479 = vadd.f32 %v415, %v477
        %s480 = sld [smem:[#allocation2 + $0xce]]
        %v481 = vstv %s480
        %v482 = vmul.f32 %v481, %v335
        %484 = vrot.lane.b32.xlu0 %v482, 126
        %v485 = vpop.permute.xlu0 %484
        %v487 = vadd.f32 %v423, %v485
        %s488 = sld [smem:[#allocation2 + $0xcf]]
        %v489 = vstv %s488
        %v490 = vmul.f32 %v489, %v335
        %492 = vrot.lane.b32.xlu0 %v490, 126
        %v493 = vpop.permute.xlu0 %492
        %v495 = vadd.f32 %v431, %v493
        %s496 = sadd.s32 %s170, 2
        %s497 = scalar_lea.vmem %s169, %s496
        %v498 = vld [vmem:[%s497] sm:$0xff]
        %s499 = sld [smem:[#allocation2 + $0xf0]]
        %v500 = vstv %s499
        %v501 = vmul.f32 %v500, %v498
        %v502 = vadd.f32 %v439, %v501
        %s503 = sld [smem:[#allocation2 + $0xf1]]
        %v504 = vstv %s503
        %v505 = vmul.f32 %v504, %v498
        %v506 = vadd.f32 %v447, %v505
        %s507 = sld [smem:[#allocation2 + $0xf2]]
        %v508 = vstv %s507
        %v509 = vmul.f32 %v508, %v498
        %v510 = vadd.f32 %v455, %v509
        %s511 = sld [smem:[#allocation2 + $0xf3]]
        %v512 = vstv %s511
        %v513 = vmul.f32 %v512, %v498
        %v514 = vadd.f32 %v463, %v513
        %s515 = sld [smem:[#allocation2 + $0xf4]]
        %v516 = vstv %s515
        %v517 = vmul.f32 %v516, %v498
        %v518 = vadd.f32 %v471, %v517
        %s519 = sld [smem:[#allocation2 + $0xf5]]
        %v520 = vstv %s519
        %v521 = vmul.f32 %v520, %v498
        %v522 = vadd.f32 %v479, %v521
        %s523 = sld [smem:[#allocation2 + $0xf6]]
        %v524 = vstv %s523
        %v525 = vmul.f32 %v524, %v498
        %v526 = vadd.f32 %v487, %v525
        %s527 = sld [smem:[#allocation2 + $0xf7]]
        %v528 = vstv %s527
        %v529 = vmul.f32 %v528, %v498
        %v530 = vadd.f32 %v495, %v529
        %s531 = sld [smem:[#allocation2 + $0x118]]
        %v532 = vstv %s531
        %v533 = vmul.f32 %v532, %v498
        %535 = vrot.lane.b32.xlu0 %v533, 127
        %v536 = vpop.permute.xlu0 %535
        %v538 = vadd.f32 %v502, %v536
        %s539 = sld [smem:[#allocation2 + $0x119]]
        %v540 = vstv %s539
        %v541 = vmul.f32 %v540, %v498
        %543 = vrot.lane.b32.xlu0 %v541, 127
        %v544 = vpop.permute.xlu0 %543
        %v546 = vadd.f32 %v506, %v544
        %s547 = sld [smem:[#allocation2 + $0x11a]]
        %v548 = vstv %s547
        %v549 = vmul.f32 %v548, %v498
        %551 = vrot.lane.b32.xlu0 %v549, 127
        %v552 = vpop.permute.xlu0 %551
        %v554 = vadd.f32 %v510, %v552
        %s555 = sld [smem:[#allocation2 + $0x11b]]
        %v556 = vstv %s555
        %v557 = vmul.f32 %v556, %v498
        %559 = vrot.lane.b32.xlu0 %v557, 127
        %v560 = vpop.permute.xlu0 %559
        %v562 = vadd.f32 %v514, %v560
        %s563 = sld [smem:[#allocation2 + $0x11c]]
        %v564 = vstv %s563
        %v565 = vmul.f32 %v564, %v498
        %567 = vrot.lane.b32.xlu0 %v565, 127
        %v568 = vpop.permute.xlu0 %567
        %v570 = vadd.f32 %v518, %v568
        %s571 = sld [smem:[#allocation2 + $0x11d]]
        %v572 = vstv %s571
        %v573 = vmul.f32 %v572, %v498
        %575 = vrot.lane.b32.xlu0 %v573, 127
        %v576 = vpop.permute.xlu0 %575
        %v578 = vadd.f32 %v522, %v576
        %s579 = sld [smem:[#allocation2 + $0x11e]]
        %v580 = vstv %s579
        %v581 = vmul.f32 %v580, %v498
        %583 = vrot.lane.b32.xlu0 %v581, 127
        %v584 = vpop.permute.xlu0 %583
        %v586 = vadd.f32 %v526, %v584
        %s587 = sld [smem:[#allocation2 + $0x11f]]
        %v588 = vstv %s587
        %v589 = vmul.f32 %v588, %v498
        %591 = vrot.lane.b32.xlu0 %v589, 127
        %v592 = vpop.permute.xlu0 %591
        %v594 = vadd.f32 %v530, %v592
        %s595 = sld [smem:[#allocation2 + $0x140]]
        %v596 = vstv %s595
        %v597 = vmul.f32 %v596, %v498
        %599 = vrot.lane.b32.xlu0 %v597, 126
        %v600 = vpop.permute.xlu0 %599
        %v602 = vadd.f32 %v538, %v600
        %s603 = sld [smem:[#allocation2 + $0x141]]
        %v604 = vstv %s603
        %v605 = vmul.f32 %v604, %v498
        %607 = vrot.lane.b32.xlu0 %v605, 126
        %v608 = vpop.permute.xlu0 %607
        %v610 = vadd.f32 %v546, %v608
        %s611 = sld [smem:[#allocation2 + $0x142]]
        %v612 = vstv %s611
        %v613 = vmul.f32 %v612, %v498
        %615 = vrot.lane.b32.xlu0 %v613, 126
        %v616 = vpop.permute.xlu0 %615
        %v618 = vadd.f32 %v554, %v616
        %s619 = sld [smem:[#allocation2 + $0x143]]
        %v620 = vstv %s619
        %v621 = vmul.f32 %v620, %v498
        %623 = vrot.lane.b32.xlu0 %v621, 126
        %v624 = vpop.permute.xlu0 %623
        %v626 = vadd.f32 %v562, %v624
        %s627 = sld [smem:[#allocation2 + $0x144]]
        %v628 = vstv %s627
        %v629 = vmul.f32 %v628, %v498
        %631 = vrot.lane.b32.xlu0 %v629, 126
        %v632 = vpop.permute.xlu0 %631
        %v634 = vadd.f32 %v570, %v632
        %s635 = sld [smem:[#allocation2 + $0x145]]
        %v636 = vstv %s635
        %v637 = vmul.f32 %v636, %v498
        %639 = vrot.lane.b32.xlu0 %v637, 126
        %v640 = vpop.permute.xlu0 %639
        %v642 = vadd.f32 %v578, %v640
        %s643 = sld [smem:[#allocation2 + $0x146]]
        %v644 = vstv %s643
        %v645 = vmul.f32 %v644, %v498
        %647 = vrot.lane.b32.xlu0 %v645, 126
        %v648 = vpop.permute.xlu0 %647
        %v650 = vadd.f32 %v586, %v648
        %s651 = sld [smem:[#allocation2 + $0x147]]
        %v652 = vstv %s651
        %v653 = vmul.f32 %v652, %v498
        %655 = vrot.lane.b32.xlu0 %v653, 126
        %v656 = vpop.permute.xlu0 %655
        %v658 = vadd.f32 %v594, %v656
        %s659 = sadd.s32 %s170, 24
        %s660 = scalar_lea.vmem %s169, %s659
        %v661 = vld [vmem:[%s660] sm:$0xff]
        %s662 = sld [smem:[#allocation2 + $0x8]]
        %v663 = vstv %s662
        %v664 = vmul.f32 %v663, %v661
        %v665 = vadd.f32 %v602, %v664
        %s666 = sld [smem:[#allocation2 + $0x9]]
        %v667 = vstv %s666
        %v668 = vmul.f32 %v667, %v661
        %v669 = vadd.f32 %v610, %v668
        %s670 = sld [smem:[#allocation2 + $0xa]]
        %v671 = vstv %s670
        %v672 = vmul.f32 %v671, %v661
        %v673 = vadd.f32 %v618, %v672
        %s674 = sld [smem:[#allocation2 + $0xb]]
        %v675 = vstv %s674
        %v676 = vmul.f32 %v675, %v661
        %v677 = vadd.f32 %v626, %v676
        %s678 = sld [smem:[#allocation2 + $0xc]]
        %v679 = vstv %s678
        %v680 = vmul.f32 %v679, %v661
        %v681 = vadd.f32 %v634, %v680
        %s682 = sld [smem:[#allocation2 + $0xd]]
        %v683 = vstv %s682
        %v684 = vmul.f32 %v683, %v661
        %v685 = vadd.f32 %v642, %v684
        %s686 = sld [smem:[#allocation2 + $0xe]]
        %v687 = vstv %s686
        %v688 = vmul.f32 %v687, %v661
        %v689 = vadd.f32 %v650, %v688
        %s690 = sld [smem:[#allocation2 + $0xf]]
        %v691 = vstv %s690
        %v692 = vmul.f32 %v691, %v661
        %v693 = vadd.f32 %v658, %v692
        %s694 = sld [smem:[#allocation2 + $0x30]]
        %v695 = vstv %s694
        %v696 = vmul.f32 %v695, %v661
        %698 = vrot.lane.b32.xlu0 %v696, 127
        %v699 = vpop.permute.xlu0 %698
        %v701 = vadd.f32 %v665, %v699
        %s702 = sld [smem:[#allocation2 + $0x31]]
        %v703 = vstv %s702
        %v704 = vmul.f32 %v703, %v661
        %706 = vrot.lane.b32.xlu0 %v704, 127
        %v707 = vpop.permute.xlu0 %706
        %v709 = vadd.f32 %v669, %v707
        %s710 = sld [smem:[#allocation2 + $0x32]]
        %v711 = vstv %s710
        %v712 = vmul.f32 %v711, %v661
        %714 = vrot.lane.b32.xlu0 %v712, 127
        %v715 = vpop.permute.xlu0 %714
        %v717 = vadd.f32 %v673, %v715
        %s718 = sld [smem:[#allocation2 + $0x33]]
        %v719 = vstv %s718
        %v720 = vmul.f32 %v719, %v661
        %722 = vrot.lane.b32.xlu0 %v720, 127
        %v723 = vpop.permute.xlu0 %722
        %v725 = vadd.f32 %v677, %v723
        %s726 = sld [smem:[#allocation2 + $0x34]]
        %v727 = vstv %s726
        %v728 = vmul.f32 %v727, %v661
        %730 = vrot.lane.b32.xlu0 %v728, 127
        %v731 = vpop.permute.xlu0 %730
        %v733 = vadd.f32 %v681, %v731
        %s734 = sld [smem:[#allocation2 + $0x35]]
        %v735 = vstv %s734
        %v736 = vmul.f32 %v735, %v661
        %738 = vrot.lane.b32.xlu0 %v736, 127
        %v739 = vpop.permute.xlu0 %738
        %v741 = vadd.f32 %v685, %v739
        %s742 = sld [smem:[#allocation2 + $0x36]]
        %v743 = vstv %s742
        %v744 = vmul.f32 %v743, %v661
        %746 = vrot.lane.b32.xlu0 %v744, 127
        %v747 = vpop.permute.xlu0 %746
        %v749 = vadd.f32 %v689, %v747
        %s750 = sld [smem:[#allocation2 + $0x37]]
        %v751 = vstv %s750
        %v752 = vmul.f32 %v751, %v661
        %754 = vrot.lane.b32.xlu0 %v752, 127
        %v755 = vpop.permute.xlu0 %754
        %v757 = vadd.f32 %v693, %v755
        %s758 = sld [smem:[#allocation2 + $0x58]]
        %v759 = vstv %s758
        %v760 = vmul.f32 %v759, %v661
        %762 = vrot.lane.b32.xlu0 %v760, 126
        %v763 = vpop.permute.xlu0 %762
        %v765 = vadd.f32 %v701, %v763
        %s766 = sld [smem:[#allocation2 + $0x59]]
        %v767 = vstv %s766
        %v768 = vmul.f32 %v767, %v661
        %770 = vrot.lane.b32.xlu0 %v768, 126
        %v771 = vpop.permute.xlu0 %770
        %v773 = vadd.f32 %v709, %v771
        %s774 = sld [smem:[#allocation2 + $0x5a]]
        %v775 = vstv %s774
        %v776 = vmul.f32 %v775, %v661
        %778 = vrot.lane.b32.xlu0 %v776, 126
        %v779 = vpop.permute.xlu0 %778
        %v781 = vadd.f32 %v717, %v779
        %s782 = sld [smem:[#allocation2 + $0x5b]]
        %v783 = vstv %s782
        %v784 = vmul.f32 %v783, %v661
        %786 = vrot.lane.b32.xlu0 %v784, 126
        %v787 = vpop.permute.xlu0 %786
        %v789 = vadd.f32 %v725, %v787
        %s790 = sld [smem:[#allocation2 + $0x5c]]
        %v791 = vstv %s790
        %v792 = vmul.f32 %v791, %v661
        %794 = vrot.lane.b32.xlu0 %v792, 126
        %v795 = vpop.permute.xlu0 %794
        %v797 = vadd.f32 %v733, %v795
        %s798 = sld [smem:[#allocation2 + $0x5d]]
        %v799 = vstv %s798
        %v800 = vmul.f32 %v799, %v661
        %802 = vrot.lane.b32.xlu0 %v800, 126
        %v803 = vpop.permute.xlu0 %802
        %v805 = vadd.f32 %v741, %v803
        %s806 = sld [smem:[#allocation2 + $0x5e]]
        %v807 = vstv %s806
        %v808 = vmul.f32 %v807, %v661
        %810 = vrot.lane.b32.xlu0 %v808, 126
        %v811 = vpop.permute.xlu0 %810
        %v813 = vadd.f32 %v749, %v811
        %s814 = sld [smem:[#allocation2 + $0x5f]]
        %v815 = vstv %s814
        %v816 = vmul.f32 %v815, %v661
        %818 = vrot.lane.b32.xlu0 %v816, 126
        %v819 = vpop.permute.xlu0 %818
        %v821 = vadd.f32 %v757, %v819
        %s822 = sadd.s32 %s333, 24
        %s823 = scalar_lea.vmem %s169, %s822
        %v824 = vld [vmem:[%s823] sm:$0xff]
        %s825 = sld [smem:[#allocation2 + $0x80]]
        %v826 = vstv %s825
        %v827 = vmul.f32 %v826, %v824
        %v828 = vadd.f32 %v765, %v827
        %s829 = sld [smem:[#allocation2 + $0x81]]
        %v830 = vstv %s829
        %v831 = vmul.f32 %v830, %v824
        %v832 = vadd.f32 %v773, %v831
        %s833 = sld [smem:[#allocation2 + $0x82]]
        %v834 = vstv %s833
        %v835 = vmul.f32 %v834, %v824
        %v836 = vadd.f32 %v781, %v835
        %s837 = sld [smem:[#allocation2 + $0x83]]
        %v838 = vstv %s837
        %v839 = vmul.f32 %v838, %v824
        %v840 = vadd.f32 %v789, %v839
        %s841 = sld [smem:[#allocation2 + $0x84]]
        %v842 = vstv %s841
        %v843 = vmul.f32 %v842, %v824
        %v844 = vadd.f32 %v797, %v843
        %s845 = sld [smem:[#allocation2 + $0x85]]
        %v846 = vstv %s845
        %v847 = vmul.f32 %v846, %v824
        %v848 = vadd.f32 %v805, %v847
        %s849 = sld [smem:[#allocation2 + $0x86]]
        %v850 = vstv %s849
        %v851 = vmul.f32 %v850, %v824
        %v852 = vadd.f32 %v813, %v851
        %s853 = sld [smem:[#allocation2 + $0x87]]
        %v854 = vstv %s853
        %v855 = vmul.f32 %v854, %v824
        %v856 = vadd.f32 %v821, %v855
        %s857 = sld [smem:[#allocation2 + $0xa8]]
        %v858 = vstv %s857
        %v859 = vmul.f32 %v858, %v824
        %861 = vrot.lane.b32.xlu0 %v859, 127
        %v862 = vpop.permute.xlu0 %861
        %v864 = vadd.f32 %v828, %v862
        %s865 = sld [smem:[#allocation2 + $0xa9]]
        %v866 = vstv %s865
        %v867 = vmul.f32 %v866, %v824
        %869 = vrot.lane.b32.xlu0 %v867, 127
        %v870 = vpop.permute.xlu0 %869
        %v872 = vadd.f32 %v832, %v870
        %s873 = sld [smem:[#allocation2 + $0xaa]]
        %v874 = vstv %s873
        %v875 = vmul.f32 %v874, %v824
        %877 = vrot.lane.b32.xlu0 %v875, 127
        %v878 = vpop.permute.xlu0 %877
        %v880 = vadd.f32 %v836, %v878
        %s881 = sld [smem:[#allocation2 + $0xab]]
        %v882 = vstv %s881
        %v883 = vmul.f32 %v882, %v824
        %885 = vrot.lane.b32.xlu0 %v883, 127
        %v886 = vpop.permute.xlu0 %885
        %v888 = vadd.f32 %v840, %v886
        %s889 = sld [smem:[#allocation2 + $0xac]]
        %v890 = vstv %s889
        %v891 = vmul.f32 %v890, %v824
        %893 = vrot.lane.b32.xlu0 %v891, 127
        %v894 = vpop.permute.xlu0 %893
        %v896 = vadd.f32 %v844, %v894
        %s897 = sld [smem:[#allocation2 + $0xad]]
        %v898 = vstv %s897
        %v899 = vmul.f32 %v898, %v824
        %901 = vrot.lane.b32.xlu0 %v899, 127
        %v902 = vpop.permute.xlu0 %901
        %v904 = vadd.f32 %v848, %v902
        %s905 = sld [smem:[#allocation2 + $0xae]]
        %v906 = vstv %s905
        %v907 = vmul.f32 %v906, %v824
        %909 = vrot.lane.b32.xlu0 %v907, 127
        %v910 = vpop.permute.xlu0 %909
        %v912 = vadd.f32 %v852, %v910
        %s913 = sld [smem:[#allocation2 + $0xaf]]
        %v914 = vstv %s913
        %v915 = vmul.f32 %v914, %v824
        %917 = vrot.lane.b32.xlu0 %v915, 127
        %v918 = vpop.permute.xlu0 %917
        %v920 = vadd.f32 %v856, %v918
        %s921 = sld [smem:[#allocation2 + $0xd0]]
        %v922 = vstv %s921
        %v923 = vmul.f32 %v922, %v824
        %925 = vrot.lane.b32.xlu0 %v923, 126
        %v926 = vpop.permute.xlu0 %925
        %v928 = vadd.f32 %v864, %v926
        %s929 = sld [smem:[#allocation2 + $0xd1]]
        %v930 = vstv %s929
        %v931 = vmul.f32 %v930, %v824
        %933 = vrot.lane.b32.xlu0 %v931, 126
        %v934 = vpop.permute.xlu0 %933
        %v936 = vadd.f32 %v872, %v934
        %s937 = sld [smem:[#allocation2 + $0xd2]]
        %v938 = vstv %s937
        %v939 = vmul.f32 %v938, %v824
        %941 = vrot.lane.b32.xlu0 %v939, 126
        %v942 = vpop.permute.xlu0 %941
        %v944 = vadd.f32 %v880, %v942
        %s945 = sld [smem:[#allocation2 + $0xd3]]
        %v946 = vstv %s945
        %v947 = vmul.f32 %v946, %v824
        %949 = vrot.lane.b32.xlu0 %v947, 126
        %v950 = vpop.permute.xlu0 %949
        %v952 = vadd.f32 %v888, %v950
        %s953 = sld [smem:[#allocation2 + $0xd4]]
        %v954 = vstv %s953
        %v955 = vmul.f32 %v954, %v824
        %957 = vrot.lane.b32.xlu0 %v955, 126
        %v958 = vpop.permute.xlu0 %957
        %v960 = vadd.f32 %v896, %v958
        %s961 = sld [smem:[#allocation2 + $0xd5]]
        %v962 = vstv %s961
        %v963 = vmul.f32 %v962, %v824
        %965 = vrot.lane.b32.xlu0 %v963, 126
        %v966 = vpop.permute.xlu0 %965
        %v968 = vadd.f32 %v904, %v966
        %s969 = sld [smem:[#allocation2 + $0xd6]]
        %v970 = vstv %s969
        %v971 = vmul.f32 %v970, %v824
        %973 = vrot.lane.b32.xlu0 %v971, 126
        %v974 = vpop.permute.xlu0 %973
        %v976 = vadd.f32 %v912, %v974
        %s977 = sld [smem:[#allocation2 + $0xd7]]
        %v978 = vstv %s977
        %v979 = vmul.f32 %v978, %v824
        %981 = vrot.lane.b32.xlu0 %v979, 126
        %v982 = vpop.permute.xlu0 %981
        %v984 = vadd.f32 %v920, %v982
        %s985 = sadd.s32 %s496, 24
        %s986 = scalar_lea.vmem %s169, %s985
        %v987 = vld [vmem:[%s986] sm:$0xff]
        %s988 = sld [smem:[#allocation2 + $0xf8]]
        %v989 = vstv %s988
        %v990 = vmul.f32 %v989, %v987
        %v991 = vadd.f32 %v928, %v990
        %s992 = sld [smem:[#allocation2 + $0xf9]]
        %v993 = vstv %s992
        %v994 = vmul.f32 %v993, %v987
        %v995 = vadd.f32 %v936, %v994
        %s996 = sld [smem:[#allocation2 + $0xfa]]
        %v997 = vstv %s996
        %v998 = vmul.f32 %v997, %v987
        %v999 = vadd.f32 %v944, %v998
        %s1000 = sld [smem:[#allocation2 + $0xfb]]
        %v1001 = vstv %s1000
        %v1002 = vmul.f32 %v1001, %v987
        %v1003 = vadd.f32 %v952, %v1002
        %s1004 = sld [smem:[#allocation2 + $0xfc]]
        %v1005 = vstv %s1004
        %v1006 = vmul.f32 %v1005, %v987
        %v1007 = vadd.f32 %v960, %v1006
        %s1008 = sld [smem:[#allocation2 + $0xfd]]
        %v1009 = vstv %s1008
        %v1010 = vmul.f32 %v1009, %v987
        %v1011 = vadd.f32 %v968, %v1010
        %s1012 = sld [smem:[#allocation2 + $0xfe]]
        %v1013 = vstv %s1012
        %v1014 = vmul.f32 %v1013, %v987
        %v1015 = vadd.f32 %v976, %v1014
        %s1016 = sld [smem:[#allocation2 + $0xff]]
        %v1017 = vstv %s1016
        %v1018 = vmul.f32 %v1017, %v987
        %v1019 = vadd.f32 %v984, %v1018
        %s1020 = sld [smem:[#allocation2 + $0x120]]
        %v1021 = vstv %s1020
        %v1022 = vmul.f32 %v1021, %v987
        %1024 = vrot.lane.b32.xlu0 %v1022, 127
        %v1025 = vpop.permute.xlu0 %1024
        %v1027 = vadd.f32 %v991, %v1025
        %s1028 = sld [smem:[#allocation2 + $0x121]]
        %v1029 = vstv %s1028
        %v1030 = vmul.f32 %v1029, %v987
        %1032 = vrot.lane.b32.xlu0 %v1030, 127
        %v1033 = vpop.permute.xlu0 %1032
        %v1035 = vadd.f32 %v995, %v1033
        %s1036 = sld [smem:[#allocation2 + $0x122]]
        %v1037 = vstv %s1036
        %v1038 = vmul.f32 %v1037, %v987
        %1040 = vrot.lane.b32.xlu0 %v1038, 127
        %v1041 = vpop.permute.xlu0 %1040
        %v1043 = vadd.f32 %v999, %v1041
        %s1044 = sld [smem:[#allocation2 + $0x123]]
        %v1045 = vstv %s1044
        %v1046 = vmul.f32 %v1045, %v987
        %1048 = vrot.lane.b32.xlu0 %v1046, 127
        %v1049 = vpop.permute.xlu0 %1048
        %v1051 = vadd.f32 %v1003, %v1049
        %s1052 = sld [smem:[#allocation2 + $0x124]]
        %v1053 = vstv %s1052
        %v1054 = vmul.f32 %v1053, %v987
        %1056 = vrot.lane.b32.xlu0 %v1054, 127
        %v1057 = vpop.permute.xlu0 %1056
        %v1059 = vadd.f32 %v1007, %v1057
        %s1060 = sld [smem:[#allocation2 + $0x125]]
        %v1061 = vstv %s1060
        %v1062 = vmul.f32 %v1061, %v987
        %1064 = vrot.lane.b32.xlu0 %v1062, 127
        %v1065 = vpop.permute.xlu0 %1064
        %v1067 = vadd.f32 %v1011, %v1065
        %s1068 = sld [smem:[#allocation2 + $0x126]]
        %v1069 = vstv %s1068
        %v1070 = vmul.f32 %v1069, %v987
        %1072 = vrot.lane.b32.xlu0 %v1070, 127
        %v1073 = vpop.permute.xlu0 %1072
        %v1075 = vadd.f32 %v1015, %v1073
        %s1076 = sld [smem:[#allocation2 + $0x127]]
        %v1077 = vstv %s1076
        %v1078 = vmul.f32 %v1077, %v987
        %1080 = vrot.lane.b32.xlu0 %v1078, 127
        %v1081 = vpop.permute.xlu0 %1080
        %v1083 = vadd.f32 %v1019, %v1081
        %s1084 = sld [smem:[#allocation2 + $0x148]]
        %v1085 = vstv %s1084
        %v1086 = vmul.f32 %v1085, %v987
        %1088 = vrot.lane.b32.xlu0 %v1086, 126
        %v1089 = vpop.permute.xlu0 %1088
        %v1091 = vadd.f32 %v1027, %v1089
        %s1092 = sld [smem:[#allocation2 + $0x149]]
        %v1093 = vstv %s1092
        %v1094 = vmul.f32 %v1093, %v987
        %1096 = vrot.lane.b32.xlu0 %v1094, 126
        %v1097 = vpop.permute.xlu0 %1096
        %v1099 = vadd.f32 %v1035, %v1097
        %s1100 = sld [smem:[#allocation2 + $0x14a]]
        %v1101 = vstv %s1100
        %v1102 = vmul.f32 %v1101, %v987
        %1104 = vrot.lane.b32.xlu0 %v1102, 126
        %v1105 = vpop.permute.xlu0 %1104
        %v1107 = vadd.f32 %v1043, %v1105
        %s1108 = sld [smem:[#allocation2 + $0x14b]]
        %v1109 = vstv %s1108
        %v1110 = vmul.f32 %v1109, %v987
        %1112 = vrot.lane.b32.xlu0 %v1110, 126
        %v1113 = vpop.permute.xlu0 %1112
        %v1115 = vadd.f32 %v1051, %v1113
        %s1116 = sld [smem:[#allocation2 + $0x14c]]
        %v1117 = vstv %s1116
        %v1118 = vmul.f32 %v1117, %v987
        %1120 = vrot.lane.b32.xlu0 %v1118, 126
        %v1121 = vpop.permute.xlu0 %1120
        %v1123 = vadd.f32 %v1059, %v1121
        %s1124 = sld [smem:[#allocation2 + $0x14d]]
        %v1125 = vstv %s1124
        %v1126 = vmul.f32 %v1125, %v987
        %1128 = vrot.lane.b32.xlu0 %v1126, 126
        %v1129 = vpop.permute.xlu0 %1128
        %v1131 = vadd.f32 %v1067, %v1129
        %s1132 = sld [smem:[#allocation2 + $0x14e]]
        %v1133 = vstv %s1132
        %v1134 = vmul.f32 %v1133, %v987
        %1136 = vrot.lane.b32.xlu0 %v1134, 126
        %v1137 = vpop.permute.xlu0 %1136
        %v1139 = vadd.f32 %v1075, %v1137
        %s1140 = sld [smem:[#allocation2 + $0x14f]]
        %v1141 = vstv %s1140
        %v1142 = vmul.f32 %v1141, %v987
        %1144 = vrot.lane.b32.xlu0 %v1142, 126
        %v1145 = vpop.permute.xlu0 %1144
        %v1147 = vadd.f32 %v1083, %v1145
        %s1148 = sadd.s32 %s170, 48
        %s1149 = scalar_lea.vmem %s169, %s1148
        %v1150 = vld [vmem:[%s1149] sm:$0xff]
        %s1151 = sld [smem:[#allocation2 + $0x10]]
        %v1152 = vstv %s1151
        %v1153 = vmul.f32 %v1152, %v1150
        %v1154 = vadd.f32 %v1091, %v1153
        %s1155 = sld [smem:[#allocation2 + $0x11]]
        %v1156 = vstv %s1155
        %v1157 = vmul.f32 %v1156, %v1150
        %v1158 = vadd.f32 %v1099, %v1157
        %s1159 = sld [smem:[#allocation2 + $0x12]]
        %v1160 = vstv %s1159
        %v1161 = vmul.f32 %v1160, %v1150
        %v1162 = vadd.f32 %v1107, %v1161
        %s1163 = sld [smem:[#allocation2 + $0x13]]
        %v1164 = vstv %s1163
        %v1165 = vmul.f32 %v1164, %v1150
        %v1166 = vadd.f32 %v1115, %v1165
        %s1167 = sld [smem:[#allocation2 + $0x14]]
        %v1168 = vstv %s1167
        %v1169 = vmul.f32 %v1168, %v1150
        %v1170 = vadd.f32 %v1123, %v1169
        %s1171 = sld [smem:[#allocation2 + $0x15]]
        %v1172 = vstv %s1171
        %v1173 = vmul.f32 %v1172, %v1150
        %v1174 = vadd.f32 %v1131, %v1173
        %s1175 = sld [smem:[#allocation2 + $0x16]]
        %v1176 = vstv %s1175
        %v1177 = vmul.f32 %v1176, %v1150
        %v1178 = vadd.f32 %v1139, %v1177
        %s1179 = sld [smem:[#allocation2 + $0x17]]
        %v1180 = vstv %s1179
        %v1181 = vmul.f32 %v1180, %v1150
        %v1182 = vadd.f32 %v1147, %v1181
        %s1183 = sld [smem:[#allocation2 + $0x38]]
        %v1184 = vstv %s1183
        %v1185 = vmul.f32 %v1184, %v1150
        %1187 = vrot.lane.b32.xlu0 %v1185, 127
        %v1188 = vpop.permute.xlu0 %1187
        %v1190 = vadd.f32 %v1154, %v1188
        %s1191 = sld [smem:[#allocation2 + $0x39]]
        %v1192 = vstv %s1191
        %v1193 = vmul.f32 %v1192, %v1150
        %1195 = vrot.lane.b32.xlu0 %v1193, 127
        %v1196 = vpop.permute.xlu0 %1195
        %v1198 = vadd.f32 %v1158, %v1196
        %s1199 = sld [smem:[#allocation2 + $0x3a]]
        %v1200 = vstv %s1199
        %v1201 = vmul.f32 %v1200, %v1150
        %1203 = vrot.lane.b32.xlu0 %v1201, 127
        %v1204 = vpop.permute.xlu0 %1203
        %v1206 = vadd.f32 %v1162, %v1204
        %s1207 = sld [smem:[#allocation2 + $0x3b]]
        %v1208 = vstv %s1207
        %v1209 = vmul.f32 %v1208, %v1150
        %1211 = vrot.lane.b32.xlu0 %v1209, 127
        %v1212 = vpop.permute.xlu0 %1211
        %v1214 = vadd.f32 %v1166, %v1212
        %s1215 = sld [smem:[#allocation2 + $0x3c]]
        %v1216 = vstv %s1215
        %v1217 = vmul.f32 %v1216, %v1150
        %1219 = vrot.lane.b32.xlu0 %v1217, 127
        %v1220 = vpop.permute.xlu0 %1219
        %v1222 = vadd.f32 %v1170, %v1220
        %s1223 = sld [smem:[#allocation2 + $0x3d]]
        %v1224 = vstv %s1223
        %v1225 = vmul.f32 %v1224, %v1150
        %1227 = vrot.lane.b32.xlu0 %v1225, 127
        %v1228 = vpop.permute.xlu0 %1227
        %v1230 = vadd.f32 %v1174, %v1228
        %s1231 = sld [smem:[#allocation2 + $0x3e]]
        %v1232 = vstv %s1231
        %v1233 = vmul.f32 %v1232, %v1150
        %1235 = vrot.lane.b32.xlu0 %v1233, 127
        %v1236 = vpop.permute.xlu0 %1235
        %v1238 = vadd.f32 %v1178, %v1236
        %s1239 = sld [smem:[#allocation2 + $0x3f]]
        %v1240 = vstv %s1239
        %v1241 = vmul.f32 %v1240, %v1150
        %1243 = vrot.lane.b32.xlu0 %v1241, 127
        %v1244 = vpop.permute.xlu0 %1243
        %v1246 = vadd.f32 %v1182, %v1244
        %s1247 = sld [smem:[#allocation2 + $0x60]]
        %v1248 = vstv %s1247
        %v1249 = vmul.f32 %v1248, %v1150
        %1251 = vrot.lane.b32.xlu0 %v1249, 126
        %v1252 = vpop.permute.xlu0 %1251
        %v1254 = vadd.f32 %v1190, %v1252
        %s1255 = sld [smem:[#allocation2 + $0x61]]
        %v1256 = vstv %s1255
        %v1257 = vmul.f32 %v1256, %v1150
        %1259 = vrot.lane.b32.xlu0 %v1257, 126
        %v1260 = vpop.permute.xlu0 %1259
        %v1262 = vadd.f32 %v1198, %v1260
        %s1263 = sld [smem:[#allocation2 + $0x62]]
        %v1264 = vstv %s1263
        %v1265 = vmul.f32 %v1264, %v1150
        %1267 = vrot.lane.b32.xlu0 %v1265, 126
        %v1268 = vpop.permute.xlu0 %1267
        %v1270 = vadd.f32 %v1206, %v1268
        %s1271 = sld [smem:[#allocation2 + $0x63]]
        %v1272 = vstv %s1271
        %v1273 = vmul.f32 %v1272, %v1150
        %1275 = vrot.lane.b32.xlu0 %v1273, 126
        %v1276 = vpop.permute.xlu0 %1275
        %v1278 = vadd.f32 %v1214, %v1276
        %s1279 = sld [smem:[#allocation2 + $0x64]]
        %v1280 = vstv %s1279
        %v1281 = vmul.f32 %v1280, %v1150
        %1283 = vrot.lane.b32.xlu0 %v1281, 126
        %v1284 = vpop.permute.xlu0 %1283
        %v1286 = vadd.f32 %v1222, %v1284
        %s1287 = sld [smem:[#allocation2 + $0x65]]
        %v1288 = vstv %s1287
        %v1289 = vmul.f32 %v1288, %v1150
        %1291 = vrot.lane.b32.xlu0 %v1289, 126
        %v1292 = vpop.permute.xlu0 %1291
        %v1294 = vadd.f32 %v1230, %v1292
        %s1295 = sld [smem:[#allocation2 + $0x66]]
        %v1296 = vstv %s1295
        %v1297 = vmul.f32 %v1296, %v1150
        %1299 = vrot.lane.b32.xlu0 %v1297, 126
        %v1300 = vpop.permute.xlu0 %1299
        %v1302 = vadd.f32 %v1238, %v1300
        %s1303 = sld [smem:[#allocation2 + $0x67]]
        %v1304 = vstv %s1303
        %v1305 = vmul.f32 %v1304, %v1150
        %1307 = vrot.lane.b32.xlu0 %v1305, 126
        %v1308 = vpop.permute.xlu0 %1307
        %v1310 = vadd.f32 %v1246, %v1308
        %s1311 = sadd.s32 %s333, 48
        %s1312 = scalar_lea.vmem %s169, %s1311
        %v1313 = vld [vmem:[%s1312] sm:$0xff]
        %s1314 = sld [smem:[#allocation2 + $0x88]]
        %v1315 = vstv %s1314
        %v1316 = vmul.f32 %v1315, %v1313
        %v1317 = vadd.f32 %v1254, %v1316
        %s1318 = sld [smem:[#allocation2 + $0x89]]
        %v1319 = vstv %s1318
        %v1320 = vmul.f32 %v1319, %v1313
        %v1321 = vadd.f32 %v1262, %v1320
        %s1322 = sld [smem:[#allocation2 + $0x8a]]
        %v1323 = vstv %s1322
        %v1324 = vmul.f32 %v1323, %v1313
        %v1325 = vadd.f32 %v1270, %v1324
        %s1326 = sld [smem:[#allocation2 + $0x8b]]
        %v1327 = vstv %s1326
        %v1328 = vmul.f32 %v1327, %v1313
        %v1329 = vadd.f32 %v1278, %v1328
        %s1330 = sld [smem:[#allocation2 + $0x8c]]
        %v1331 = vstv %s1330
        %v1332 = vmul.f32 %v1331, %v1313
        %v1333 = vadd.f32 %v1286, %v1332
        %s1334 = sld [smem:[#allocation2 + $0x8d]]
        %v1335 = vstv %s1334
        %v1336 = vmul.f32 %v1335, %v1313
        %v1337 = vadd.f32 %v1294, %v1336
        %s1338 = sld [smem:[#allocation2 + $0x8e]]
        %v1339 = vstv %s1338
        %v1340 = vmul.f32 %v1339, %v1313
        %v1341 = vadd.f32 %v1302, %v1340
        %s1342 = sld [smem:[#allocation2 + $0x8f]]
        %v1343 = vstv %s1342
        %v1344 = vmul.f32 %v1343, %v1313
        %v1345 = vadd.f32 %v1310, %v1344
        %s1346 = sld [smem:[#allocation2 + $0xb0]]
        %v1347 = vstv %s1346
        %v1348 = vmul.f32 %v1347, %v1313
        %1350 = vrot.lane.b32.xlu0 %v1348, 127
        %v1351 = vpop.permute.xlu0 %1350
        %v1353 = vadd.f32 %v1317, %v1351
        %s1354 = sld [smem:[#allocation2 + $0xb1]]
        %v1355 = vstv %s1354
        %v1356 = vmul.f32 %v1355, %v1313
        %1358 = vrot.lane.b32.xlu0 %v1356, 127
        %v1359 = vpop.permute.xlu0 %1358
        %v1361 = vadd.f32 %v1321, %v1359
        %s1362 = sld [smem:[#allocation2 + $0xb2]]
        %v1363 = vstv %s1362
        %v1364 = vmul.f32 %v1363, %v1313
        %1366 = vrot.lane.b32.xlu0 %v1364, 127
        %v1367 = vpop.permute.xlu0 %1366
        %v1369 = vadd.f32 %v1325, %v1367
        %s1370 = sld [smem:[#allocation2 + $0xb3]]
        %v1371 = vstv %s1370
        %v1372 = vmul.f32 %v1371, %v1313
        %1374 = vrot.lane.b32.xlu0 %v1372, 127
        %v1375 = vpop.permute.xlu0 %1374
        %v1377 = vadd.f32 %v1329, %v1375
        %s1378 = sld [smem:[#allocation2 + $0xb4]]
        %v1379 = vstv %s1378
        %v1380 = vmul.f32 %v1379, %v1313
        %1382 = vrot.lane.b32.xlu0 %v1380, 127
        %v1383 = vpop.permute.xlu0 %1382
        %v1385 = vadd.f32 %v1333, %v1383
        %s1386 = sld [smem:[#allocation2 + $0xb5]]
        %v1387 = vstv %s1386
        %v1388 = vmul.f32 %v1387, %v1313
        %1390 = vrot.lane.b32.xlu0 %v1388, 127
        %v1391 = vpop.permute.xlu0 %1390
        %v1393 = vadd.f32 %v1337, %v1391
        %s1394 = sld [smem:[#allocation2 + $0xb6]]
        %v1395 = vstv %s1394
        %v1396 = vmul.f32 %v1395, %v1313
        %1398 = vrot.lane.b32.xlu0 %v1396, 127
        %v1399 = vpop.permute.xlu0 %1398
        %v1401 = vadd.f32 %v1341, %v1399
        %s1402 = sld [smem:[#allocation2 + $0xb7]]
        %v1403 = vstv %s1402
        %v1404 = vmul.f32 %v1403, %v1313
        %1406 = vrot.lane.b32.xlu0 %v1404, 127
        %v1407 = vpop.permute.xlu0 %1406
        %v1409 = vadd.f32 %v1345, %v1407
        %s1410 = sld [smem:[#allocation2 + $0xd8]]
        %v1411 = vstv %s1410
        %v1412 = vmul.f32 %v1411, %v1313
        %1414 = vrot.lane.b32.xlu0 %v1412, 126
        %v1415 = vpop.permute.xlu0 %1414
        %v1417 = vadd.f32 %v1353, %v1415
        %s1418 = sld [smem:[#allocation2 + $0xd9]]
        %v1419 = vstv %s1418
        %v1420 = vmul.f32 %v1419, %v1313
        %1422 = vrot.lane.b32.xlu0 %v1420, 126
        %v1423 = vpop.permute.xlu0 %1422
        %v1425 = vadd.f32 %v1361, %v1423
        %s1426 = sld [smem:[#allocation2 + $0xda]]
        %v1427 = vstv %s1426
        %v1428 = vmul.f32 %v1427, %v1313
        %1430 = vrot.lane.b32.xlu0 %v1428, 126
        %v1431 = vpop.permute.xlu0 %1430
        %v1433 = vadd.f32 %v1369, %v1431
        %s1434 = sld [smem:[#allocation2 + $0xdb]]
        %v1435 = vstv %s1434
        %v1436 = vmul.f32 %v1435, %v1313
        %1438 = vrot.lane.b32.xlu0 %v1436, 126
        %v1439 = vpop.permute.xlu0 %1438
        %v1441 = vadd.f32 %v1377, %v1439
        %s1442 = sld [smem:[#allocation2 + $0xdc]]
        %v1443 = vstv %s1442
        %v1444 = vmul.f32 %v1443, %v1313
        %1446 = vrot.lane.b32.xlu0 %v1444, 126
        %v1447 = vpop.permute.xlu0 %1446
        %v1449 = vadd.f32 %v1385, %v1447
        %s1450 = sld [smem:[#allocation2 + $0xdd]]
        %v1451 = vstv %s1450
        %v1452 = vmul.f32 %v1451, %v1313
        %1454 = vrot.lane.b32.xlu0 %v1452, 126
        %v1455 = vpop.permute.xlu0 %1454
        %v1457 = vadd.f32 %v1393, %v1455
        %s1458 = sld [smem:[#allocation2 + $0xde]]
        %v1459 = vstv %s1458
        %v1460 = vmul.f32 %v1459, %v1313
        %1462 = vrot.lane.b32.xlu0 %v1460, 126
        %v1463 = vpop.permute.xlu0 %1462
        %v1465 = vadd.f32 %v1401, %v1463
        %s1466 = sld [smem:[#allocation2 + $0xdf]]
        %v1467 = vstv %s1466
        %v1468 = vmul.f32 %v1467, %v1313
        %1470 = vrot.lane.b32.xlu0 %v1468, 126
        %v1471 = vpop.permute.xlu0 %1470
        %v1473 = vadd.f32 %v1409, %v1471
        %s1474 = sadd.s32 %s496, 48
        %s1475 = scalar_lea.vmem %s169, %s1474
        %v1476 = vld [vmem:[%s1475] sm:$0xff]
        %s1477 = sld [smem:[#allocation2 + $0x100]]
        %v1478 = vstv %s1477
        %v1479 = vmul.f32 %v1478, %v1476
        %v1480 = vadd.f32 %v1417, %v1479
        %s1481 = sld [smem:[#allocation2 + $0x101]]
        %v1482 = vstv %s1481
        %v1483 = vmul.f32 %v1482, %v1476
        %v1484 = vadd.f32 %v1425, %v1483
        %s1485 = sld [smem:[#allocation2 + $0x102]]
        %v1486 = vstv %s1485
        %v1487 = vmul.f32 %v1486, %v1476
        %v1488 = vadd.f32 %v1433, %v1487
        %s1489 = sld [smem:[#allocation2 + $0x103]]
        %v1490 = vstv %s1489
        %v1491 = vmul.f32 %v1490, %v1476
        %v1492 = vadd.f32 %v1441, %v1491
        %s1493 = sld [smem:[#allocation2 + $0x104]]
        %v1494 = vstv %s1493
        %v1495 = vmul.f32 %v1494, %v1476
        %v1496 = vadd.f32 %v1449, %v1495
        %s1497 = sld [smem:[#allocation2 + $0x105]]
        %v1498 = vstv %s1497
        %v1499 = vmul.f32 %v1498, %v1476
        %v1500 = vadd.f32 %v1457, %v1499
        %s1501 = sld [smem:[#allocation2 + $0x106]]
        %v1502 = vstv %s1501
        %v1503 = vmul.f32 %v1502, %v1476
        %v1504 = vadd.f32 %v1465, %v1503
        %s1505 = sld [smem:[#allocation2 + $0x107]]
        %v1506 = vstv %s1505
        %v1507 = vmul.f32 %v1506, %v1476
        %v1508 = vadd.f32 %v1473, %v1507
        %s1509 = sld [smem:[#allocation2 + $0x128]]
        %v1510 = vstv %s1509
        %v1511 = vmul.f32 %v1510, %v1476
        %1513 = vrot.lane.b32.xlu0 %v1511, 127
        %v1514 = vpop.permute.xlu0 %1513
        %v1516 = vadd.f32 %v1480, %v1514
        %s1517 = sld [smem:[#allocation2 + $0x129]]
        %v1518 = vstv %s1517
        %v1519 = vmul.f32 %v1518, %v1476
        %1521 = vrot.lane.b32.xlu0 %v1519, 127
        %v1522 = vpop.permute.xlu0 %1521
        %v1524 = vadd.f32 %v1484, %v1522
        %s1525 = sld [smem:[#allocation2 + $0x12a]]
        %v1526 = vstv %s1525
        %v1527 = vmul.f32 %v1526, %v1476
        %1529 = vrot.lane.b32.xlu0 %v1527, 127
        %v1530 = vpop.permute.xlu0 %1529
        %v1532 = vadd.f32 %v1488, %v1530
        %s1533 = sld [smem:[#allocation2 + $0x12b]]
        %v1534 = vstv %s1533
        %v1535 = vmul.f32 %v1534, %v1476
        %1537 = vrot.lane.b32.xlu0 %v1535, 127
        %v1538 = vpop.permute.xlu0 %1537
        %v1540 = vadd.f32 %v1492, %v1538
        %s1541 = sld [smem:[#allocation2 + $0x12c]]
        %v1542 = vstv %s1541
        %v1543 = vmul.f32 %v1542, %v1476
        %1545 = vrot.lane.b32.xlu0 %v1543, 127
        %v1546 = vpop.permute.xlu0 %1545
        %v1548 = vadd.f32 %v1496, %v1546
        %s1549 = sld [smem:[#allocation2 + $0x12d]]
        %v1550 = vstv %s1549
        %v1551 = vmul.f32 %v1550, %v1476
        %1553 = vrot.lane.b32.xlu0 %v1551, 127
        %v1554 = vpop.permute.xlu0 %1553
        %v1556 = vadd.f32 %v1500, %v1554
        %s1557 = sld [smem:[#allocation2 + $0x12e]]
        %v1558 = vstv %s1557
        %v1559 = vmul.f32 %v1558, %v1476
        %1561 = vrot.lane.b32.xlu0 %v1559, 127
        %v1562 = vpop.permute.xlu0 %1561
        %v1564 = vadd.f32 %v1504, %v1562
        %s1565 = sld [smem:[#allocation2 + $0x12f]]
        %v1566 = vstv %s1565
        %v1567 = vmul.f32 %v1566, %v1476
        %1569 = vrot.lane.b32.xlu0 %v1567, 127
        %v1570 = vpop.permute.xlu0 %1569
        %v1572 = vadd.f32 %v1508, %v1570
        %s1573 = sld [smem:[#allocation2 + $0x150]]
        %v1574 = vstv %s1573
        %v1575 = vmul.f32 %v1574, %v1476
        %1577 = vrot.lane.b32.xlu0 %v1575, 126
        %v1578 = vpop.permute.xlu0 %1577
        %v1580 = vadd.f32 %v1516, %v1578
        %s1581 = sld [smem:[#allocation2 + $0x151]]
        %v1582 = vstv %s1581
        %v1583 = vmul.f32 %v1582, %v1476
        %1585 = vrot.lane.b32.xlu0 %v1583, 126
        %v1586 = vpop.permute.xlu0 %1585
        %v1588 = vadd.f32 %v1524, %v1586
        %s1589 = sld [smem:[#allocation2 + $0x152]]
        %v1590 = vstv %s1589
        %v1591 = vmul.f32 %v1590, %v1476
        %1593 = vrot.lane.b32.xlu0 %v1591, 126
        %v1594 = vpop.permute.xlu0 %1593
        %v1596 = vadd.f32 %v1532, %v1594
        %s1597 = sld [smem:[#allocation2 + $0x153]]
        %v1598 = vstv %s1597
        %v1599 = vmul.f32 %v1598, %v1476
        %1601 = vrot.lane.b32.xlu0 %v1599, 126
        %v1602 = vpop.permute.xlu0 %1601
        %v1604 = vadd.f32 %v1540, %v1602
        %s1605 = sld [smem:[#allocation2 + $0x154]]
        %v1606 = vstv %s1605
        %v1607 = vmul.f32 %v1606, %v1476
        %1609 = vrot.lane.b32.xlu0 %v1607, 126
        %v1610 = vpop.permute.xlu0 %1609
        %v1612 = vadd.f32 %v1548, %v1610
        %s1613 = sld [smem:[#allocation2 + $0x155]]
        %v1614 = vstv %s1613
        %v1615 = vmul.f32 %v1614, %v1476
        %1617 = vrot.lane.b32.xlu0 %v1615, 126
        %v1618 = vpop.permute.xlu0 %1617
        %v1620 = vadd.f32 %v1556, %v1618
        %s1621 = sld [smem:[#allocation2 + $0x156]]
        %v1622 = vstv %s1621
        %v1623 = vmul.f32 %v1622, %v1476
        %1625 = vrot.lane.b32.xlu0 %v1623, 126
        %v1626 = vpop.permute.xlu0 %1625
        %v1628 = vadd.f32 %v1564, %v1626
        %s1629 = sld [smem:[#allocation2 + $0x157]]
        %v1630 = vstv %s1629
        %v1631 = vmul.f32 %v1630, %v1476
        %1633 = vrot.lane.b32.xlu0 %v1631, 126
        %v1634 = vpop.permute.xlu0 %1633
        %v1636 = vadd.f32 %v1572, %v1634
        %s1637 = sadd.s32 %s170, 72
        %s1638 = scalar_lea.vmem %s169, %s1637
        %v1639 = vld [vmem:[%s1638] sm:$0xff]
        %s1640 = sld [smem:[#allocation2 + $0x18]]
        %v1641 = vstv %s1640
        %v1642 = vmul.f32 %v1641, %v1639
        %v1643 = vadd.f32 %v1580, %v1642
        %s1644 = sld [smem:[#allocation2 + $0x19]]
        %v1645 = vstv %s1644
        %v1646 = vmul.f32 %v1645, %v1639
        %v1647 = vadd.f32 %v1588, %v1646
        %s1648 = sld [smem:[#allocation2 + $0x1a]]
        %v1649 = vstv %s1648
        %v1650 = vmul.f32 %v1649, %v1639
        %v1651 = vadd.f32 %v1596, %v1650
        %s1652 = sld [smem:[#allocation2 + $0x1b]]
        %v1653 = vstv %s1652
        %v1654 = vmul.f32 %v1653, %v1639
        %v1655 = vadd.f32 %v1604, %v1654
        %s1656 = sld [smem:[#allocation2 + $0x1c]]
        %v1657 = vstv %s1656
        %v1658 = vmul.f32 %v1657, %v1639
        %v1659 = vadd.f32 %v1612, %v1658
        %s1660 = sld [smem:[#allocation2 + $0x1d]]
        %v1661 = vstv %s1660
        %v1662 = vmul.f32 %v1661, %v1639
        %v1663 = vadd.f32 %v1620, %v1662
        %s1664 = sld [smem:[#allocation2 + $0x1e]]
        %v1665 = vstv %s1664
        %v1666 = vmul.f32 %v1665, %v1639
        %v1667 = vadd.f32 %v1628, %v1666
        %s1668 = sld [smem:[#allocation2 + $0x1f]]
        %v1669 = vstv %s1668
        %v1670 = vmul.f32 %v1669, %v1639
        %v1671 = vadd.f32 %v1636, %v1670
        %s1672 = sld [smem:[#allocation2 + $0x40]]
        %v1673 = vstv %s1672
        %v1674 = vmul.f32 %v1673, %v1639
        %1676 = vrot.lane.b32.xlu0 %v1674, 127
        %v1677 = vpop.permute.xlu0 %1676
        %v1679 = vadd.f32 %v1643, %v1677
        %s1680 = sld [smem:[#allocation2 + $0x41]]
        %v1681 = vstv %s1680
        %v1682 = vmul.f32 %v1681, %v1639
        %1684 = vrot.lane.b32.xlu0 %v1682, 127
        %v1685 = vpop.permute.xlu0 %1684
        %v1687 = vadd.f32 %v1647, %v1685
        %s1688 = sld [smem:[#allocation2 + $0x42]]
        %v1689 = vstv %s1688
        %v1690 = vmul.f32 %v1689, %v1639
        %1692 = vrot.lane.b32.xlu0 %v1690, 127
        %v1693 = vpop.permute.xlu0 %1692
        %v1695 = vadd.f32 %v1651, %v1693
        %s1696 = sld [smem:[#allocation2 + $0x43]]
        %v1697 = vstv %s1696
        %v1698 = vmul.f32 %v1697, %v1639
        %1700 = vrot.lane.b32.xlu0 %v1698, 127
        %v1701 = vpop.permute.xlu0 %1700
        %v1703 = vadd.f32 %v1655, %v1701
        %s1704 = sld [smem:[#allocation2 + $0x44]]
        %v1705 = vstv %s1704
        %v1706 = vmul.f32 %v1705, %v1639
        %1708 = vrot.lane.b32.xlu0 %v1706, 127
        %v1709 = vpop.permute.xlu0 %1708
        %v1711 = vadd.f32 %v1659, %v1709
        %s1712 = sld [smem:[#allocation2 + $0x45]]
        %v1713 = vstv %s1712
        %v1714 = vmul.f32 %v1713, %v1639
        %1716 = vrot.lane.b32.xlu0 %v1714, 127
        %v1717 = vpop.permute.xlu0 %1716
        %v1719 = vadd.f32 %v1663, %v1717
        %s1720 = sld [smem:[#allocation2 + $0x46]]
        %v1721 = vstv %s1720
        %v1722 = vmul.f32 %v1721, %v1639
        %1724 = vrot.lane.b32.xlu0 %v1722, 127
        %v1725 = vpop.permute.xlu0 %1724
        %v1727 = vadd.f32 %v1667, %v1725
        %s1728 = sld [smem:[#allocation2 + $0x47]]
        %v1729 = vstv %s1728
        %v1730 = vmul.f32 %v1729, %v1639
        %1732 = vrot.lane.b32.xlu0 %v1730, 127
        %v1733 = vpop.permute.xlu0 %1732
        %v1735 = vadd.f32 %v1671, %v1733
        %s1736 = sld [smem:[#allocation2 + $0x68]]
        %v1737 = vstv %s1736
        %v1738 = vmul.f32 %v1737, %v1639
        %1740 = vrot.lane.b32.xlu0 %v1738, 126
        %v1741 = vpop.permute.xlu0 %1740
        %v1743 = vadd.f32 %v1679, %v1741
        %s1744 = sld [smem:[#allocation2 + $0x69]]
        %v1745 = vstv %s1744
        %v1746 = vmul.f32 %v1745, %v1639
        %1748 = vrot.lane.b32.xlu0 %v1746, 126
        %v1749 = vpop.permute.xlu0 %1748
        %v1751 = vadd.f32 %v1687, %v1749
        %s1752 = sld [smem:[#allocation2 + $0x6a]]
        %v1753 = vstv %s1752
        %v1754 = vmul.f32 %v1753, %v1639
        %1756 = vrot.lane.b32.xlu0 %v1754, 126
        %v1757 = vpop.permute.xlu0 %1756
        %v1759 = vadd.f32 %v1695, %v1757
        %s1760 = sld [smem:[#allocation2 + $0x6b]]
        %v1761 = vstv %s1760
        %v1762 = vmul.f32 %v1761, %v1639
        %1764 = vrot.lane.b32.xlu0 %v1762, 126
        %v1765 = vpop.permute.xlu0 %1764
        %v1767 = vadd.f32 %v1703, %v1765
        %s1768 = sld [smem:[#allocation2 + $0x6c]]
        %v1769 = vstv %s1768
        %v1770 = vmul.f32 %v1769, %v1639
        %1772 = vrot.lane.b32.xlu0 %v1770, 126
        %v1773 = vpop.permute.xlu0 %1772
        %v1775 = vadd.f32 %v1711, %v1773
        %s1776 = sld [smem:[#allocation2 + $0x6d]]
        %v1777 = vstv %s1776
        %v1778 = vmul.f32 %v1777, %v1639
        %1780 = vrot.lane.b32.xlu0 %v1778, 126
        %v1781 = vpop.permute.xlu0 %1780
        %v1783 = vadd.f32 %v1719, %v1781
        %s1784 = sld [smem:[#allocation2 + $0x6e]]
        %v1785 = vstv %s1784
        %v1786 = vmul.f32 %v1785, %v1639
        %1788 = vrot.lane.b32.xlu0 %v1786, 126
        %v1789 = vpop.permute.xlu0 %1788
        %v1791 = vadd.f32 %v1727, %v1789
        %s1792 = sld [smem:[#allocation2 + $0x6f]]
        %v1793 = vstv %s1792
        %v1794 = vmul.f32 %v1793, %v1639
        %1796 = vrot.lane.b32.xlu0 %v1794, 126
        %v1797 = vpop.permute.xlu0 %1796
        %v1799 = vadd.f32 %v1735, %v1797
        %s1800 = sadd.s32 %s333, 72
        %s1801 = scalar_lea.vmem %s169, %s1800
        %v1802 = vld [vmem:[%s1801] sm:$0xff]
        %s1803 = sld [smem:[#allocation2 + $0x90]]
        %v1804 = vstv %s1803
        %v1805 = vmul.f32 %v1804, %v1802
        %v1806 = vadd.f32 %v1743, %v1805
        %s1807 = sld [smem:[#allocation2 + $0x91]]
        %v1808 = vstv %s1807
        %v1809 = vmul.f32 %v1808, %v1802
        %v1810 = vadd.f32 %v1751, %v1809
        %s1811 = sld [smem:[#allocation2 + $0x92]]
        %v1812 = vstv %s1811
        %v1813 = vmul.f32 %v1812, %v1802
        %v1814 = vadd.f32 %v1759, %v1813
        %s1815 = sld [smem:[#allocation2 + $0x93]]
        %v1816 = vstv %s1815
        %v1817 = vmul.f32 %v1816, %v1802
        %v1818 = vadd.f32 %v1767, %v1817
        %s1819 = sld [smem:[#allocation2 + $0x94]]
        %v1820 = vstv %s1819
        %v1821 = vmul.f32 %v1820, %v1802
        %v1822 = vadd.f32 %v1775, %v1821
        %s1823 = sld [smem:[#allocation2 + $0x95]]
        %v1824 = vstv %s1823
        %v1825 = vmul.f32 %v1824, %v1802
        %v1826 = vadd.f32 %v1783, %v1825
        %s1827 = sld [smem:[#allocation2 + $0x96]]
        %v1828 = vstv %s1827
        %v1829 = vmul.f32 %v1828, %v1802
        %v1830 = vadd.f32 %v1791, %v1829
        %s1831 = sld [smem:[#allocation2 + $0x97]]
        %v1832 = vstv %s1831
        %v1833 = vmul.f32 %v1832, %v1802
        %v1834 = vadd.f32 %v1799, %v1833
        %s1835 = sld [smem:[#allocation2 + $0xb8]]
        %v1836 = vstv %s1835
        %v1837 = vmul.f32 %v1836, %v1802
        %1839 = vrot.lane.b32.xlu0 %v1837, 127
        %v1840 = vpop.permute.xlu0 %1839
        %v1842 = vadd.f32 %v1806, %v1840
        %s1843 = sld [smem:[#allocation2 + $0xb9]]
        %v1844 = vstv %s1843
        %v1845 = vmul.f32 %v1844, %v1802
        %1847 = vrot.lane.b32.xlu0 %v1845, 127
        %v1848 = vpop.permute.xlu0 %1847
        %v1850 = vadd.f32 %v1810, %v1848
        %s1851 = sld [smem:[#allocation2 + $0xba]]
        %v1852 = vstv %s1851
        %v1853 = vmul.f32 %v1852, %v1802
        %1855 = vrot.lane.b32.xlu0 %v1853, 127
        %v1856 = vpop.permute.xlu0 %1855
        %v1858 = vadd.f32 %v1814, %v1856
        %s1859 = sld [smem:[#allocation2 + $0xbb]]
        %v1860 = vstv %s1859
        %v1861 = vmul.f32 %v1860, %v1802
        %1863 = vrot.lane.b32.xlu0 %v1861, 127
        %v1864 = vpop.permute.xlu0 %1863
        %v1866 = vadd.f32 %v1818, %v1864
        %s1867 = sld [smem:[#allocation2 + $0xbc]]
        %v1868 = vstv %s1867
        %v1869 = vmul.f32 %v1868, %v1802
        %1871 = vrot.lane.b32.xlu0 %v1869, 127
        %v1872 = vpop.permute.xlu0 %1871
        %v1874 = vadd.f32 %v1822, %v1872
        %s1875 = sld [smem:[#allocation2 + $0xbd]]
        %v1876 = vstv %s1875
        %v1877 = vmul.f32 %v1876, %v1802
        %1879 = vrot.lane.b32.xlu0 %v1877, 127
        %v1880 = vpop.permute.xlu0 %1879
        %v1882 = vadd.f32 %v1826, %v1880
        %s1883 = sld [smem:[#allocation2 + $0xbe]]
        %v1884 = vstv %s1883
        %v1885 = vmul.f32 %v1884, %v1802
        %1887 = vrot.lane.b32.xlu0 %v1885, 127
        %v1888 = vpop.permute.xlu0 %1887
        %v1890 = vadd.f32 %v1830, %v1888
        %s1891 = sld [smem:[#allocation2 + $0xbf]]
        %v1892 = vstv %s1891
        %v1893 = vmul.f32 %v1892, %v1802
        %1895 = vrot.lane.b32.xlu0 %v1893, 127
        %v1896 = vpop.permute.xlu0 %1895
        %v1898 = vadd.f32 %v1834, %v1896
        %s1899 = sld [smem:[#allocation2 + $0xe0]]
        %v1900 = vstv %s1899
        %v1901 = vmul.f32 %v1900, %v1802
        %1903 = vrot.lane.b32.xlu0 %v1901, 126
        %v1904 = vpop.permute.xlu0 %1903
        %v1906 = vadd.f32 %v1842, %v1904
        %s1907 = sld [smem:[#allocation2 + $0xe1]]
        %v1908 = vstv %s1907
        %v1909 = vmul.f32 %v1908, %v1802
        %1911 = vrot.lane.b32.xlu0 %v1909, 126
        %v1912 = vpop.permute.xlu0 %1911
        %v1914 = vadd.f32 %v1850, %v1912
        %s1915 = sld [smem:[#allocation2 + $0xe2]]
        %v1916 = vstv %s1915
        %v1917 = vmul.f32 %v1916, %v1802
        %1919 = vrot.lane.b32.xlu0 %v1917, 126
        %v1920 = vpop.permute.xlu0 %1919
        %v1922 = vadd.f32 %v1858, %v1920
        %s1923 = sld [smem:[#allocation2 + $0xe3]]
        %v1924 = vstv %s1923
        %v1925 = vmul.f32 %v1924, %v1802
        %1927 = vrot.lane.b32.xlu0 %v1925, 126
        %v1928 = vpop.permute.xlu0 %1927
        %v1930 = vadd.f32 %v1866, %v1928
        %s1931 = sld [smem:[#allocation2 + $0xe4]]
        %v1932 = vstv %s1931
        %v1933 = vmul.f32 %v1932, %v1802
        %1935 = vrot.lane.b32.xlu0 %v1933, 126
        %v1936 = vpop.permute.xlu0 %1935
        %v1938 = vadd.f32 %v1874, %v1936
        %s1939 = sld [smem:[#allocation2 + $0xe5]]
        %v1940 = vstv %s1939
        %v1941 = vmul.f32 %v1940, %v1802
        %1943 = vrot.lane.b32.xlu0 %v1941, 126
        %v1944 = vpop.permute.xlu0 %1943
        %v1946 = vadd.f32 %v1882, %v1944
        %s1947 = sld [smem:[#allocation2 + $0xe6]]
        %v1948 = vstv %s1947
        %v1949 = vmul.f32 %v1948, %v1802
        %1951 = vrot.lane.b32.xlu0 %v1949, 126
        %v1952 = vpop.permute.xlu0 %1951
        %v1954 = vadd.f32 %v1890, %v1952
        %s1955 = sld [smem:[#allocation2 + $0xe7]]
        %v1956 = vstv %s1955
        %v1957 = vmul.f32 %v1956, %v1802
        %1959 = vrot.lane.b32.xlu0 %v1957, 126
        %v1960 = vpop.permute.xlu0 %1959
        %v1962 = vadd.f32 %v1898, %v1960
        %s1963 = sadd.s32 %s496, 72
        %s1964 = scalar_lea.vmem %s169, %s1963
        %v1965 = vld [vmem:[%s1964] sm:$0xff]
        %s1966 = sld [smem:[#allocation2 + $0x108]]
        %v1967 = vstv %s1966
        %v1968 = vmul.f32 %v1967, %v1965
        %v1969 = vadd.f32 %v1906, %v1968
        %s1970 = sld [smem:[#allocation2 + $0x109]]
        %v1971 = vstv %s1970
        %v1972 = vmul.f32 %v1971, %v1965
        %v1973 = vadd.f32 %v1914, %v1972
        %s1974 = sld [smem:[#allocation2 + $0x10a]]
        %v1975 = vstv %s1974
        %v1976 = vmul.f32 %v1975, %v1965
        %v1977 = vadd.f32 %v1922, %v1976
        %s1978 = sld [smem:[#allocation2 + $0x10b]]
        %v1979 = vstv %s1978
        %v1980 = vmul.f32 %v1979, %v1965
        %v1981 = vadd.f32 %v1930, %v1980
        %s1982 = sld [smem:[#allocation2 + $0x10c]]
        %v1983 = vstv %s1982
        %v1984 = vmul.f32 %v1983, %v1965
        %v1985 = vadd.f32 %v1938, %v1984
        %s1986 = sld [smem:[#allocation2 + $0x10d]]
        %v1987 = vstv %s1986
        %v1988 = vmul.f32 %v1987, %v1965
        %v1989 = vadd.f32 %v1946, %v1988
        %s1990 = sld [smem:[#allocation2 + $0x10e]]
        %v1991 = vstv %s1990
        %v1992 = vmul.f32 %v1991, %v1965
        %v1993 = vadd.f32 %v1954, %v1992
        %s1994 = sld [smem:[#allocation2 + $0x10f]]
        %v1995 = vstv %s1994
        %v1996 = vmul.f32 %v1995, %v1965
        %v1997 = vadd.f32 %v1962, %v1996
        %s1998 = sld [smem:[#allocation2 + $0x130]]
        %v1999 = vstv %s1998
        %v2000 = vmul.f32 %v1999, %v1965
        %2002 = vrot.lane.b32.xlu0 %v2000, 127
        %v2003 = vpop.permute.xlu0 %2002
        %v2005 = vadd.f32 %v1969, %v2003
        %s2006 = sld [smem:[#allocation2 + $0x131]]
        %v2007 = vstv %s2006
        %v2008 = vmul.f32 %v2007, %v1965
        %2010 = vrot.lane.b32.xlu0 %v2008, 127
        %v2011 = vpop.permute.xlu0 %2010
        %v2013 = vadd.f32 %v1973, %v2011
        %s2014 = sld [smem:[#allocation2 + $0x132]]
        %v2015 = vstv %s2014
        %v2016 = vmul.f32 %v2015, %v1965
        %2018 = vrot.lane.b32.xlu0 %v2016, 127
        %v2019 = vpop.permute.xlu0 %2018
        %v2021 = vadd.f32 %v1977, %v2019
        %s2022 = sld [smem:[#allocation2 + $0x133]]
        %v2023 = vstv %s2022
        %v2024 = vmul.f32 %v2023, %v1965
        %2026 = vrot.lane.b32.xlu0 %v2024, 127
        %v2027 = vpop.permute.xlu0 %2026
        %v2029 = vadd.f32 %v1981, %v2027
        %s2030 = sld [smem:[#allocation2 + $0x134]]
        %v2031 = vstv %s2030
        %v2032 = vmul.f32 %v2031, %v1965
        %2034 = vrot.lane.b32.xlu0 %v2032, 127
        %v2035 = vpop.permute.xlu0 %2034
        %v2037 = vadd.f32 %v1985, %v2035
        %s2038 = sld [smem:[#allocation2 + $0x135]]
        %v2039 = vstv %s2038
        %v2040 = vmul.f32 %v2039, %v1965
        %2042 = vrot.lane.b32.xlu0 %v2040, 127
        %v2043 = vpop.permute.xlu0 %2042
        %v2045 = vadd.f32 %v1989, %v2043
        %s2046 = sld [smem:[#allocation2 + $0x136]]
        %v2047 = vstv %s2046
        %v2048 = vmul.f32 %v2047, %v1965
        %2050 = vrot.lane.b32.xlu0 %v2048, 127
        %v2051 = vpop.permute.xlu0 %2050
        %v2053 = vadd.f32 %v1993, %v2051
        %s2054 = sld [smem:[#allocation2 + $0x137]]
        %v2055 = vstv %s2054
        %v2056 = vmul.f32 %v2055, %v1965
        %2058 = vrot.lane.b32.xlu0 %v2056, 127
        %v2059 = vpop.permute.xlu0 %2058
        %v2061 = vadd.f32 %v1997, %v2059
        %s2062 = sld [smem:[#allocation2 + $0x158]]
        %v2063 = vstv %s2062
        %v2064 = vmul.f32 %v2063, %v1965
        %2066 = vrot.lane.b32.xlu0 %v2064, 126
        %v2067 = vpop.permute.xlu0 %2066
        %v2069 = vadd.f32 %v2005, %v2067
        %s2070 = sld [smem:[#allocation2 + $0x159]]
        %v2071 = vstv %s2070
        %v2072 = vmul.f32 %v2071, %v1965
        %2074 = vrot.lane.b32.xlu0 %v2072, 126
        %v2075 = vpop.permute.xlu0 %2074
        %v2077 = vadd.f32 %v2013, %v2075
        %s2078 = sld [smem:[#allocation2 + $0x15a]]
        %v2079 = vstv %s2078
        %v2080 = vmul.f32 %v2079, %v1965
        %2082 = vrot.lane.b32.xlu0 %v2080, 126
        %v2083 = vpop.permute.xlu0 %2082
        %v2085 = vadd.f32 %v2021, %v2083
        %s2086 = sld [smem:[#allocation2 + $0x15b]]
        %v2087 = vstv %s2086
        %v2088 = vmul.f32 %v2087, %v1965
        %2090 = vrot.lane.b32.xlu0 %v2088, 126
        %v2091 = vpop.permute.xlu0 %2090
        %v2093 = vadd.f32 %v2029, %v2091
        %s2094 = sld [smem:[#allocation2 + $0x15c]]
        %v2095 = vstv %s2094
        %v2096 = vmul.f32 %v2095, %v1965
        %2098 = vrot.lane.b32.xlu0 %v2096, 126
        %v2099 = vpop.permute.xlu0 %2098
        %v2101 = vadd.f32 %v2037, %v2099
        %s2102 = sld [smem:[#allocation2 + $0x15d]]
        %v2103 = vstv %s2102
        %v2104 = vmul.f32 %v2103, %v1965
        %2106 = vrot.lane.b32.xlu0 %v2104, 126
        %v2107 = vpop.permute.xlu0 %2106
        %v2109 = vadd.f32 %v2045, %v2107
        %s2110 = sld [smem:[#allocation2 + $0x15e]]
        %v2111 = vstv %s2110
        %v2112 = vmul.f32 %v2111, %v1965
        %2114 = vrot.lane.b32.xlu0 %v2112, 126
        %v2115 = vpop.permute.xlu0 %2114
        %v2117 = vadd.f32 %v2053, %v2115
        %s2118 = sld [smem:[#allocation2 + $0x15f]]
        %v2119 = vstv %s2118
        %v2120 = vmul.f32 %v2119, %v1965
        %2122 = vrot.lane.b32.xlu0 %v2120, 126
        %v2123 = vpop.permute.xlu0 %2122
        %v2125 = vadd.f32 %v2061, %v2123
        %s2126 = sadd.s32 %s170, 96
        %s2127 = scalar_lea.vmem %s169, %s2126
        %v2128 = vld [vmem:[%s2127] sm:$0xff]
        %s2129 = sld [smem:[#allocation2 + $0x20]]
        %v2130 = vstv %s2129
        %v2131 = vmul.f32 %v2130, %v2128
        %v2132 = vadd.f32 %v2069, %v2131
        %s2133 = sld [smem:[#allocation2 + $0x21]]
        %v2134 = vstv %s2133
        %v2135 = vmul.f32 %v2134, %v2128
        %v2136 = vadd.f32 %v2077, %v2135
        %s2137 = sld [smem:[#allocation2 + $0x22]]
        %v2138 = vstv %s2137
        %v2139 = vmul.f32 %v2138, %v2128
        %v2140 = vadd.f32 %v2085, %v2139
        %s2141 = sld [smem:[#allocation2 + $0x23]]
        %v2142 = vstv %s2141
        %v2143 = vmul.f32 %v2142, %v2128
        %v2144 = vadd.f32 %v2093, %v2143
        %s2145 = sld [smem:[#allocation2 + $0x24]]
        %v2146 = vstv %s2145
        %v2147 = vmul.f32 %v2146, %v2128
        %v2148 = vadd.f32 %v2101, %v2147
        %s2149 = sld [smem:[#allocation2 + $0x25]]
        %v2150 = vstv %s2149
        %v2151 = vmul.f32 %v2150, %v2128
        %v2152 = vadd.f32 %v2109, %v2151
        %s2153 = sld [smem:[#allocation2 + $0x26]]
        %v2154 = vstv %s2153
        %v2155 = vmul.f32 %v2154, %v2128
        %v2156 = vadd.f32 %v2117, %v2155
        %s2157 = sld [smem:[#allocation2 + $0x27]]
        %v2158 = vstv %s2157
        %v2159 = vmul.f32 %v2158, %v2128
        %v2160 = vadd.f32 %v2125, %v2159
        %s2161 = sld [smem:[#allocation2 + $0x48]]
        %v2162 = vstv %s2161
        %v2163 = vmul.f32 %v2162, %v2128
        %2165 = vrot.lane.b32.xlu0 %v2163, 127
        %v2166 = vpop.permute.xlu0 %2165
        %v2168 = vadd.f32 %v2132, %v2166
        %s2169 = sld [smem:[#allocation2 + $0x49]]
        %v2170 = vstv %s2169
        %v2171 = vmul.f32 %v2170, %v2128
        %2173 = vrot.lane.b32.xlu0 %v2171, 127
        %v2174 = vpop.permute.xlu0 %2173
        %v2176 = vadd.f32 %v2136, %v2174
        %s2177 = sld [smem:[#allocation2 + $0x4a]]
        %v2178 = vstv %s2177
        %v2179 = vmul.f32 %v2178, %v2128
        %2181 = vrot.lane.b32.xlu0 %v2179, 127
        %v2182 = vpop.permute.xlu0 %2181
        %v2184 = vadd.f32 %v2140, %v2182
        %s2185 = sld [smem:[#allocation2 + $0x4b]]
        %v2186 = vstv %s2185
        %v2187 = vmul.f32 %v2186, %v2128
        %2189 = vrot.lane.b32.xlu0 %v2187, 127
        %v2190 = vpop.permute.xlu0 %2189
        %v2192 = vadd.f32 %v2144, %v2190
        %s2193 = sld [smem:[#allocation2 + $0x4c]]
        %v2194 = vstv %s2193
        %v2195 = vmul.f32 %v2194, %v2128
        %2197 = vrot.lane.b32.xlu0 %v2195, 127
        %v2198 = vpop.permute.xlu0 %2197
        %v2200 = vadd.f32 %v2148, %v2198
        %s2201 = sld [smem:[#allocation2 + $0x4d]]
        %v2202 = vstv %s2201
        %v2203 = vmul.f32 %v2202, %v2128
        %2205 = vrot.lane.b32.xlu0 %v2203, 127
        %v2206 = vpop.permute.xlu0 %2205
        %v2208 = vadd.f32 %v2152, %v2206
        %s2209 = sld [smem:[#allocation2 + $0x4e]]
        %v2210 = vstv %s2209
        %v2211 = vmul.f32 %v2210, %v2128
        %2213 = vrot.lane.b32.xlu0 %v2211, 127
        %v2214 = vpop.permute.xlu0 %2213
        %v2216 = vadd.f32 %v2156, %v2214
        %s2217 = sld [smem:[#allocation2 + $0x4f]]
        %v2218 = vstv %s2217
        %v2219 = vmul.f32 %v2218, %v2128
        %2221 = vrot.lane.b32.xlu0 %v2219, 127
        %v2222 = vpop.permute.xlu0 %2221
        %v2224 = vadd.f32 %v2160, %v2222
        %s2225 = sld [smem:[#allocation2 + $0x70]]
        %v2226 = vstv %s2225
        %v2227 = vmul.f32 %v2226, %v2128
        %2229 = vrot.lane.b32.xlu0 %v2227, 126
        %v2230 = vpop.permute.xlu0 %2229
        %v2232 = vadd.f32 %v2168, %v2230
        %s2233 = sld [smem:[#allocation2 + $0x71]]
        %v2234 = vstv %s2233
        %v2235 = vmul.f32 %v2234, %v2128
        %2237 = vrot.lane.b32.xlu0 %v2235, 126
        %v2238 = vpop.permute.xlu0 %2237
        %v2240 = vadd.f32 %v2176, %v2238
        %s2241 = sld [smem:[#allocation2 + $0x72]]
        %v2242 = vstv %s2241
        %v2243 = vmul.f32 %v2242, %v2128
        %2245 = vrot.lane.b32.xlu0 %v2243, 126
        %v2246 = vpop.permute.xlu0 %2245
        %v2248 = vadd.f32 %v2184, %v2246
        %s2249 = sld [smem:[#allocation2 + $0x73]]
        %v2250 = vstv %s2249
        %v2251 = vmul.f32 %v2250, %v2128
        %2253 = vrot.lane.b32.xlu0 %v2251, 126
        %v2254 = vpop.permute.xlu0 %2253
        %v2256 = vadd.f32 %v2192, %v2254
        %s2257 = sld [smem:[#allocation2 + $0x74]]
        %v2258 = vstv %s2257
        %v2259 = vmul.f32 %v2258, %v2128
        %2261 = vrot.lane.b32.xlu0 %v2259, 126
        %v2262 = vpop.permute.xlu0 %2261
        %v2264 = vadd.f32 %v2200, %v2262
        %s2265 = sld [smem:[#allocation2 + $0x75]]
        %v2266 = vstv %s2265
        %v2267 = vmul.f32 %v2266, %v2128
        %2269 = vrot.lane.b32.xlu0 %v2267, 126
        %v2270 = vpop.permute.xlu0 %2269
        %v2272 = vadd.f32 %v2208, %v2270
        %s2273 = sld [smem:[#allocation2 + $0x76]]
        %v2274 = vstv %s2273
        %v2275 = vmul.f32 %v2274, %v2128
        %2277 = vrot.lane.b32.xlu0 %v2275, 126
        %v2278 = vpop.permute.xlu0 %2277
        %v2280 = vadd.f32 %v2216, %v2278
        %s2281 = sld [smem:[#allocation2 + $0x77]]
        %v2282 = vstv %s2281
        %v2283 = vmul.f32 %v2282, %v2128
        %2285 = vrot.lane.b32.xlu0 %v2283, 126
        %v2286 = vpop.permute.xlu0 %2285
        %v2288 = vadd.f32 %v2224, %v2286
        %s2289 = sadd.s32 %s333, 96
        %s2290 = scalar_lea.vmem %s169, %s2289
        %v2291 = vld [vmem:[%s2290] sm:$0xff]
        %s2292 = sld [smem:[#allocation2 + $0x98]]
        %v2293 = vstv %s2292
        %v2294 = vmul.f32 %v2293, %v2291
        %v2295 = vadd.f32 %v2232, %v2294
        %s2296 = sld [smem:[#allocation2 + $0x99]]
        %v2297 = vstv %s2296
        %v2298 = vmul.f32 %v2297, %v2291
        %v2299 = vadd.f32 %v2240, %v2298
        %s2300 = sld [smem:[#allocation2 + $0x9a]]
        %v2301 = vstv %s2300
        %v2302 = vmul.f32 %v2301, %v2291
        %v2303 = vadd.f32 %v2248, %v2302
        %s2304 = sld [smem:[#allocation2 + $0x9b]]
        %v2305 = vstv %s2304
        %v2306 = vmul.f32 %v2305, %v2291
        %v2307 = vadd.f32 %v2256, %v2306
        %s2308 = sld [smem:[#allocation2 + $0x9c]]
        %v2309 = vstv %s2308
        %v2310 = vmul.f32 %v2309, %v2291
        %v2311 = vadd.f32 %v2264, %v2310
        %s2312 = sld [smem:[#allocation2 + $0x9d]]
        %v2313 = vstv %s2312
        %v2314 = vmul.f32 %v2313, %v2291
        %v2315 = vadd.f32 %v2272, %v2314
        %s2316 = sld [smem:[#allocation2 + $0x9e]]
        %v2317 = vstv %s2316
        %v2318 = vmul.f32 %v2317, %v2291
        %v2319 = vadd.f32 %v2280, %v2318
        %s2320 = sld [smem:[#allocation2 + $0x9f]]
        %v2321 = vstv %s2320
        %v2322 = vmul.f32 %v2321, %v2291
        %v2323 = vadd.f32 %v2288, %v2322
        %s2324 = sld [smem:[#allocation2 + $0xc0]]
        %v2325 = vstv %s2324
        %v2326 = vmul.f32 %v2325, %v2291
        %2328 = vrot.lane.b32.xlu0 %v2326, 127
        %v2329 = vpop.permute.xlu0 %2328
        %v2331 = vadd.f32 %v2295, %v2329
        %s2332 = sld [smem:[#allocation2 + $0xc1]]
        %v2333 = vstv %s2332
        %v2334 = vmul.f32 %v2333, %v2291
        %2336 = vrot.lane.b32.xlu0 %v2334, 127
        %v2337 = vpop.permute.xlu0 %2336
        %v2339 = vadd.f32 %v2299, %v2337
        %s2340 = sld [smem:[#allocation2 + $0xc2]]
        %v2341 = vstv %s2340
        %v2342 = vmul.f32 %v2341, %v2291
        %2344 = vrot.lane.b32.xlu0 %v2342, 127
        %v2345 = vpop.permute.xlu0 %2344
        %v2347 = vadd.f32 %v2303, %v2345
        %s2348 = sld [smem:[#allocation2 + $0xc3]]
        %v2349 = vstv %s2348
        %v2350 = vmul.f32 %v2349, %v2291
        %2352 = vrot.lane.b32.xlu0 %v2350, 127
        %v2353 = vpop.permute.xlu0 %2352
        %v2355 = vadd.f32 %v2307, %v2353
        %s2356 = sld [smem:[#allocation2 + $0xc4]]
        %v2357 = vstv %s2356
        %v2358 = vmul.f32 %v2357, %v2291
        %2360 = vrot.lane.b32.xlu0 %v2358, 127
        %v2361 = vpop.permute.xlu0 %2360
        %v2363 = vadd.f32 %v2311, %v2361
        %s2364 = sld [smem:[#allocation2 + $0xc5]]
        %v2365 = vstv %s2364
        %v2366 = vmul.f32 %v2365, %v2291
        %2368 = vrot.lane.b32.xlu0 %v2366, 127
        %v2369 = vpop.permute.xlu0 %2368
        %v2371 = vadd.f32 %v2315, %v2369
        %s2372 = sld [smem:[#allocation2 + $0xc6]]
        %v2373 = vstv %s2372
        %v2374 = vmul.f32 %v2373, %v2291
        %2376 = vrot.lane.b32.xlu0 %v2374, 127
        %v2377 = vpop.permute.xlu0 %2376
        %v2379 = vadd.f32 %v2319, %v2377
        %s2380 = sld [smem:[#allocation2 + $0xc7]]
        %v2381 = vstv %s2380
        %v2382 = vmul.f32 %v2381, %v2291
        %2384 = vrot.lane.b32.xlu0 %v2382, 127
        %v2385 = vpop.permute.xlu0 %2384
        %v2387 = vadd.f32 %v2323, %v2385
        %s2388 = sld [smem:[#allocation2 + $0xe8]]
        %v2389 = vstv %s2388
        %v2390 = vmul.f32 %v2389, %v2291
        %2392 = vrot.lane.b32.xlu0 %v2390, 126
        %v2393 = vpop.permute.xlu0 %2392
        %v2395 = vadd.f32 %v2331, %v2393
        %s2396 = sld [smem:[#allocation2 + $0xe9]]
        %v2397 = vstv %s2396
        %v2398 = vmul.f32 %v2397, %v2291
        %2400 = vrot.lane.b32.xlu0 %v2398, 126
        %v2401 = vpop.permute.xlu0 %2400
        %v2403 = vadd.f32 %v2339, %v2401
        %s2404 = sld [smem:[#allocation2 + $0xea]]
        %v2405 = vstv %s2404
        %v2406 = vmul.f32 %v2405, %v2291
        %2408 = vrot.lane.b32.xlu0 %v2406, 126
        %v2409 = vpop.permute.xlu0 %2408
        %v2411 = vadd.f32 %v2347, %v2409
        %s2412 = sld [smem:[#allocation2 + $0xeb]]
        %v2413 = vstv %s2412
        %v2414 = vmul.f32 %v2413, %v2291
        %2416 = vrot.lane.b32.xlu0 %v2414, 126
        %v2417 = vpop.permute.xlu0 %2416
        %v2419 = vadd.f32 %v2355, %v2417
        %s2420 = sld [smem:[#allocation2 + $0xec]]
        %v2421 = vstv %s2420
        %v2422 = vmul.f32 %v2421, %v2291
        %2424 = vrot.lane.b32.xlu0 %v2422, 126
        %v2425 = vpop.permute.xlu0 %2424
        %v2427 = vadd.f32 %v2363, %v2425
        %s2428 = sld [smem:[#allocation2 + $0xed]]
        %v2429 = vstv %s2428
        %v2430 = vmul.f32 %v2429, %v2291
        %2432 = vrot.lane.b32.xlu0 %v2430, 126
        %v2433 = vpop.permute.xlu0 %2432
        %v2435 = vadd.f32 %v2371, %v2433
        %s2436 = sld [smem:[#allocation2 + $0xee]]
        %v2437 = vstv %s2436
        %v2438 = vmul.f32 %v2437, %v2291
        %2440 = vrot.lane.b32.xlu0 %v2438, 126
        %v2441 = vpop.permute.xlu0 %2440
        %v2443 = vadd.f32 %v2379, %v2441
        %s2444 = sld [smem:[#allocation2 + $0xef]]
        %v2445 = vstv %s2444
        %v2446 = vmul.f32 %v2445, %v2291
        %2448 = vrot.lane.b32.xlu0 %v2446, 126
        %v2449 = vpop.permute.xlu0 %2448
        %v2451 = vadd.f32 %v2387, %v2449
        %s2452 = sadd.s32 %s496, 96
        %s2453 = scalar_lea.vmem %s169, %s2452
        %v2454 = vld [vmem:[%s2453] sm:$0xff]
        %s2455 = sld [smem:[#allocation2 + $0x110]]
        %v2456 = vstv %s2455
        %v2457 = vmul.f32 %v2456, %v2454
        %v2458 = vadd.f32 %v2395, %v2457
        %s2459 = sld [smem:[#allocation2 + $0x111]]
        %v2460 = vstv %s2459
        %v2461 = vmul.f32 %v2460, %v2454
        %v2462 = vadd.f32 %v2403, %v2461
        %s2463 = sld [smem:[#allocation2 + $0x112]]
        %v2464 = vstv %s2463
        %v2465 = vmul.f32 %v2464, %v2454
        %v2466 = vadd.f32 %v2411, %v2465
        %s2467 = sld [smem:[#allocation2 + $0x113]]
        %v2468 = vstv %s2467
        %v2469 = vmul.f32 %v2468, %v2454
        %v2470 = vadd.f32 %v2419, %v2469
        %s2471 = sld [smem:[#allocation2 + $0x114]]
        %v2472 = vstv %s2471
        %v2473 = vmul.f32 %v2472, %v2454
        %v2474 = vadd.f32 %v2427, %v2473
        %s2475 = sld [smem:[#allocation2 + $0x115]]
        %v2476 = vstv %s2475
        %v2477 = vmul.f32 %v2476, %v2454
        %v2478 = vadd.f32 %v2435, %v2477
        %s2479 = sld [smem:[#allocation2 + $0x116]]
        %v2480 = vstv %s2479
        %v2481 = vmul.f32 %v2480, %v2454
        %v2482 = vadd.f32 %v2443, %v2481
        %s2483 = sld [smem:[#allocation2 + $0x117]]
        %v2484 = vstv %s2483
        %v2485 = vmul.f32 %v2484, %v2454
        %v2486 = vadd.f32 %v2451, %v2485
        %s2487 = sld [smem:[#allocation2 + $0x138]]
        %v2488 = vstv %s2487
        %v2489 = vmul.f32 %v2488, %v2454
        %2491 = vrot.lane.b32.xlu0 %v2489, 127
        %v2492 = vpop.permute.xlu0 %2491
        %v2494 = vadd.f32 %v2458, %v2492
        %s2495 = sld [smem:[#allocation2 + $0x139]]
        %v2496 = vstv %s2495
        %v2497 = vmul.f32 %v2496, %v2454
        %2499 = vrot.lane.b32.xlu0 %v2497, 127
        %v2500 = vpop.permute.xlu0 %2499
        %v2502 = vadd.f32 %v2462, %v2500
        %s2503 = sld [smem:[#allocation2 + $0x13a]]
        %v2504 = vstv %s2503
        %v2505 = vmul.f32 %v2504, %v2454
        %2507 = vrot.lane.b32.xlu0 %v2505, 127
        %v2508 = vpop.permute.xlu0 %2507
        %v2510 = vadd.f32 %v2466, %v2508
        %s2511 = sld [smem:[#allocation2 + $0x13b]]
        %v2512 = vstv %s2511
        %v2513 = vmul.f32 %v2512, %v2454
        %2515 = vrot.lane.b32.xlu0 %v2513, 127
        %v2516 = vpop.permute.xlu0 %2515
        %v2518 = vadd.f32 %v2470, %v2516
        %s2519 = sld [smem:[#allocation2 + $0x13c]]
        %v2520 = vstv %s2519
        %v2521 = vmul.f32 %v2520, %v2454
        %2523 = vrot.lane.b32.xlu0 %v2521, 127
        %v2524 = vpop.permute.xlu0 %2523
        %v2526 = vadd.f32 %v2474, %v2524
        %s2527 = sld [smem:[#allocation2 + $0x13d]]
        %v2528 = vstv %s2527
        %v2529 = vmul.f32 %v2528, %v2454
        %2531 = vrot.lane.b32.xlu0 %v2529, 127
        %v2532 = vpop.permute.xlu0 %2531
        %v2534 = vadd.f32 %v2478, %v2532
        %s2535 = sld [smem:[#allocation2 + $0x13e]]
        %v2536 = vstv %s2535
        %v2537 = vmul.f32 %v2536, %v2454
        %2539 = vrot.lane.b32.xlu0 %v2537, 127
        %v2540 = vpop.permute.xlu0 %2539
        %v2542 = vadd.f32 %v2482, %v2540
        %s2543 = sld [smem:[#allocation2 + $0x13f]]
        %v2544 = vstv %s2543
        %v2545 = vmul.f32 %v2544, %v2454
        %2547 = vrot.lane.b32.xlu0 %v2545, 127
        %v2548 = vpop.permute.xlu0 %2547
        %v2550 = vadd.f32 %v2486, %v2548
        %s2551 = sld [smem:[#allocation2 + $0x160]]
        %v2552 = vstv %s2551
        %v2553 = vmul.f32 %v2552, %v2454
        %2555 = vrot.lane.b32.xlu0 %v2553, 126
        %v2556 = vpop.permute.xlu0 %2555
        %v2558 = vadd.f32 %v2494, %v2556
        %s2559 = sld [smem:[#allocation2 + $0x161]]
        %v2560 = vstv %s2559
        %v2561 = vmul.f32 %v2560, %v2454
        %2563 = vrot.lane.b32.xlu0 %v2561, 126
        %v2564 = vpop.permute.xlu0 %2563
        %v2566 = vadd.f32 %v2502, %v2564
        %s2567 = sld [smem:[#allocation2 + $0x162]]
        %v2568 = vstv %s2567
        %v2569 = vmul.f32 %v2568, %v2454
        %2571 = vrot.lane.b32.xlu0 %v2569, 126
        %v2572 = vpop.permute.xlu0 %2571
        %v2574 = vadd.f32 %v2510, %v2572
        %s2575 = sld [smem:[#allocation2 + $0x163]]
        %v2576 = vstv %s2575
        %v2577 = vmul.f32 %v2576, %v2454
        %2579 = vrot.lane.b32.xlu0 %v2577, 126
        %v2580 = vpop.permute.xlu0 %2579
        %v2582 = vadd.f32 %v2518, %v2580
        %s2583 = sld [smem:[#allocation2 + $0x164]]
        %v2584 = vstv %s2583
        %v2585 = vmul.f32 %v2584, %v2454
        %2587 = vrot.lane.b32.xlu0 %v2585, 126
        %v2588 = vpop.permute.xlu0 %2587
        %v2590 = vadd.f32 %v2526, %v2588
        %s2591 = sld [smem:[#allocation2 + $0x165]]
        %v2592 = vstv %s2591
        %v2593 = vmul.f32 %v2592, %v2454
        %2595 = vrot.lane.b32.xlu0 %v2593, 126
        %v2596 = vpop.permute.xlu0 %2595
        %v2598 = vadd.f32 %v2534, %v2596
        %s2599 = sld [smem:[#allocation2 + $0x166]]
        %v2600 = vstv %s2599
        %v2601 = vmul.f32 %v2600, %v2454
        %2603 = vrot.lane.b32.xlu0 %v2601, 126
        %v2604 = vpop.permute.xlu0 %2603
        %v2606 = vadd.f32 %v2542, %v2604
        %s2607 = sld [smem:[#allocation2 + $0x167]]
        %v2608 = vstv %s2607
        %v2609 = vmul.f32 %v2608, %v2454
        %2611 = vrot.lane.b32.xlu0 %v2609, 126
        %v2612 = vpop.permute.xlu0 %2611
        %v2614 = vadd.f32 %v2550, %v2612
        %vm2615 = vcmask 130048
        %2616 = vst.msk [vmem:[%s164] sm:$0xff] %vm2615, %v2558
        %s2617 = scalar_lea.vmem %s164, 8 [#allocation5]
        %2618 = vst.msk [vmem:[%s2617] sm:$0xff] %vm2615, %v2566
        %s2619 = scalar_lea.vmem %s164, 16 [#allocation5]
        %2620 = vst.msk [vmem:[%s2619] sm:$0xff] %vm2615, %v2574
        %s2621 = scalar_lea.vmem %s164, 24 [#allocation5]
        %2622 = vst.msk [vmem:[%s2621] sm:$0xff] %vm2615, %v2582
        %s2623 = scalar_lea.vmem %s164, 32 [#allocation5]
        %2624 = vst.msk [vmem:[%s2623] sm:$0xff] %vm2615, %v2590
        %s2625 = scalar_lea.vmem %s164, 40 [#allocation5]
        %2626 = vst.msk [vmem:[%s2625] sm:$0xff] %vm2615, %v2598
        %s2627 = scalar_lea.vmem %s164, 48 [#allocation5]
        %2628 = vst.msk [vmem:[%s2627] sm:$0xff] %vm2615, %v2606
        %s2629 = scalar_lea.vmem %s164, 56 [#allocation5]
        %2630 = vst.msk [vmem:[%s2629] sm:$0xff] %vm2615, %v2614
        %s2631 = sand.u32 %s86, 1
        %s2632 = scalar_lea.sflag [#allocation3], %s2631
        %s2633 = sand.u32 %s86, 1
        %s2634 = smul.addr %s2633, 64
        %s2635 = scalar_lea.vmem [#allocation5], %s2634
        // Predicated region
        $region33: #{_lambda_.1} parent=27 // pred_check
          %p2636 = pneg %p96
        $region34: #{_lambda_.1} parent=27 // pred_check_branch
          %2638 = sbr.rel (%p2636) target = $region36
        $region35: #{_lambda_.1} parent=27 // pred_region
          %2640 = vsyncadd %s2632, 0
          %s2641 = smul.addr %s21, 16
          %s2642 = sadd.s32 %s22, %s2641
          %s2643 = smul.addr %s2642, 8
          %s2644 = scalar_lea.hbm %s2, %s2643
          %s2645 = sshll.u32 %s2635, 4
          %s2646 = int_to_ptr.vmem [resolvable:$true] %s2645
          %s2647 = sshll.u32 %s2644, 4
          %s2648 = int_to_ptr.hbm [resolvable:$true] %s2647
          %2653 = dma.vmem_to_hbm [thread:$0]  %s2646, 1024, %s2648, %s2632, 128, 256, 8
        $region36: #{_lambda_.1} parent=27 // pred_fallthru
          _
      $region28: #{_lambda_.1} parent=5 // pred_fallthru
        _
      %p2654 = scmp.le.s32.totalorder 2, %s12
      // Predicated region
      $region37: #{_lambda_.1} parent=5 // pred_check
        %p2655 = pneg %p2654
      $region38: #{_lambda_.1} parent=5 // pred_check_branch
        %2657 = sbr.rel (%p2655) target = $region40
      $region39: #{_lambda_.1} parent=5 // pred_region
        %s2658 = ssub.s32 %s12, 2
        // Predicated region
        $region41: #{_lambda_.1} parent=39 // pred_check
          %p2659 = pneg %p102
        $region42: #{_lambda_.1} parent=39 // pred_check_branch
          %2661 = sbr.rel (%p2659) target = $region44
        $region43: #{_lambda_.1} parent=39 // pred_region
          %s2662 = sand.u32 %s87, 1
          %s2663 = scalar_lea.sflag [#allocation3], %s2662
          %s2664 = sand.u32 %s87, 1
          %s2665 = smul.addr %s2664, 64
          %s2666 = scalar_lea.vmem [#allocation5], %s2665
          %2668 = dma.done %s2663, 1024
        $region44: #{_lambda_.1} parent=39 // pred_fallthru
          _
      $region40: #{_lambda_.1} parent=5 // pred_fallthru
        _
    $region6: #{_lambda_.1} parent=1 // loop_footer
      %s16 = sadd.s32 1, %s12
    $region7: #{_lambda_.1} parent=1 // loop_footer_branch
      %11 = sbr.rel target = $region3
    $region8: #{_lambda_.1} parent=1 // loop_exit
      _
    %2669 = vsyncpa [#allocation3], 1
    %s2670 = scalar_lea.sflag [#allocation3], 1
    %2671 = vsyncpa %s2670, 1
    %2672 = vsyncpa [#allocation4], 1
    %s2673 = scalar_lea.sflag [#allocation4], 1
    %2674 = vsyncpa %s2673, 1

</llo_original>
